<compile_context>
chip_gen: v7x
topology: tpu7x:2x2x1
jax: 0.10.0
libtpu: 0.0.40
codegen_flags: <defaults>
</compile_context>

<pallas_src>
import jax
import jax.numpy as jnp
from jax.experimental import pallas as pl
from jax.experimental.pallas import tpu as pltpu

# ---- small, self-consistent config (scaled-down version of the PyTorch one) ----
N_EMBD = 128          # n_embd
N_HEAD = 4            # n_head
N_LAYER = 2           # n_layer
BLOCK_SIZE = 16       # block_size (max sequence length)
VOCAB_SIZE = 128      # vocab_size (undefined in the source; chosen here)
HEAD_SIZE = N_EMBD // N_HEAD
LN_EPS = 1e-5

BATCH = 2
SEQ = 16              # T (<= BLOCK_SIZE)


def _layernorm(v, g, b):
    mu = jnp.mean(v, axis=-1, keepdims=True)
    var = jnp.mean((v - mu) ** 2, axis=-1, keepdims=True)
    return (v - mu) * jax.lax.rsqrt(var + LN_EPS) * g + b


# ---------------------------------------------------------------------------
# Single grid-free kernel: whole forward pass (all layers + final LN + head).
#   x_ref : (B*T, C) embedded activations (batch folded into the rows)
#   per-layer weights stacked along a leading N_LAYER axis, fully resident in VMEM
# ---------------------------------------------------------------------------
def fused_transformer_kernel(
        x_ref,
        ln1g_ref, ln1b_ref, wqkv_ref, wproj_ref, bproj_ref,
        ln2g_ref, ln2b_ref, w1_ref, b1_ref, w2_ref, b2_ref,
        lnfg_ref, lnfb_ref, whead_ref, bhead_ref,
        o_ref):
    C, H = N_EMBD, HEAD_SIZE
    x = x_ref[...]                                    # (B*T, C) f32 residual stream

    # additive causal mask built in-kernel (finite -1e30: exp underflows cleanly to 0)
    row = jax.lax.broadcasted_iota(jnp.int32, (SEQ, SEQ), 0)
    col = jax.lax.broadcasted_iota(jnp.int32, (SEQ, SEQ), 1)
    mask = jnp.where(row >= col, 0.0, -1e30).astype(jnp.float32)

    for l in range(N_LAYER):                          # static unroll, weights resident
        # ---- pre-LN causal multi-head self-attention + residual ----
        xn = _layernorm(x, ln1g_ref[l], ln1b_ref[l])
        qkv = jnp.dot(xn.astype(jnp.bfloat16), wqkv_ref[l],
                      preferred_element_type=jnp.float32)        # (B*T, 3C) full-width
        # 128-lane-aligned full-width splits first, head sub-slices second
        q = qkv[:, :C].astype(jnp.bfloat16)           # attention scale folded into W_q
        k = qkv[:, C:2 * C].astype(jnp.bfloat16)
        v = qkv[:, 2 * C:].astype(jnp.bfloat16)

        ctx_rows = []
        for b in range(BATCH):                        # static: attention is per-sequence
            r = slice(b * SEQ, (b + 1) * SEQ)
            head_outs = []
            for h in range(N_HEAD):                   # static unrolled head loop
                cs = slice(h * H, (h + 1) * H)
                qh, kh, vh = q[r, cs], k[r, cs], v[r, cs]        # (T, hs) bf16
                # q @ k^T via contraction on the last dims (trans_b) — no XLU transpose.
                # Scale (n_embd**-0.5, as in the PyTorch source) is folded into W_q.
                s = jax.lax.dot_general(
                    qh, kh, (((1,), (1,)), ((), ())),
                    preferred_element_type=jnp.float32) + mask   # (T, T)
                # softmax; row-max subtraction dropped: scores are pre-scaled/small and
                # the mask is finite.  Re-add the max-sub if magnitudes can grow.
                p = jnp.exp(s)
                p = p * pl.reciprocal(jnp.sum(p, axis=-1, keepdims=True), approx=True)
                head_outs.append(jnp.dot(p.astype(jnp.bfloat16), vh,
                                         preferred_element_type=jnp.float32))  # (T, hs)
            ctx_rows.append(jnp.concatenate(head_outs, axis=-1))  # (T, C) lane concat
        ctx = jnp.concatenate(ctx_rows, axis=0).astype(jnp.bfloat16)   # (B*T, C)
        # single full-width output projection (K = C = 128); bias added once per layer
        att = jnp.dot(ctx, wproj_ref[l],
                      preferred_element_type=jnp.float32) + bproj_ref[l]
        # TODO(synk): nn.Dropout omitted (eval-mode identity).
        x = x + att

        # ---- pre-LN feed-forward (Linear 4C -> ReLU -> Linear C) + residual ----
        x1n = _layernorm(x, ln2g_ref[l], ln2b_ref[l])
        h1 = jnp.dot(x1n.astype(jnp.bfloat16), w1_ref[l],
                     preferred_element_type=jnp.float32) + b1_ref[l]
        h1 = jnp.maximum(h1, 0.0)
        ff = jnp.dot(h1.astype(jnp.bfloat16), w2_ref[l],
                     preferred_element_type=jnp.float32) + b2_ref[l]
        x = x + ff

    # ---- final LayerNorm + vocab head ----
    xf = _layernorm(x, lnfg_ref[...], lnfb_ref[...])
    o_ref[...] = jnp.dot(xf.astype(jnp.bfloat16), whead_ref[...],
                         preferred_element_type=jnp.float32) + bhead_ref[...]


def fused_forward(x_flat, p):
    BT, _ = x_flat.shape
    V = p["w_head"].shape[-1]
    args = (x_flat,
            p["ln1g"], p["ln1b"], p["wqkv"], p["wproj"], p["bproj"],
            p["ln2g"], p["ln2b"], p["w1"], p["b1"], p["w2"], p["b2"],
            p["lnf_g"], p["lnf_b"], p["w_head"], p["b_head"])
    vmem = pl.BlockSpec(memory_space=pltpu.MemorySpace.VMEM)
    # Grid-free single invocation: every weight (~0.9 MB total) is resident in VMEM.
    # TODO(synk): at larger B add a leading size-2 "parallel" core-split grid axis over
    # batch halves (v7x has 2 TensorCores); at realistic vocab (~50k) tile w_head over a
    # lane-dense vocab grid axis and set vmem_limit_bytes explicitly before scaling C/L/V.
    return pl.pallas_call(
        fused_transformer_kernel,
        out_shape=jax.ShapeDtypeStruct((BT, V), jnp.float32),
        in_specs=[vmem] * len(args),
        out_specs=vmem,
    )(*args)


# ---------------------------------------------------------------------------
# Parameter init (matches _init_weights: Linear/Embedding ~ N(0, 0.02), biases 0,
# LayerNorm = (1, 0)).  Weights stored (in, out) so kernels compute x @ W + b.
# Matmul weights in bf16; per-layer tensors stacked along a leading N_LAYER axis.
# ---------------------------------------------------------------------------
def init_params(key):
    C, V, L, H4 = N_EMBD, VOCAB_SIZE, N_LAYER, 4 * N_EMBD
    ks = jax.random.split(key, 9)

    def nrm(k, shape):
        return 0.02 * jax.random.normal(k, shape, dtype=jnp.float32)

    scale = float(C) ** -0.5          # PyTorch uses C**(-0.5) with C = n_embd (NOT head_size)
    wq = nrm(ks[2], (L, C, C)) * scale  # fold attention scale into the query projection
    wk = nrm(ks[3], (L, C, C))
    wv = nrm(ks[4], (L, C, C))
    return {
        "tok_emb": nrm(ks[0], (V, C)),
        "pos_emb": nrm(ks[1], (BLOCK_SIZE, C)),
        "wqkv": jnp.concatenate([wq, wk, wv], axis=-1).astype(jnp.bfloat16),  # (L, C, 3C)
        "wproj": nrm(ks[5], (L, C, C)).astype(jnp.bfloat16),
        "bproj": jnp.zeros((L, 1, C), jnp.float32),
        "ln1g": jnp.ones((L, 1, C), jnp.float32),
        "ln1b": jnp.zeros((L, 1, C), jnp.float32),
        "ln2g": jnp.ones((L, 1, C), jnp.float32),
        "ln2b": jnp.zeros((L, 1, C), jnp.float32),
        "w1": nrm(ks[6], (L, C, H4)).astype(jnp.bfloat16),
        "b1": jnp.zeros((L, 1, H4), jnp.float32),
        "w2": nrm(ks[7], (L, H4, C)).astype(jnp.bfloat16),
        "b2": jnp.zeros((L, 1, C), jnp.float32),
        "lnf_g": jnp.ones((1, C), jnp.float32),
        "lnf_b": jnp.zeros((1, C), jnp.float32),
        "w_head": nrm(ks[8], (C, V)).astype(jnp.bfloat16),
        "b_head": jnp.zeros((1, V), jnp.float32),
    }


@jax.jit
def transformer_forward(idx, params):
    B, T = idx.shape
    tok = params["tok_emb"][idx]                      # (B, T, C) -- JAX-side gather (glue)
    pos = params["pos_emb"][:T][None, :, :]           # (1, T, C)
    x = (tok + pos).astype(jnp.float32).reshape(B * T, N_EMBD)   # batch folded into rows
    logits = fused_forward(x, params)                 # (B*T, V)
    return logits.reshape(B, T, VOCAB_SIZE)


if __name__ == "__main__":
    key = jax.random.PRNGKey(0)
    pkey, ikey = jax.random.split(key)
    params = init_params(pkey)
    idx = jax.random.randint(ikey, (BATCH, SEQ), 0, VOCAB_SIZE, dtype=jnp.int32)

    logits = transformer_forward(idx, params)
    logits = jax.block_until_ready(logits)

    assert logits.shape == (BATCH, SEQ, VOCAB_SIZE), logits.shape
    assert bool(jnp.all(jnp.isfinite(logits)))
    print("KERNEL_OK")
</pallas_src>

<mosaic_0001>
module attributes {stable_mosaic.version = 11 : i64} {
  func.func @fused_transformer_kernel(%arg0: memref<32x128xf32, #tpu.memory_space<vmem>>, %arg1: memref<2x1x128xf32, #tpu.memory_space<vmem>>, %arg2: memref<2x1x128xf32, #tpu.memory_space<vmem>>, %arg3: memref<2x128x384xbf16, #tpu.memory_space<vmem>>, %arg4: memref<2x128x128xbf16, #tpu.memory_space<vmem>>, %arg5: memref<2x1x128xf32, #tpu.memory_space<vmem>>, %arg6: memref<2x1x128xf32, #tpu.memory_space<vmem>>, %arg7: memref<2x1x128xf32, #tpu.memory_space<vmem>>, %arg8: memref<2x128x512xbf16, #tpu.memory_space<vmem>>, %arg9: memref<2x1x512xf32, #tpu.memory_space<vmem>>, %arg10: memref<2x512x128xbf16, #tpu.memory_space<vmem>>, %arg11: memref<2x1x128xf32, #tpu.memory_space<vmem>>, %arg12: memref<1x128xf32, #tpu.memory_space<vmem>>, %arg13: memref<1x128xf32, #tpu.memory_space<vmem>>, %arg14: memref<128x128xbf16, #tpu.memory_space<vmem>>, %arg15: memref<1x128xf32, #tpu.memory_space<vmem>>, %arg16: memref<32x128xf32, #tpu.memory_space<vmem>>) attributes {dimension_semantics = [], scalar_prefetch = 0 : i64, scratch_operands = 0 : i64, tpu.core_type = #tpu.core_type<tc>} {
    %c0 = arith.constant 0 : index
    %c0_0 = arith.constant 0 : index
    %0 = vector.load %arg0[%c0, %c0_0] : memref<32x128xf32, #tpu.memory_space<vmem>>, vector<32x128xf32>
    %1 = tpu.iota {dimensions = array<i32: 0>} : vector<16x16xi32>
    %2 = tpu.iota {dimensions = array<i32: 1>} : vector<16x16xi32>
    %3 = arith.cmpi sge, %1, %2 : vector<16x16xi32>
    %cst = arith.constant 0.000000e+00 : f32
    %cst_1 = arith.constant -1.000000e+30 : f32
    %4 = vector.broadcast %cst : f32 to vector<16x16xf32>
    %5 = vector.broadcast %cst_1 : f32 to vector<16x16xf32>
    %6 = arith.select %3, %4, %5 : vector<16x16xi1>, vector<16x16xf32>
    %c0_2 = arith.constant 0 : index
    %c0_3 = arith.constant 0 : index
    %c0_4 = arith.constant 0 : index
    %7 = vector.load %arg1[%c0_2, %c0_3, %c0_4] : memref<2x1x128xf32, #tpu.memory_space<vmem>>, vector<1x1x128xf32>
    %8 = vector.shape_cast %7 : vector<1x1x128xf32> to vector<1x128xf32>
    %c0_5 = arith.constant 0 : index
    %c0_6 = arith.constant 0 : index
    %c0_7 = arith.constant 0 : index
    %9 = vector.load %arg2[%c0_5, %c0_6, %c0_7] : memref<2x1x128xf32, #tpu.memory_space<vmem>>, vector<1x1x128xf32>
    %10 = vector.shape_cast %9 : vector<1x1x128xf32> to vector<1x128xf32>
    %cst_8 = arith.constant dense<0.000000e+00> : vector<32xf32>
    %11 = vector.multi_reduction <add>, %0, %cst_8 [1] : vector<32x128xf32> to vector<32xf32>
    %12 = vector.shape_cast %11 : vector<32xf32> to vector<32x1xf32>
    %cst_9 = arith.constant 1.280000e+02 : f32
    %13 = vector.broadcast %cst_9 : f32 to vector<32x1xf32>
    %14 = arith.divf %12, %13 : vector<32x1xf32>
    %15 = vector.broadcast %14 : vector<32x1xf32> to vector<32x128xf32>
    %16 = arith.subf %0, %15 : vector<32x128xf32>
    %17 = arith.mulf %16, %16 : vector<32x128xf32>
    %cst_10 = arith.constant dense<0.000000e+00> : vector<32xf32>
    %18 = vector.multi_reduction <add>, %17, %cst_10 [1] : vector<32x128xf32> to vector<32xf32>
    %19 = vector.shape_cast %18 : vector<32xf32> to vector<32x1xf32>
    %cst_11 = arith.constant 1.280000e+02 : f32
    %20 = vector.broadcast %cst_11 : f32 to vector<32x1xf32>
    %21 = arith.divf %19, %20 : vector<32x1xf32>
    %22 = vector.broadcast %14 : vector<32x1xf32> to vector<32x128xf32>
    %23 = arith.subf %0, %22 : vector<32x128xf32>
    %cst_12 = arith.constant 9.99999974E-6 : f32
    %24 = vector.broadcast %cst_12 : f32 to vector<32x1xf32>
    %25 = arith.addf %21, %24 : vector<32x1xf32>
    %26 = math.rsqrt %25 : vector<32x1xf32>
    %27 = vector.broadcast %26 : vector<32x1xf32> to vector<32x128xf32>
    %28 = arith.mulf %23, %27 : vector<32x128xf32>
    %29 = vector.broadcast %8 : vector<1x128xf32> to vector<32x128xf32>
    %30 = arith.mulf %28, %29 : vector<32x128xf32>
    %31 = vector.broadcast %10 : vector<1x128xf32> to vector<32x128xf32>
    %32 = arith.addf %30, %31 : vector<32x128xf32>
    %33 = arith.truncf %32 : vector<32x128xf32> to vector<32x128xbf16>
    %c0_13 = arith.constant 0 : index
    %c0_14 = arith.constant 0 : index
    %c0_15 = arith.constant 0 : index
    %34 = vector.load %arg3[%c0_13, %c0_14, %c0_15] : memref<2x128x384xbf16, #tpu.memory_space<vmem>>, vector<1x128x384xbf16>
    %35 = vector.shape_cast %34 : vector<1x128x384xbf16> to vector<128x384xbf16>
    %cst_16 = arith.constant dense<0.000000e+00> : vector<32x384xf32>
    %36 = tpu.matmul %33, %35, %cst_16 {dimension_numbers = #tpu.dot_dimension_numbers<[1], [0], [0], [1], [0, 0, 1, 1], [], []>} : vector<32x128xbf16>, vector<128x384xbf16>, vector<32x384xf32> -> vector<32x384xf32>
    %37 = vector.extract_strided_slice %36 {offsets = [0, 0], sizes = [32, 128], strides = [1, 1]} : vector<32x384xf32> to vector<32x128xf32>
    %38 = arith.truncf %37 : vector<32x128xf32> to vector<32x128xbf16>
    %39 = vector.extract_strided_slice %36 {offsets = [0, 128], sizes = [32, 128], strides = [1, 1]} : vector<32x384xf32> to vector<32x128xf32>
    %40 = arith.truncf %39 : vector<32x128xf32> to vector<32x128xbf16>
    %41 = vector.extract_strided_slice %36 {offsets = [0, 256], sizes = [32, 128], strides = [1, 1]} : vector<32x384xf32> to vector<32x128xf32>
    %42 = arith.truncf %41 : vector<32x128xf32> to vector<32x128xbf16>
    %43 = vector.extract_strided_slice %38 {offsets = [0, 0], sizes = [16, 32], strides = [1, 1]} : vector<32x128xbf16> to vector<16x32xbf16>
    %44 = vector.extract_strided_slice %40 {offsets = [0, 0], sizes = [16, 32], strides = [1, 1]} : vector<32x128xbf16> to vector<16x32xbf16>
    %45 = vector.extract_strided_slice %42 {offsets = [0, 0], sizes = [16, 32], strides = [1, 1]} : vector<32x128xbf16> to vector<16x32xbf16>
    %cst_17 = arith.constant dense<0.000000e+00> : vector<16x16xf32>
    %46 = tpu.matmul %43, %44, %cst_17 {dimension_numbers = #tpu.dot_dimension_numbers<[1], [1], [0], [0], [0, 0, 1, 0], [], []>} : vector<16x32xbf16>, vector<16x32xbf16>, vector<16x16xf32> -> vector<16x16xf32>
    %47 = arith.addf %46, %6 : vector<16x16xf32>
    %48 = math.exp %47 : vector<16x16xf32>
    %cst_18 = arith.constant dense<0.000000e+00> : vector<16xf32>
    %49 = vector.multi_reduction <add>, %48, %cst_18 [1] : vector<16x16xf32> to vector<16xf32>
    %50 = vector.shape_cast %49 : vector<16xf32> to vector<16x1xf32>
    %51 = tpu.reciprocal %50 {approx = true} : vector<16x1xf32> -> vector<16x1xf32>
    %52 = vector.broadcast %51 : vector<16x1xf32> to vector<16x16xf32>
    %53 = arith.mulf %48, %52 : vector<16x16xf32>
    %54 = arith.truncf %53 : vector<16x16xf32> to vector<16x16xbf16>
    %cst_19 = arith.constant dense<0.000000e+00> : vector<16x32xf32>
    %55 = tpu.matmul %54, %45, %cst_19 {dimension_numbers = #tpu.dot_dimension_numbers<[1], [0], [0], [1], [0, 0, 1, 1], [], []>} : vector<16x16xbf16>, vector<16x32xbf16>, vector<16x32xf32> -> vector<16x32xf32>
    %56 = vector.extract_strided_slice %38 {offsets = [0, 32], sizes = [16, 32], strides = [1, 1]} : vector<32x128xbf16> to vector<16x32xbf16>
    %57 = vector.extract_strided_slice %40 {offsets = [0, 32], sizes = [16, 32], strides = [1, 1]} : vector<32x128xbf16> to vector<16x32xbf16>
    %58 = vector.extract_strided_slice %42 {offsets = [0, 32], sizes = [16, 32], strides = [1, 1]} : vector<32x128xbf16> to vector<16x32xbf16>
    %cst_20 = arith.constant dense<0.000000e+00> : vector<16x16xf32>
    %59 = tpu.matmul %56, %57, %cst_20 {dimension_numbers = #tpu.dot_dimension_numbers<[1], [1], [0], [0], [0, 0, 1, 0], [], []>} : vector<16x32xbf16>, vector<16x32xbf16>, vector<16x16xf32> -> vector<16x16xf32>
    %60 = arith.addf %59, %6 : vector<16x16xf32>
    %61 = math.exp %60 : vector<16x16xf32>
    %cst_21 = arith.constant dense<0.000000e+00> : vector<16xf32>
    %62 = vector.multi_reduction <add>, %61, %cst_21 [1] : vector<16x16xf32> to vector<16xf32>
    %63 = vector.shape_cast %62 : vector<16xf32> to vector<16x1xf32>
    %64 = tpu.reciprocal %63 {approx = true} : vector<16x1xf32> -> vector<16x1xf32>
    %65 = vector.broadcast %64 : vector<16x1xf32> to vector<16x16xf32>
    %66 = arith.mulf %61, %65 : vector<16x16xf32>
    %67 = arith.truncf %66 : vector<16x16xf32> to vector<16x16xbf16>
    %cst_22 = arith.constant dense<0.000000e+00> : vector<16x32xf32>
    %68 = tpu.matmul %67, %58, %cst_22 {dimension_numbers = #tpu.dot_dimension_numbers<[1], [0], [0], [1], [0, 0, 1, 1], [], []>} : vector<16x16xbf16>, vector<16x32xbf16>, vector<16x32xf32> -> vector<16x32xf32>
    %69 = vector.extract_strided_slice %38 {offsets = [0, 64], sizes = [16, 32], strides = [1, 1]} : vector<32x128xbf16> to vector<16x32xbf16>
    %70 = vector.extract_strided_slice %40 {offsets = [0, 64], sizes = [16, 32], strides = [1, 1]} : vector<32x128xbf16> to vector<16x32xbf16>
    %71 = vector.extract_strided_slice %42 {offsets = [0, 64], sizes = [16, 32], strides = [1, 1]} : vector<32x128xbf16> to vector<16x32xbf16>
    %cst_23 = arith.constant dense<0.000000e+00> : vector<16x16xf32>
    %72 = tpu.matmul %69, %70, %cst_23 {dimension_numbers = #tpu.dot_dimension_numbers<[1], [1], [0], [0], [0, 0, 1, 0], [], []>} : vector<16x32xbf16>, vector<16x32xbf16>, vector<16x16xf32> -> vector<16x16xf32>
    %73 = arith.addf %72, %6 : vector<16x16xf32>
    %74 = math.exp %73 : vector<16x16xf32>
    %cst_24 = arith.constant dense<0.000000e+00> : vector<16xf32>
    %75 = vector.multi_reduction <add>, %74, %cst_24 [1] : vector<16x16xf32> to vector<16xf32>
    %76 = vector.shape_cast %75 : vector<16xf32> to vector<16x1xf32>
    %77 = tpu.reciprocal %76 {approx = true} : vector<16x1xf32> -> vector<16x1xf32>
    %78 = vector.broadcast %77 : vector<16x1xf32> to vector<16x16xf32>
    %79 = arith.mulf %74, %78 : vector<16x16xf32>
    %80 = arith.truncf %79 : vector<16x16xf32> to vector<16x16xbf16>
    %cst_25 = arith.constant dense<0.000000e+00> : vector<16x32xf32>
    %81 = tpu.matmul %80, %71, %cst_25 {dimension_numbers = #tpu.dot_dimension_numbers<[1], [0], [0], [1], [0, 0, 1, 1], [], []>} : vector<16x16xbf16>, vector<16x32xbf16>, vector<16x32xf32> -> vector<16x32xf32>
    %82 = vector.extract_strided_slice %38 {offsets = [0, 96], sizes = [16, 32], strides = [1, 1]} : vector<32x128xbf16> to vector<16x32xbf16>
    %83 = vector.extract_strided_slice %40 {offsets = [0, 96], sizes = [16, 32], strides = [1, 1]} : vector<32x128xbf16> to vector<16x32xbf16>
    %84 = vector.extract_strided_slice %42 {offsets = [0, 96], sizes = [16, 32], strides = [1, 1]} : vector<32x128xbf16> to vector<16x32xbf16>
    %cst_26 = arith.constant dense<0.000000e+00> : vector<16x16xf32>
    %85 = tpu.matmul %82, %83, %cst_26 {dimension_numbers = #tpu.dot_dimension_numbers<[1], [1], [0], [0], [0, 0, 1, 0], [], []>} : vector<16x32xbf16>, vector<16x32xbf16>, vector<16x16xf32> -> vector<16x16xf32>
    %86 = arith.addf %85, %6 : vector<16x16xf32>
    %87 = math.exp %86 : vector<16x16xf32>
    %cst_27 = arith.constant dense<0.000000e+00> : vector<16xf32>
    %88 = vector.multi_reduction <add>, %87, %cst_27 [1] : vector<16x16xf32> to vector<16xf32>
    %89 = vector.shape_cast %88 : vector<16xf32> to vector<16x1xf32>
    %90 = tpu.reciprocal %89 {approx = true} : vector<16x1xf32> -> vector<16x1xf32>
    %91 = vector.broadcast %90 : vector<16x1xf32> to vector<16x16xf32>
    %92 = arith.mulf %87, %91 : vector<16x16xf32>
    %93 = arith.truncf %92 : vector<16x16xf32> to vector<16x16xbf16>
    %cst_28 = arith.constant dense<0.000000e+00> : vector<16x32xf32>
    %94 = tpu.matmul %93, %84, %cst_28 {dimension_numbers = #tpu.dot_dimension_numbers<[1], [0], [0], [1], [0, 0, 1, 1], [], []>} : vector<16x16xbf16>, vector<16x32xbf16>, vector<16x32xf32> -> vector<16x32xf32>
    %95 = tpu.concatenate %55, %68, %81, %94 in 1 : vector<16x32xf32>, vector<16x32xf32>, vector<16x32xf32>, vector<16x32xf32> -> vector<16x128xf32>
    %96 = vector.extract_strided_slice %38 {offsets = [16, 0], sizes = [16, 32], strides = [1, 1]} : vector<32x128xbf16> to vector<16x32xbf16>
    %97 = vector.extract_strided_slice %40 {offsets = [16, 0], sizes = [16, 32], strides = [1, 1]} : vector<32x128xbf16> to vector<16x32xbf16>
    %98 = vector.extract_strided_slice %42 {offsets = [16, 0], sizes = [16, 32], strides = [1, 1]} : vector<32x128xbf16> to vector<16x32xbf16>
    %cst_29 = arith.constant dense<0.000000e+00> : vector<16x16xf32>
    %99 = tpu.matmul %96, %97, %cst_29 {dimension_numbers = #tpu.dot_dimension_numbers<[1], [1], [0], [0], [0, 0, 1, 0], [], []>} : vector<16x32xbf16>, vector<16x32xbf16>, vector<16x16xf32> -> vector<16x16xf32>
    %100 = arith.addf %99, %6 : vector<16x16xf32>
    %101 = math.exp %100 : vector<16x16xf32>
    %cst_30 = arith.constant dense<0.000000e+00> : vector<16xf32>
    %102 = vector.multi_reduction <add>, %101, %cst_30 [1] : vector<16x16xf32> to vector<16xf32>
    %103 = vector.shape_cast %102 : vector<16xf32> to vector<16x1xf32>
    %104 = tpu.reciprocal %103 {approx = true} : vector<16x1xf32> -> vector<16x1xf32>
    %105 = vector.broadcast %104 : vector<16x1xf32> to vector<16x16xf32>
    %106 = arith.mulf %101, %105 : vector<16x16xf32>
    %107 = arith.truncf %106 : vector<16x16xf32> to vector<16x16xbf16>
    %cst_31 = arith.constant dense<0.000000e+00> : vector<16x32xf32>
    %108 = tpu.matmul %107, %98, %cst_31 {dimension_numbers = #tpu.dot_dimension_numbers<[1], [0], [0], [1], [0, 0, 1, 1], [], []>} : vector<16x16xbf16>, vector<16x32xbf16>, vector<16x32xf32> -> vector<16x32xf32>
    %109 = vector.extract_strided_slice %38 {offsets = [16, 32], sizes = [16, 32], strides = [1, 1]} : vector<32x128xbf16> to vector<16x32xbf16>
    %110 = vector.extract_strided_slice %40 {offsets = [16, 32], sizes = [16, 32], strides = [1, 1]} : vector<32x128xbf16> to vector<16x32xbf16>
    %111 = vector.extract_strided_slice %42 {offsets = [16, 32], sizes = [16, 32], strides = [1, 1]} : vector<32x128xbf16> to vector<16x32xbf16>
    %cst_32 = arith.constant dense<0.000000e+00> : vector<16x16xf32>
    %112 = tpu.matmul %109, %110, %cst_32 {dimension_numbers = #tpu.dot_dimension_numbers<[1], [1], [0], [0], [0, 0, 1, 0], [], []>} : vector<16x32xbf16>, vector<16x32xbf16>, vector<16x16xf32> -> vector<16x16xf32>
    %113 = arith.addf %112, %6 : vector<16x16xf32>
    %114 = math.exp %113 : vector<16x16xf32>
    %cst_33 = arith.constant dense<0.000000e+00> : vector<16xf32>
    %115 = vector.multi_reduction <add>, %114, %cst_33 [1] : vector<16x16xf32> to vector<16xf32>
    %116 = vector.shape_cast %115 : vector<16xf32> to vector<16x1xf32>
    %117 = tpu.reciprocal %116 {approx = true} : vector<16x1xf32> -> vector<16x1xf32>
    %118 = vector.broadcast %117 : vector<16x1xf32> to vector<16x16xf32>
    %119 = arith.mulf %114, %118 : vector<16x16xf32>
    %120 = arith.truncf %119 : vector<16x16xf32> to vector<16x16xbf16>
    %cst_34 = arith.constant dense<0.000000e+00> : vector<16x32xf32>
    %121 = tpu.matmul %120, %111, %cst_34 {dimension_numbers = #tpu.dot_dimension_numbers<[1], [0], [0], [1], [0, 0, 1, 1], [], []>} : vector<16x16xbf16>, vector<16x32xbf16>, vector<16x32xf32> -> vector<16x32xf32>
    %122 = vector.extract_strided_slice %38 {offsets = [16, 64], sizes = [16, 32], strides = [1, 1]} : vector<32x128xbf16> to vector<16x32xbf16>
    %123 = vector.extract_strided_slice %40 {offsets = [16, 64], sizes = [16, 32], strides = [1, 1]} : vector<32x128xbf16> to vector<16x32xbf16>
    %124 = vector.extract_strided_slice %42 {offsets = [16, 64], sizes = [16, 32], strides = [1, 1]} : vector<32x128xbf16> to vector<16x32xbf16>
    %cst_35 = arith.constant dense<0.000000e+00> : vector<16x16xf32>
    %125 = tpu.matmul %122, %123, %cst_35 {dimension_numbers = #tpu.dot_dimension_numbers<[1], [1], [0], [0], [0, 0, 1, 0], [], []>} : vector<16x32xbf16>, vector<16x32xbf16>, vector<16x16xf32> -> vector<16x16xf32>
    %126 = arith.addf %125, %6 : vector<16x16xf32>
    %127 = math.exp %126 : vector<16x16xf32>
    %cst_36 = arith.constant dense<0.000000e+00> : vector<16xf32>
    %128 = vector.multi_reduction <add>, %127, %cst_36 [1] : vector<16x16xf32> to vector<16xf32>
    %129 = vector.shape_cast %128 : vector<16xf32> to vector<16x1xf32>
    %130 = tpu.reciprocal %129 {approx = true} : vector<16x1xf32> -> vector<16x1xf32>
    %131 = vector.broadcast %130 : vector<16x1xf32> to vector<16x16xf32>
    %132 = arith.mulf %127, %131 : vector<16x16xf32>
    %133 = arith.truncf %132 : vector<16x16xf32> to vector<16x16xbf16>
    %cst_37 = arith.constant dense<0.000000e+00> : vector<16x32xf32>
    %134 = tpu.matmul %133, %124, %cst_37 {dimension_numbers = #tpu.dot_dimension_numbers<[1], [0], [0], [1], [0, 0, 1, 1], [], []>} : vector<16x16xbf16>, vector<16x32xbf16>, vector<16x32xf32> -> vector<16x32xf32>
    %135 = vector.extract_strided_slice %38 {offsets = [16, 96], sizes = [16, 32], strides = [1, 1]} : vector<32x128xbf16> to vector<16x32xbf16>
    %136 = vector.extract_strided_slice %40 {offsets = [16, 96], sizes = [16, 32], strides = [1, 1]} : vector<32x128xbf16> to vector<16x32xbf16>
    %137 = vector.extract_strided_slice %42 {offsets = [16, 96], sizes = [16, 32], strides = [1, 1]} : vector<32x128xbf16> to vector<16x32xbf16>
    %cst_38 = arith.constant dense<0.000000e+00> : vector<16x16xf32>
    %138 = tpu.matmul %135, %136, %cst_38 {dimension_numbers = #tpu.dot_dimension_numbers<[1], [1], [0], [0], [0, 0, 1, 0], [], []>} : vector<16x32xbf16>, vector<16x32xbf16>, vector<16x16xf32> -> vector<16x16xf32>
    %139 = arith.addf %138, %6 : vector<16x16xf32>
    %140 = math.exp %139 : vector<16x16xf32>
    %cst_39 = arith.constant dense<0.000000e+00> : vector<16xf32>
    %141 = vector.multi_reduction <add>, %140, %cst_39 [1] : vector<16x16xf32> to vector<16xf32>
    %142 = vector.shape_cast %141 : vector<16xf32> to vector<16x1xf32>
    %143 = tpu.reciprocal %142 {approx = true} : vector<16x1xf32> -> vector<16x1xf32>
    %144 = vector.broadcast %143 : vector<16x1xf32> to vector<16x16xf32>
    %145 = arith.mulf %140, %144 : vector<16x16xf32>
    %146 = arith.truncf %145 : vector<16x16xf32> to vector<16x16xbf16>
    %cst_40 = arith.constant dense<0.000000e+00> : vector<16x32xf32>
    %147 = tpu.matmul %146, %137, %cst_40 {dimension_numbers = #tpu.dot_dimension_numbers<[1], [0], [0], [1], [0, 0, 1, 1], [], []>} : vector<16x16xbf16>, vector<16x32xbf16>, vector<16x32xf32> -> vector<16x32xf32>
    %148 = tpu.concatenate %108, %121, %134, %147 in 1 : vector<16x32xf32>, vector<16x32xf32>, vector<16x32xf32>, vector<16x32xf32> -> vector<16x128xf32>
    %149 = tpu.concatenate %95, %148 in 0 : vector<16x128xf32>, vector<16x128xf32> -> vector<32x128xf32>
    %150 = arith.truncf %149 : vector<32x128xf32> to vector<32x128xbf16>
    %c0_41 = arith.constant 0 : index
    %c0_42 = arith.constant 0 : index
    %c0_43 = arith.constant 0 : index
    %151 = vector.load %arg4[%c0_41, %c0_42, %c0_43] : memref<2x128x128xbf16, #tpu.memory_space<vmem>>, vector<1x128x128xbf16>
    %152 = vector.shape_cast %151 : vector<1x128x128xbf16> to vector<128x128xbf16>
    %cst_44 = arith.constant dense<0.000000e+00> : vector<32x128xf32>
    %153 = tpu.matmul %150, %152, %cst_44 {dimension_numbers = #tpu.dot_dimension_numbers<[1], [0], [0], [1], [0, 0, 1, 1], [], []>} : vector<32x128xbf16>, vector<128x128xbf16>, vector<32x128xf32> -> vector<32x128xf32>
    %c0_45 = arith.constant 0 : index
    %c0_46 = arith.constant 0 : index
    %c0_47 = arith.constant 0 : index
    %154 = vector.load %arg5[%c0_45, %c0_46, %c0_47] : memref<2x1x128xf32, #tpu.memory_space<vmem>>, vector<1x1x128xf32>
    %155 = vector.shape_cast %154 : vector<1x1x128xf32> to vector<1x128xf32>
    %156 = vector.broadcast %155 : vector<1x128xf32> to vector<32x128xf32>
    %157 = arith.addf %153, %156 : vector<32x128xf32>
    %158 = arith.addf %0, %157 : vector<32x128xf32>
    %c0_48 = arith.constant 0 : index
    %c0_49 = arith.constant 0 : index
    %c0_50 = arith.constant 0 : index
    %159 = vector.load %arg6[%c0_48, %c0_49, %c0_50] : memref<2x1x128xf32, #tpu.memory_space<vmem>>, vector<1x1x128xf32>
    %160 = vector.shape_cast %159 : vector<1x1x128xf32> to vector<1x128xf32>
    %c0_51 = arith.constant 0 : index
    %c0_52 = arith.constant 0 : index
    %c0_53 = arith.constant 0 : index
    %161 = vector.load %arg7[%c0_51, %c0_52, %c0_53] : memref<2x1x128xf32, #tpu.memory_space<vmem>>, vector<1x1x128xf32>
    %162 = vector.shape_cast %161 : vector<1x1x128xf32> to vector<1x128xf32>
    %cst_54 = arith.constant dense<0.000000e+00> : vector<32xf32>
    %163 = vector.multi_reduction <add>, %158, %cst_54 [1] : vector<32x128xf32> to vector<32xf32>
    %164 = vector.shape_cast %163 : vector<32xf32> to vector<32x1xf32>
    %cst_55 = arith.constant 1.280000e+02 : f32
    %165 = vector.broadcast %cst_55 : f32 to vector<32x1xf32>
    %166 = arith.divf %164, %165 : vector<32x1xf32>
    %167 = vector.broadcast %166 : vector<32x1xf32> to vector<32x128xf32>
    %168 = arith.subf %158, %167 : vector<32x128xf32>
    %169 = arith.mulf %168, %168 : vector<32x128xf32>
    %cst_56 = arith.constant dense<0.000000e+00> : vector<32xf32>
    %170 = vector.multi_reduction <add>, %169, %cst_56 [1] : vector<32x128xf32> to vector<32xf32>
    %171 = vector.shape_cast %170 : vector<32xf32> to vector<32x1xf32>
    %cst_57 = arith.constant 1.280000e+02 : f32
    %172 = vector.broadcast %cst_57 : f32 to vector<32x1xf32>
    %173 = arith.divf %171, %172 : vector<32x1xf32>
    %174 = vector.broadcast %166 : vector<32x1xf32> to vector<32x128xf32>
    %175 = arith.subf %158, %174 : vector<32x128xf32>
    %cst_58 = arith.constant 9.99999974E-6 : f32
    %176 = vector.broadcast %cst_58 : f32 to vector<32x1xf32>
    %177 = arith.addf %173, %176 : vector<32x1xf32>
    %178 = math.rsqrt %177 : vector<32x1xf32>
    %179 = vector.broadcast %178 : vector<32x1xf32> to vector<32x128xf32>
    %180 = arith.mulf %175, %179 : vector<32x128xf32>
    %181 = vector.broadcast %160 : vector<1x128xf32> to vector<32x128xf32>
    %182 = arith.mulf %180, %181 : vector<32x128xf32>
    %183 = vector.broadcast %162 : vector<1x128xf32> to vector<32x128xf32>
    %184 = arith.addf %182, %183 : vector<32x128xf32>
    %185 = arith.truncf %184 : vector<32x128xf32> to vector<32x128xbf16>
    %c0_59 = arith.constant 0 : index
    %c0_60 = arith.constant 0 : index
    %c0_61 = arith.constant 0 : index
    %186 = vector.load %arg8[%c0_59, %c0_60, %c0_61] : memref<2x128x512xbf16, #tpu.memory_space<vmem>>, vector<1x128x512xbf16>
    %187 = vector.shape_cast %186 : vector<1x128x512xbf16> to vector<128x512xbf16>
    %cst_62 = arith.constant dense<0.000000e+00> : vector<32x512xf32>
    %188 = tpu.matmul %185, %187, %cst_62 {dimension_numbers = #tpu.dot_dimension_numbers<[1], [0], [0], [1], [0, 0, 1, 1], [], []>} : vector<32x128xbf16>, vector<128x512xbf16>, vector<32x512xf32> -> vector<32x512xf32>
    %c0_63 = arith.constant 0 : index
    %c0_64 = arith.constant 0 : index
    %c0_65 = arith.constant 0 : index
    %189 = vector.load %arg9[%c0_63, %c0_64, %c0_65] : memref<2x1x512xf32, #tpu.memory_space<vmem>>, vector<1x1x512xf32>
    %190 = vector.shape_cast %189 : vector<1x1x512xf32> to vector<1x512xf32>
    %191 = vector.broadcast %190 : vector<1x512xf32> to vector<32x512xf32>
    %192 = arith.addf %188, %191 : vector<32x512xf32>
    %cst_66 = arith.constant 0.000000e+00 : f32
    %193 = vector.broadcast %cst_66 : f32 to vector<32x512xf32>
    %194 = arith.maximumf %192, %193 : vector<32x512xf32>
    %195 = arith.truncf %194 : vector<32x512xf32> to vector<32x512xbf16>
    %c0_67 = arith.constant 0 : index
    %c0_68 = arith.constant 0 : index
    %c0_69 = arith.constant 0 : index
    %196 = vector.load %arg10[%c0_67, %c0_68, %c0_69] : memref<2x512x128xbf16, #tpu.memory_space<vmem>>, vector<1x512x128xbf16>
    %197 = vector.shape_cast %196 : vector<1x512x128xbf16> to vector<512x128xbf16>
    %cst_70 = arith.constant dense<0.000000e+00> : vector<32x128xf32>
    %198 = tpu.matmul %195, %197, %cst_70 {dimension_numbers = #tpu.dot_dimension_numbers<[1], [0], [0], [1], [0, 0, 1, 1], [], []>} : vector<32x512xbf16>, vector<512x128xbf16>, vector<32x128xf32> -> vector<32x128xf32>
    %c0_71 = arith.constant 0 : index
    %c0_72 = arith.constant 0 : index
    %c0_73 = arith.constant 0 : index
    %199 = vector.load %arg11[%c0_71, %c0_72, %c0_73] : memref<2x1x128xf32, #tpu.memory_space<vmem>>, vector<1x1x128xf32>
    %200 = vector.shape_cast %199 : vector<1x1x128xf32> to vector<1x128xf32>
    %201 = vector.broadcast %200 : vector<1x128xf32> to vector<32x128xf32>
    %202 = arith.addf %198, %201 : vector<32x128xf32>
    %203 = arith.addf %158, %202 : vector<32x128xf32>
    %c1 = arith.constant 1 : index
    %c0_74 = arith.constant 0 : index
    %c0_75 = arith.constant 0 : index
    %204 = vector.load %arg1[%c1, %c0_74, %c0_75] : memref<2x1x128xf32, #tpu.memory_space<vmem>>, vector<1x1x128xf32>
    %205 = vector.shape_cast %204 : vector<1x1x128xf32> to vector<1x128xf32>
    %c1_76 = arith.constant 1 : index
    %c0_77 = arith.constant 0 : index
    %c0_78 = arith.constant 0 : index
    %206 = vector.load %arg2[%c1_76, %c0_77, %c0_78] : memref<2x1x128xf32, #tpu.memory_space<vmem>>, vector<1x1x128xf32>
    %207 = vector.shape_cast %206 : vector<1x1x128xf32> to vector<1x128xf32>
    %cst_79 = arith.constant dense<0.000000e+00> : vector<32xf32>
    %208 = vector.multi_reduction <add>, %203, %cst_79 [1] : vector<32x128xf32> to vector<32xf32>
    %209 = vector.shape_cast %208 : vector<32xf32> to vector<32x1xf32>
    %cst_80 = arith.constant 1.280000e+02 : f32
    %210 = vector.broadcast %cst_80 : f32 to vector<32x1xf32>
    %211 = arith.divf %209, %210 : vector<32x1xf32>
    %212 = vector.broadcast %211 : vector<32x1xf32> to vector<32x128xf32>
    %213 = arith.subf %203, %212 : vector<32x128xf32>
    %214 = arith.mulf %213, %213 : vector<32x128xf32>
    %cst_81 = arith.constant dense<0.000000e+00> : vector<32xf32>
    %215 = vector.multi_reduction <add>, %214, %cst_81 [1] : vector<32x128xf32> to vector<32xf32>
    %216 = vector.shape_cast %215 : vector<32xf32> to vector<32x1xf32>
    %cst_82 = arith.constant 1.280000e+02 : f32
    %217 = vector.broadcast %cst_82 : f32 to vector<32x1xf32>
    %218 = arith.divf %216, %217 : vector<32x1xf32>
    %219 = vector.broadcast %211 : vector<32x1xf32> to vector<32x128xf32>
    %220 = arith.subf %203, %219 : vector<32x128xf32>
    %cst_83 = arith.constant 9.99999974E-6 : f32
    %221 = vector.broadcast %cst_83 : f32 to vector<32x1xf32>
    %222 = arith.addf %218, %221 : vector<32x1xf32>
    %223 = math.rsqrt %222 : vector<32x1xf32>
    %224 = vector.broadcast %223 : vector<32x1xf32> to vector<32x128xf32>
    %225 = arith.mulf %220, %224 : vector<32x128xf32>
    %226 = vector.broadcast %205 : vector<1x128xf32> to vector<32x128xf32>
    %227 = arith.mulf %225, %226 : vector<32x128xf32>
    %228 = vector.broadcast %207 : vector<1x128xf32> to vector<32x128xf32>
    %229 = arith.addf %227, %228 : vector<32x128xf32>
    %230 = arith.truncf %229 : vector<32x128xf32> to vector<32x128xbf16>
    %c1_84 = arith.constant 1 : index
    %c0_85 = arith.constant 0 : index
    %c0_86 = arith.constant 0 : index
    %231 = vector.load %arg3[%c1_84, %c0_85, %c0_86] : memref<2x128x384xbf16, #tpu.memory_space<vmem>>, vector<1x128x384xbf16>
    %232 = vector.shape_cast %231 : vector<1x128x384xbf16> to vector<128x384xbf16>
    %cst_87 = arith.constant dense<0.000000e+00> : vector<32x384xf32>
    %233 = tpu.matmul %230, %232, %cst_87 {dimension_numbers = #tpu.dot_dimension_numbers<[1], [0], [0], [1], [0, 0, 1, 1], [], []>} : vector<32x128xbf16>, vector<128x384xbf16>, vector<32x384xf32> -> vector<32x384xf32>
    %234 = vector.extract_strided_slice %233 {offsets = [0, 0], sizes = [32, 128], strides = [1, 1]} : vector<32x384xf32> to vector<32x128xf32>
    %235 = arith.truncf %234 : vector<32x128xf32> to vector<32x128xbf16>
    %236 = vector.extract_strided_slice %233 {offsets = [0, 128], sizes = [32, 128], strides = [1, 1]} : vector<32x384xf32> to vector<32x128xf32>
    %237 = arith.truncf %236 : vector<32x128xf32> to vector<32x128xbf16>
    %238 = vector.extract_strided_slice %233 {offsets = [0, 256], sizes = [32, 128], strides = [1, 1]} : vector<32x384xf32> to vector<32x128xf32>
    %239 = arith.truncf %238 : vector<32x128xf32> to vector<32x128xbf16>
    %240 = vector.extract_strided_slice %235 {offsets = [0, 0], sizes = [16, 32], strides = [1, 1]} : vector<32x128xbf16> to vector<16x32xbf16>
    %241 = vector.extract_strided_slice %237 {offsets = [0, 0], sizes = [16, 32], strides = [1, 1]} : vector<32x128xbf16> to vector<16x32xbf16>
    %242 = vector.extract_strided_slice %239 {offsets = [0, 0], sizes = [16, 32], strides = [1, 1]} : vector<32x128xbf16> to vector<16x32xbf16>
    %cst_88 = arith.constant dense<0.000000e+00> : vector<16x16xf32>
    %243 = tpu.matmul %240, %241, %cst_88 {dimension_numbers = #tpu.dot_dimension_numbers<[1], [1], [0], [0], [0, 0, 1, 0], [], []>} : vector<16x32xbf16>, vector<16x32xbf16>, vector<16x16xf32> -> vector<16x16xf32>
    %244 = arith.addf %243, %6 : vector<16x16xf32>
    %245 = math.exp %244 : vector<16x16xf32>
    %cst_89 = arith.constant dense<0.000000e+00> : vector<16xf32>
    %246 = vector.multi_reduction <add>, %245, %cst_89 [1] : vector<16x16xf32> to vector<16xf32>
    %247 = vector.shape_cast %246 : vector<16xf32> to vector<16x1xf32>
    %248 = tpu.reciprocal %247 {approx = true} : vector<16x1xf32> -> vector<16x1xf32>
    %249 = vector.broadcast %248 : vector<16x1xf32> to vector<16x16xf32>
    %250 = arith.mulf %245, %249 : vector<16x16xf32>
    %251 = arith.truncf %250 : vector<16x16xf32> to vector<16x16xbf16>
    %cst_90 = arith.constant dense<0.000000e+00> : vector<16x32xf32>
    %252 = tpu.matmul %251, %242, %cst_90 {dimension_numbers = #tpu.dot_dimension_numbers<[1], [0], [0], [1], [0, 0, 1, 1], [], []>} : vector<16x16xbf16>, vector<16x32xbf16>, vector<16x32xf32> -> vector<16x32xf32>
    %253 = vector.extract_strided_slice %235 {offsets = [0, 32], sizes = [16, 32], strides = [1, 1]} : vector<32x128xbf16> to vector<16x32xbf16>
    %254 = vector.extract_strided_slice %237 {offsets = [0, 32], sizes = [16, 32], strides = [1, 1]} : vector<32x128xbf16> to vector<16x32xbf16>
    %255 = vector.extract_strided_slice %239 {offsets = [0, 32], sizes = [16, 32], strides = [1, 1]} : vector<32x128xbf16> to vector<16x32xbf16>
    %cst_91 = arith.constant dense<0.000000e+00> : vector<16x16xf32>
    %256 = tpu.matmul %253, %254, %cst_91 {dimension_numbers = #tpu.dot_dimension_numbers<[1], [1], [0], [0], [0, 0, 1, 0], [], []>} : vector<16x32xbf16>, vector<16x32xbf16>, vector<16x16xf32> -> vector<16x16xf32>
    %257 = arith.addf %256, %6 : vector<16x16xf32>
    %258 = math.exp %257 : vector<16x16xf32>
    %cst_92 = arith.constant dense<0.000000e+00> : vector<16xf32>
    %259 = vector.multi_reduction <add>, %258, %cst_92 [1] : vector<16x16xf32> to vector<16xf32>
    %260 = vector.shape_cast %259 : vector<16xf32> to vector<16x1xf32>
    %261 = tpu.reciprocal %260 {approx = true} : vector<16x1xf32> -> vector<16x1xf32>
    %262 = vector.broadcast %261 : vector<16x1xf32> to vector<16x16xf32>
    %263 = arith.mulf %258, %262 : vector<16x16xf32>
    %264 = arith.truncf %263 : vector<16x16xf32> to vector<16x16xbf16>
    %cst_93 = arith.constant dense<0.000000e+00> : vector<16x32xf32>
    %265 = tpu.matmul %264, %255, %cst_93 {dimension_numbers = #tpu.dot_dimension_numbers<[1], [0], [0], [1], [0, 0, 1, 1], [], []>} : vector<16x16xbf16>, vector<16x32xbf16>, vector<16x32xf32> -> vector<16x32xf32>
    %266 = vector.extract_strided_slice %235 {offsets = [0, 64], sizes = [16, 32], strides = [1, 1]} : vector<32x128xbf16> to vector<16x32xbf16>
    %267 = vector.extract_strided_slice %237 {offsets = [0, 64], sizes = [16, 32], strides = [1, 1]} : vector<32x128xbf16> to vector<16x32xbf16>
    %268 = vector.extract_strided_slice %239 {offsets = [0, 64], sizes = [16, 32], strides = [1, 1]} : vector<32x128xbf16> to vector<16x32xbf16>
    %cst_94 = arith.constant dense<0.000000e+00> : vector<16x16xf32>
    %269 = tpu.matmul %266, %267, %cst_94 {dimension_numbers = #tpu.dot_dimension_numbers<[1], [1], [0], [0], [0, 0, 1, 0], [], []>} : vector<16x32xbf16>, vector<16x32xbf16>, vector<16x16xf32> -> vector<16x16xf32>
    %270 = arith.addf %269, %6 : vector<16x16xf32>
    %271 = math.exp %270 : vector<16x16xf32>
    %cst_95 = arith.constant dense<0.000000e+00> : vector<16xf32>
    %272 = vector.multi_reduction <add>, %271, %cst_95 [1] : vector<16x16xf32> to vector<16xf32>
    %273 = vector.shape_cast %272 : vector<16xf32> to vector<16x1xf32>
    %274 = tpu.reciprocal %273 {approx = true} : vector<16x1xf32> -> vector<16x1xf32>
    %275 = vector.broadcast %274 : vector<16x1xf32> to vector<16x16xf32>
    %276 = arith.mulf %271, %275 : vector<16x16xf32>
    %277 = arith.truncf %276 : vector<16x16xf32> to vector<16x16xbf16>
    %cst_96 = arith.constant dense<0.000000e+00> : vector<16x32xf32>
    %278 = tpu.matmul %277, %268, %cst_96 {dimension_numbers = #tpu.dot_dimension_numbers<[1], [0], [0], [1], [0, 0, 1, 1], [], []>} : vector<16x16xbf16>, vector<16x32xbf16>, vector<16x32xf32> -> vector<16x32xf32>
    %279 = vector.extract_strided_slice %235 {offsets = [0, 96], sizes = [16, 32], strides = [1, 1]} : vector<32x128xbf16> to vector<16x32xbf16>
    %280 = vector.extract_strided_slice %237 {offsets = [0, 96], sizes = [16, 32], strides = [1, 1]} : vector<32x128xbf16> to vector<16x32xbf16>
    %281 = vector.extract_strided_slice %239 {offsets = [0, 96], sizes = [16, 32], strides = [1, 1]} : vector<32x128xbf16> to vector<16x32xbf16>
    %cst_97 = arith.constant dense<0.000000e+00> : vector<16x16xf32>
    %282 = tpu.matmul %279, %280, %cst_97 {dimension_numbers = #tpu.dot_dimension_numbers<[1], [1], [0], [0], [0, 0, 1, 0], [], []>} : vector<16x32xbf16>, vector<16x32xbf16>, vector<16x16xf32> -> vector<16x16xf32>
    %283 = arith.addf %282, %6 : vector<16x16xf32>
    %284 = math.exp %283 : vector<16x16xf32>
    %cst_98 = arith.constant dense<0.000000e+00> : vector<16xf32>
    %285 = vector.multi_reduction <add>, %284, %cst_98 [1] : vector<16x16xf32> to vector<16xf32>
    %286 = vector.shape_cast %285 : vector<16xf32> to vector<16x1xf32>
    %287 = tpu.reciprocal %286 {approx = true} : vector<16x1xf32> -> vector<16x1xf32>
    %288 = vector.broadcast %287 : vector<16x1xf32> to vector<16x16xf32>
    %289 = arith.mulf %284, %288 : vector<16x16xf32>
    %290 = arith.truncf %289 : vector<16x16xf32> to vector<16x16xbf16>
    %cst_99 = arith.constant dense<0.000000e+00> : vector<16x32xf32>
    %291 = tpu.matmul %290, %281, %cst_99 {dimension_numbers = #tpu.dot_dimension_numbers<[1], [0], [0], [1], [0, 0, 1, 1], [], []>} : vector<16x16xbf16>, vector<16x32xbf16>, vector<16x32xf32> -> vector<16x32xf32>
    %292 = tpu.concatenate %252, %265, %278, %291 in 1 : vector<16x32xf32>, vector<16x32xf32>, vector<16x32xf32>, vector<16x32xf32> -> vector<16x128xf32>
    %293 = vector.extract_strided_slice %235 {offsets = [16, 0], sizes = [16, 32], strides = [1, 1]} : vector<32x128xbf16> to vector<16x32xbf16>
    %294 = vector.extract_strided_slice %237 {offsets = [16, 0], sizes = [16, 32], strides = [1, 1]} : vector<32x128xbf16> to vector<16x32xbf16>
    %295 = vector.extract_strided_slice %239 {offsets = [16, 0], sizes = [16, 32], strides = [1, 1]} : vector<32x128xbf16> to vector<16x32xbf16>
    %cst_100 = arith.constant dense<0.000000e+00> : vector<16x16xf32>
    %296 = tpu.matmul %293, %294, %cst_100 {dimension_numbers = #tpu.dot_dimension_numbers<[1], [1], [0], [0], [0, 0, 1, 0], [], []>} : vector<16x32xbf16>, vector<16x32xbf16>, vector<16x16xf32> -> vector<16x16xf32>
    %297 = arith.addf %296, %6 : vector<16x16xf32>
    %298 = math.exp %297 : vector<16x16xf32>
    %cst_101 = arith.constant dense<0.000000e+00> : vector<16xf32>
    %299 = vector.multi_reduction <add>, %298, %cst_101 [1] : vector<16x16xf32> to vector<16xf32>
    %300 = vector.shape_cast %299 : vector<16xf32> to vector<16x1xf32>
    %301 = tpu.reciprocal %300 {approx = true} : vector<16x1xf32> -> vector<16x1xf32>
    %302 = vector.broadcast %301 : vector<16x1xf32> to vector<16x16xf32>
    %303 = arith.mulf %298, %302 : vector<16x16xf32>
    %304 = arith.truncf %303 : vector<16x16xf32> to vector<16x16xbf16>
    %cst_102 = arith.constant dense<0.000000e+00> : vector<16x32xf32>
    %305 = tpu.matmul %304, %295, %cst_102 {dimension_numbers = #tpu.dot_dimension_numbers<[1], [0], [0], [1], [0, 0, 1, 1], [], []>} : vector<16x16xbf16>, vector<16x32xbf16>, vector<16x32xf32> -> vector<16x32xf32>
    %306 = vector.extract_strided_slice %235 {offsets = [16, 32], sizes = [16, 32], strides = [1, 1]} : vector<32x128xbf16> to vector<16x32xbf16>
    %307 = vector.extract_strided_slice %237 {offsets = [16, 32], sizes = [16, 32], strides = [1, 1]} : vector<32x128xbf16> to vector<16x32xbf16>
    %308 = vector.extract_strided_slice %239 {offsets = [16, 32], sizes = [16, 32], strides = [1, 1]} : vector<32x128xbf16> to vector<16x32xbf16>
    %cst_103 = arith.constant dense<0.000000e+00> : vector<16x16xf32>
    %309 = tpu.matmul %306, %307, %cst_103 {dimension_numbers = #tpu.dot_dimension_numbers<[1], [1], [0], [0], [0, 0, 1, 0], [], []>} : vector<16x32xbf16>, vector<16x32xbf16>, vector<16x16xf32> -> vector<16x16xf32>
    %310 = arith.addf %309, %6 : vector<16x16xf32>
    %311 = math.exp %310 : vector<16x16xf32>
    %cst_104 = arith.constant dense<0.000000e+00> : vector<16xf32>
    %312 = vector.multi_reduction <add>, %311, %cst_104 [1] : vector<16x16xf32> to vector<16xf32>
    %313 = vector.shape_cast %312 : vector<16xf32> to vector<16x1xf32>
    %314 = tpu.reciprocal %313 {approx = true} : vector<16x1xf32> -> vector<16x1xf32>
    %315 = vector.broadcast %314 : vector<16x1xf32> to vector<16x16xf32>
    %316 = arith.mulf %311, %315 : vector<16x16xf32>
    %317 = arith.truncf %316 : vector<16x16xf32> to vector<16x16xbf16>
    %cst_105 = arith.constant dense<0.000000e+00> : vector<16x32xf32>
    %318 = tpu.matmul %317, %308, %cst_105 {dimension_numbers = #tpu.dot_dimension_numbers<[1], [0], [0], [1], [0, 0, 1, 1], [], []>} : vector<16x16xbf16>, vector<16x32xbf16>, vector<16x32xf32> -> vector<16x32xf32>
    %319 = vector.extract_strided_slice %235 {offsets = [16, 64], sizes = [16, 32], strides = [1, 1]} : vector<32x128xbf16> to vector<16x32xbf16>
    %320 = vector.extract_strided_slice %237 {offsets = [16, 64], sizes = [16, 32], strides = [1, 1]} : vector<32x128xbf16> to vector<16x32xbf16>
    %321 = vector.extract_strided_slice %239 {offsets = [16, 64], sizes = [16, 32], strides = [1, 1]} : vector<32x128xbf16> to vector<16x32xbf16>
    %cst_106 = arith.constant dense<0.000000e+00> : vector<16x16xf32>
    %322 = tpu.matmul %319, %320, %cst_106 {dimension_numbers = #tpu.dot_dimension_numbers<[1], [1], [0], [0], [0, 0, 1, 0], [], []>} : vector<16x32xbf16>, vector<16x32xbf16>, vector<16x16xf32> -> vector<16x16xf32>
    %323 = arith.addf %322, %6 : vector<16x16xf32>
    %324 = math.exp %323 : vector<16x16xf32>
    %cst_107 = arith.constant dense<0.000000e+00> : vector<16xf32>
    %325 = vector.multi_reduction <add>, %324, %cst_107 [1] : vector<16x16xf32> to vector<16xf32>
    %326 = vector.shape_cast %325 : vector<16xf32> to vector<16x1xf32>
    %327 = tpu.reciprocal %326 {approx = true} : vector<16x1xf32> -> vector<16x1xf32>
    %328 = vector.broadcast %327 : vector<16x1xf32> to vector<16x16xf32>
    %329 = arith.mulf %324, %328 : vector<16x16xf32>
    %330 = arith.truncf %329 : vector<16x16xf32> to vector<16x16xbf16>
    %cst_108 = arith.constant dense<0.000000e+00> : vector<16x32xf32>
    %331 = tpu.matmul %330, %321, %cst_108 {dimension_numbers = #tpu.dot_dimension_numbers<[1], [0], [0], [1], [0, 0, 1, 1], [], []>} : vector<16x16xbf16>, vector<16x32xbf16>, vector<16x32xf32> -> vector<16x32xf32>
    %332 = vector.extract_strided_slice %235 {offsets = [16, 96], sizes = [16, 32], strides = [1, 1]} : vector<32x128xbf16> to vector<16x32xbf16>
    %333 = vector.extract_strided_slice %237 {offsets = [16, 96], sizes = [16, 32], strides = [1, 1]} : vector<32x128xbf16> to vector<16x32xbf16>
    %334 = vector.extract_strided_slice %239 {offsets = [16, 96], sizes = [16, 32], strides = [1, 1]} : vector<32x128xbf16> to vector<16x32xbf16>
    %cst_109 = arith.constant dense<0.000000e+00> : vector<16x16xf32>
    %335 = tpu.matmul %332, %333, %cst_109 {dimension_numbers = #tpu.dot_dimension_numbers<[1], [1], [0], [0], [0, 0, 1, 0], [], []>} : vector<16x32xbf16>, vector<16x32xbf16>, vector<16x16xf32> -> vector<16x16xf32>
    %336 = arith.addf %335, %6 : vector<16x16xf32>
    %337 = math.exp %336 : vector<16x16xf32>
    %cst_110 = arith.constant dense<0.000000e+00> : vector<16xf32>
    %338 = vector.multi_reduction <add>, %337, %cst_110 [1] : vector<16x16xf32> to vector<16xf32>
    %339 = vector.shape_cast %338 : vector<16xf32> to vector<16x1xf32>
    %340 = tpu.reciprocal %339 {approx = true} : vector<16x1xf32> -> vector<16x1xf32>
    %341 = vector.broadcast %340 : vector<16x1xf32> to vector<16x16xf32>
    %342 = arith.mulf %337, %341 : vector<16x16xf32>
    %343 = arith.truncf %342 : vector<16x16xf32> to vector<16x16xbf16>
    %cst_111 = arith.constant dense<0.000000e+00> : vector<16x32xf32>
    %344 = tpu.matmul %343, %334, %cst_111 {dimension_numbers = #tpu.dot_dimension_numbers<[1], [0], [0], [1], [0, 0, 1, 1], [], []>} : vector<16x16xbf16>, vector<16x32xbf16>, vector<16x32xf32> -> vector<16x32xf32>
    %345 = tpu.concatenate %305, %318, %331, %344 in 1 : vector<16x32xf32>, vector<16x32xf32>, vector<16x32xf32>, vector<16x32xf32> -> vector<16x128xf32>
    %346 = tpu.concatenate %292, %345 in 0 : vector<16x128xf32>, vector<16x128xf32> -> vector<32x128xf32>
    %347 = arith.truncf %346 : vector<32x128xf32> to vector<32x128xbf16>
    %c1_112 = arith.constant 1 : index
    %c0_113 = arith.constant 0 : index
    %c0_114 = arith.constant 0 : index
    %348 = vector.load %arg4[%c1_112, %c0_113, %c0_114] : memref<2x128x128xbf16, #tpu.memory_space<vmem>>, vector<1x128x128xbf16>
    %349 = vector.shape_cast %348 : vector<1x128x128xbf16> to vector<128x128xbf16>
    %cst_115 = arith.constant dense<0.000000e+00> : vector<32x128xf32>
    %350 = tpu.matmul %347, %349, %cst_115 {dimension_numbers = #tpu.dot_dimension_numbers<[1], [0], [0], [1], [0, 0, 1, 1], [], []>} : vector<32x128xbf16>, vector<128x128xbf16>, vector<32x128xf32> -> vector<32x128xf32>
    %c1_116 = arith.constant 1 : index
    %c0_117 = arith.constant 0 : index
    %c0_118 = arith.constant 0 : index
    %351 = vector.load %arg5[%c1_116, %c0_117, %c0_118] : memref<2x1x128xf32, #tpu.memory_space<vmem>>, vector<1x1x128xf32>
    %352 = vector.shape_cast %351 : vector<1x1x128xf32> to vector<1x128xf32>
    %353 = vector.broadcast %352 : vector<1x128xf32> to vector<32x128xf32>
    %354 = arith.addf %350, %353 : vector<32x128xf32>
    %355 = arith.addf %203, %354 : vector<32x128xf32>
    %c1_119 = arith.constant 1 : index
    %c0_120 = arith.constant 0 : index
    %c0_121 = arith.constant 0 : index
    %356 = vector.load %arg6[%c1_119, %c0_120, %c0_121] : memref<2x1x128xf32, #tpu.memory_space<vmem>>, vector<1x1x128xf32>
    %357 = vector.shape_cast %356 : vector<1x1x128xf32> to vector<1x128xf32>
    %c1_122 = arith.constant 1 : index
    %c0_123 = arith.constant 0 : index
    %c0_124 = arith.constant 0 : index
    %358 = vector.load %arg7[%c1_122, %c0_123, %c0_124] : memref<2x1x128xf32, #tpu.memory_space<vmem>>, vector<1x1x128xf32>
    %359 = vector.shape_cast %358 : vector<1x1x128xf32> to vector<1x128xf32>
    %cst_125 = arith.constant dense<0.000000e+00> : vector<32xf32>
    %360 = vector.multi_reduction <add>, %355, %cst_125 [1] : vector<32x128xf32> to vector<32xf32>
    %361 = vector.shape_cast %360 : vector<32xf32> to vector<32x1xf32>
    %cst_126 = arith.constant 1.280000e+02 : f32
    %362 = vector.broadcast %cst_126 : f32 to vector<32x1xf32>
    %363 = arith.divf %361, %362 : vector<32x1xf32>
    %364 = vector.broadcast %363 : vector<32x1xf32> to vector<32x128xf32>
    %365 = arith.subf %355, %364 : vector<32x128xf32>
    %366 = arith.mulf %365, %365 : vector<32x128xf32>
    %cst_127 = arith.constant dense<0.000000e+00> : vector<32xf32>
    %367 = vector.multi_reduction <add>, %366, %cst_127 [1] : vector<32x128xf32> to vector<32xf32>
    %368 = vector.shape_cast %367 : vector<32xf32> to vector<32x1xf32>
    %cst_128 = arith.constant 1.280000e+02 : f32
    %369 = vector.broadcast %cst_128 : f32 to vector<32x1xf32>
    %370 = arith.divf %368, %369 : vector<32x1xf32>
    %371 = vector.broadcast %363 : vector<32x1xf32> to vector<32x128xf32>
    %372 = arith.subf %355, %371 : vector<32x128xf32>
    %cst_129 = arith.constant 9.99999974E-6 : f32
    %373 = vector.broadcast %cst_129 : f32 to vector<32x1xf32>
    %374 = arith.addf %370, %373 : vector<32x1xf32>
    %375 = math.rsqrt %374 : vector<32x1xf32>
    %376 = vector.broadcast %375 : vector<32x1xf32> to vector<32x128xf32>
    %377 = arith.mulf %372, %376 : vector<32x128xf32>
    %378 = vector.broadcast %357 : vector<1x128xf32> to vector<32x128xf32>
    %379 = arith.mulf %377, %378 : vector<32x128xf32>
    %380 = vector.broadcast %359 : vector<1x128xf32> to vector<32x128xf32>
    %381 = arith.addf %379, %380 : vector<32x128xf32>
    %382 = arith.truncf %381 : vector<32x128xf32> to vector<32x128xbf16>
    %c1_130 = arith.constant 1 : index
    %c0_131 = arith.constant 0 : index
    %c0_132 = arith.constant 0 : index
    %383 = vector.load %arg8[%c1_130, %c0_131, %c0_132] : memref<2x128x512xbf16, #tpu.memory_space<vmem>>, vector<1x128x512xbf16>
    %384 = vector.shape_cast %383 : vector<1x128x512xbf16> to vector<128x512xbf16>
    %cst_133 = arith.constant dense<0.000000e+00> : vector<32x512xf32>
    %385 = tpu.matmul %382, %384, %cst_133 {dimension_numbers = #tpu.dot_dimension_numbers<[1], [0], [0], [1], [0, 0, 1, 1], [], []>} : vector<32x128xbf16>, vector<128x512xbf16>, vector<32x512xf32> -> vector<32x512xf32>
    %c1_134 = arith.constant 1 : index
    %c0_135 = arith.constant 0 : index
    %c0_136 = arith.constant 0 : index
    %386 = vector.load %arg9[%c1_134, %c0_135, %c0_136] : memref<2x1x512xf32, #tpu.memory_space<vmem>>, vector<1x1x512xf32>
    %387 = vector.shape_cast %386 : vector<1x1x512xf32> to vector<1x512xf32>
    %388 = vector.broadcast %387 : vector<1x512xf32> to vector<32x512xf32>
    %389 = arith.addf %385, %388 : vector<32x512xf32>
    %cst_137 = arith.constant 0.000000e+00 : f32
    %390 = vector.broadcast %cst_137 : f32 to vector<32x512xf32>
    %391 = arith.maximumf %389, %390 : vector<32x512xf32>
    %392 = arith.truncf %391 : vector<32x512xf32> to vector<32x512xbf16>
    %c1_138 = arith.constant 1 : index
    %c0_139 = arith.constant 0 : index
    %c0_140 = arith.constant 0 : index
    %393 = vector.load %arg10[%c1_138, %c0_139, %c0_140] : memref<2x512x128xbf16, #tpu.memory_space<vmem>>, vector<1x512x128xbf16>
    %394 = vector.shape_cast %393 : vector<1x512x128xbf16> to vector<512x128xbf16>
    %cst_141 = arith.constant dense<0.000000e+00> : vector<32x128xf32>
    %395 = tpu.matmul %392, %394, %cst_141 {dimension_numbers = #tpu.dot_dimension_numbers<[1], [0], [0], [1], [0, 0, 1, 1], [], []>} : vector<32x512xbf16>, vector<512x128xbf16>, vector<32x128xf32> -> vector<32x128xf32>
    %c1_142 = arith.constant 1 : index
    %c0_143 = arith.constant 0 : index
    %c0_144 = arith.constant 0 : index
    %396 = vector.load %arg11[%c1_142, %c0_143, %c0_144] : memref<2x1x128xf32, #tpu.memory_space<vmem>>, vector<1x1x128xf32>
    %397 = vector.shape_cast %396 : vector<1x1x128xf32> to vector<1x128xf32>
    %398 = vector.broadcast %397 : vector<1x128xf32> to vector<32x128xf32>
    %399 = arith.addf %395, %398 : vector<32x128xf32>
    %400 = arith.addf %355, %399 : vector<32x128xf32>
    %c0_145 = arith.constant 0 : index
    %c0_146 = arith.constant 0 : index
    %401 = vector.load %arg12[%c0_145, %c0_146] : memref<1x128xf32, #tpu.memory_space<vmem>>, vector<1x128xf32>
    %c0_147 = arith.constant 0 : index
    %c0_148 = arith.constant 0 : index
    %402 = vector.load %arg13[%c0_147, %c0_148] : memref<1x128xf32, #tpu.memory_space<vmem>>, vector<1x128xf32>
    %cst_149 = arith.constant dense<0.000000e+00> : vector<32xf32>
    %403 = vector.multi_reduction <add>, %400, %cst_149 [1] : vector<32x128xf32> to vector<32xf32>
    %404 = vector.shape_cast %403 : vector<32xf32> to vector<32x1xf32>
    %cst_150 = arith.constant 1.280000e+02 : f32
    %405 = vector.broadcast %cst_150 : f32 to vector<32x1xf32>
    %406 = arith.divf %404, %405 : vector<32x1xf32>
    %407 = vector.broadcast %406 : vector<32x1xf32> to vector<32x128xf32>
    %408 = arith.subf %400, %407 : vector<32x128xf32>
    %409 = arith.mulf %408, %408 : vector<32x128xf32>
    %cst_151 = arith.constant dense<0.000000e+00> : vector<32xf32>
    %410 = vector.multi_reduction <add>, %409, %cst_151 [1] : vector<32x128xf32> to vector<32xf32>
    %411 = vector.shape_cast %410 : vector<32xf32> to vector<32x1xf32>
    %cst_152 = arith.constant 1.280000e+02 : f32
    %412 = vector.broadcast %cst_152 : f32 to vector<32x1xf32>
    %413 = arith.divf %411, %412 : vector<32x1xf32>
    %414 = vector.broadcast %406 : vector<32x1xf32> to vector<32x128xf32>
    %415 = arith.subf %400, %414 : vector<32x128xf32>
    %cst_153 = arith.constant 9.99999974E-6 : f32
    %416 = vector.broadcast %cst_153 : f32 to vector<32x1xf32>
    %417 = arith.addf %413, %416 : vector<32x1xf32>
    %418 = math.rsqrt %417 : vector<32x1xf32>
    %419 = vector.broadcast %418 : vector<32x1xf32> to vector<32x128xf32>
    %420 = arith.mulf %415, %419 : vector<32x128xf32>
    %421 = vector.broadcast %401 : vector<1x128xf32> to vector<32x128xf32>
    %422 = arith.mulf %420, %421 : vector<32x128xf32>
    %423 = vector.broadcast %402 : vector<1x128xf32> to vector<32x128xf32>
    %424 = arith.addf %422, %423 : vector<32x128xf32>
    %425 = arith.truncf %424 : vector<32x128xf32> to vector<32x128xbf16>
    %c0_154 = arith.constant 0 : index
    %c0_155 = arith.constant 0 : index
    %426 = vector.load %arg14[%c0_154, %c0_155] : memref<128x128xbf16, #tpu.memory_space<vmem>>, vector<128x128xbf16>
    %cst_156 = arith.constant dense<0.000000e+00> : vector<32x128xf32>
    %427 = tpu.matmul %425, %426, %cst_156 {dimension_numbers = #tpu.dot_dimension_numbers<[1], [0], [0], [1], [0, 0, 1, 1], [], []>} : vector<32x128xbf16>, vector<128x128xbf16>, vector<32x128xf32> -> vector<32x128xf32>
    %c0_157 = arith.constant 0 : index
    %c0_158 = arith.constant 0 : index
    %428 = vector.load %arg15[%c0_157, %c0_158] : memref<1x128xf32, #tpu.memory_space<vmem>>, vector<1x128xf32>
    %429 = vector.broadcast %428 : vector<1x128xf32> to vector<32x128xf32>
    %430 = arith.addf %427, %429 : vector<32x128xf32>
    %c0_159 = arith.constant 0 : index
    %c0_160 = arith.constant 0 : index
    %431 = vector.load %arg16[%c0_159, %c0_160] : memref<32x128xf32, #tpu.memory_space<vmem>>, vector<32x128xf32>
    tpu.vector_store %arg16[%c0_159, %c0_160], %430 {strides = array<i32>} : memref<32x128xf32, #tpu.memory_space<vmem>>, vector<32x128xf32>,
    return
  }
}

</mosaic_0001>

<llo_original>
// kernel: transformer_forward.1
$region0: #{transformer_forward.1}
  #allocation0 [shape = 'u32[]', space=smem, size = 0x4, offset = 0x4, fixed_abs, tag = 'smem constant byte address 0x4 - core index']
  #allocation1 [shape = 'u32[144,128]{1,0:T(1,128)}', space=vmem, size = 0x12000, scoped, tag = 'internal scratch']
  %s0 = inlined_call_operand.vmem [shape: f32[32,128], index: 0, kind: input, shape index: {}]
  %s1 = inlined_call_operand.vmem [shape: f32[2,1,128], index: 1, kind: input, shape index: {}]
  %s2 = inlined_call_operand.hbm [shape: f32[2,1,128], index: 2, kind: input, shape index: {}]
  %s3 = inlined_call_operand.vmem [shape: bf16[2,128,384], index: 3, kind: input, shape index: {}]
  %s4 = inlined_call_operand.hbm [shape: bf16[2,128,128], index: 4, kind: input, shape index: {}]
  %s5 = inlined_call_operand.hbm [shape: f32[2,1,128], index: 5, kind: input, shape index: {}]
  %s6 = inlined_call_operand.hbm [shape: f32[2,1,128], index: 6, kind: input, shape index: {}]
  %s7 = inlined_call_operand.hbm [shape: f32[2,1,128], index: 7, kind: input, shape index: {}]
  %s8 = inlined_call_operand.hbm [shape: bf16[2,128,512], index: 8, kind: input, shape index: {}]
  %s9 = inlined_call_operand.vmem [shape: f32[2,1,512], index: 9, kind: input, shape index: {}]
  %s10 = inlined_call_operand.hbm [shape: bf16[2,512,128], index: 10, kind: input, shape index: {}]
  %s11 = inlined_call_operand.hbm [shape: f32[2,1,128], index: 11, kind: input, shape index: {}]
  %s12 = inlined_call_operand.hbm [shape: f32[1,128], index: 12, kind: input, shape index: {}]
  %s13 = inlined_call_operand.hbm [shape: f32[1,128], index: 13, kind: input, shape index: {}]
  %s14 = inlined_call_operand.vmem [shape: bf16[128,128], index: 14, kind: input, shape index: {}]
  %s15 = inlined_call_operand.hbm [shape: f32[1,128], index: 15, kind: input, shape index: {}]
  %s16 = inlined_call_operand.hbm [shape: f32[32,128], index: 16, kind: output, shape index: {}]
  %s17 = sld [smem:[#allocation0]]
  $region118: #{transformer_forward.1} parent=0
    _
  %s19 = ssub.s32 1, %s17
  %s20 = scalar_select 0, %s19, %s17
  $region1: #{transformer_forward.1} parent=0
    #allocation2 [shape = 'u8[1024]{0}', space=vmem, size = 0x400, scoped, tag = 'input window, operand 2, single buffered']
    #allocation3 [shape = 's32[1]{0}', space=sflag, size = 0x4, scoped, tag = 'scoped memory for transformer_forward.1']
    #allocation4 [shape = 's32[1]{0}', space=sflag, size = 0x4, scoped, tag = 'scoped memory for transformer_forward.1']
    #allocation5 [shape = 'u8[65536]{0}', space=vmem, size = 0x10000, scoped, tag = 'input window, operand 4, single buffered']
    #allocation6 [shape = 's32[1]{0}', space=sflag, size = 0x4, scoped, tag = 'scoped memory for transformer_forward.1']
    #allocation7 [shape = 'u8[1024]{0}', space=vmem, size = 0x400, scoped, tag = 'input window, operand 5, single buffered']
    #allocation8 [shape = 'u8[1024]{0}', space=vmem, size = 0x400, scoped, tag = 'input window, operand 6, single buffered']
    #allocation9 [shape = 's32[1]{0}', space=sflag, size = 0x4, scoped, tag = 'scoped memory for transformer_forward.1']
    #allocation10 [shape = 'u8[1024]{0}', space=vmem, size = 0x400, scoped, tag = 'input window, operand 7, single buffered']
    #allocation11 [shape = 'u8[262144]{0}', space=vmem, size = 0x40000, scoped, tag = 'input window, operand 8, single buffered']
    #allocation12 [shape = 's32[1]{0}', space=sflag, size = 0x4, scoped, tag = 'scoped memory for transformer_forward.1']
    #allocation13 [shape = 'u8[262144]{0}', space=vmem, size = 0x40000, scoped, tag = 'input window, operand 10, single buffered']
    #allocation14 [shape = 'u8[1024]{0}', space=vmem, size = 0x400, scoped, tag = 'input window, operand 11, single buffered']
    #allocation15 [shape = 's32[1]{0}', space=sflag, size = 0x4, scoped, tag = 'scoped memory for transformer_forward.1']
    #allocation16 [shape = 'u8[512]{0}', space=vmem, size = 0x400, scoped, tag = 'input window, operand 12, single buffered']
    #allocation17 [shape = 'u8[512]{0}', space=vmem, size = 0x400, scoped, tag = 'input window, operand 13, single buffered']
    #allocation18 [shape = 's32[1]{0}', space=sflag, size = 0x4, scoped, tag = 'scoped memory for transformer_forward.1']
    #allocation19 [shape = 'u8[512]{0}', space=vmem, size = 0x400, scoped, tag = 'input window, operand 15, single buffered']
    #allocation20 [shape = 'u8[16384]{0}', space=vmem, size = 0x4000, scoped, tag = 'output window, operand 0, single buffered']
    %21 = vsyncpa [#allocation3], 0
    %22 = vsyncpa [#allocation6], 0
    %23 = vsyncpa [#allocation9], 0
    %24 = vsyncpa [#allocation12], 0
    %25 = vsyncpa [#allocation15], 0
    %26 = vsyncpa [#allocation18], 0
    %27 = vsyncpa [#allocation4], 0
    // Predicated region
    $region2: #{transformer_forward.1} parent=1 // pred_check
      _
    $region3: #{transformer_forward.1} parent=1 // pred_check_branch
      %29 = sbr.rel (0) target = $region5
    $region4: #{transformer_forward.1} parent=1 // pred_region
      _
    $region5: #{transformer_forward.1} parent=1 // pred_fallthru
      _
    // Predicated region
    $region6: #{transformer_forward.1} parent=1 // pred_check
      _
    $region7: #{transformer_forward.1} parent=1 // pred_check_branch
      %31 = sbr.rel (0) target = $region9
    $region8: #{transformer_forward.1} parent=1 // pred_region
      _
    $region9: #{transformer_forward.1} parent=1 // pred_fallthru
      _
    // Predicated region
    $region10: #{transformer_forward.1} parent=1 // pred_check
      _
    $region11: #{transformer_forward.1} parent=1 // pred_check_branch
      %33 = sbr.rel (0) target = $region13
    $region12: #{transformer_forward.1} parent=1 // pred_region
      %s35 = ssub.s32 32, 32
      %36 = vsyncadd [#allocation3], %s35
      %s37 = sshll.u32 [#allocation2], 4
      %s38 = int_to_ptr.vmem [resolvable:$true] %s37
      %43 = dma.hbm_to_vmem [thread:$0]  %s2, 32, %s38, [#allocation3], 16, 16, 1
    $region13: #{transformer_forward.1} parent=1 // pred_fallthru
      _
    // Predicated region
    $region14: #{transformer_forward.1} parent=1 // pred_check
      _
    $region15: #{transformer_forward.1} parent=1 // pred_check_branch
      %45 = sbr.rel (0) target = $region17
    $region16: #{transformer_forward.1} parent=1 // pred_region
      _
    $region17: #{transformer_forward.1} parent=1 // pred_fallthru
      _
    // Predicated region
    $region18: #{transformer_forward.1} parent=1 // pred_check
      _
    $region19: #{transformer_forward.1} parent=1 // pred_check_branch
      %47 = sbr.rel (0) target = $region21
    $region20: #{transformer_forward.1} parent=1 // pred_region
      %s49 = ssub.s32 2048, 2048
      %50 = vsyncadd [#allocation6], %s49
      %s51 = sshll.u32 [#allocation5], 4
      %s52 = int_to_ptr.vmem [resolvable:$true] %s51
      %57 = dma.hbm_to_vmem [thread:$0]  %s4, 2048, %s52, [#allocation6], 64, 64, 4
    $region21: #{transformer_forward.1} parent=1 // pred_fallthru
      _
    // Predicated region
    $region22: #{transformer_forward.1} parent=1 // pred_check
      _
    $region23: #{transformer_forward.1} parent=1 // pred_check_branch
      %59 = sbr.rel (0) target = $region25
    $region24: #{transformer_forward.1} parent=1 // pred_region
      %s61 = ssub.s32 32, 32
      %62 = vsyncadd [#allocation6], %s61
      %s63 = sshll.u32 [#allocation7], 4
      %s64 = int_to_ptr.vmem [resolvable:$true] %s63
      %69 = dma.hbm_to_vmem [thread:$0]  %s5, 32, %s64, [#allocation6], 16, 16, 1
    $region25: #{transformer_forward.1} parent=1 // pred_fallthru
      _
    // Predicated region
    $region26: #{transformer_forward.1} parent=1 // pred_check
      _
    $region27: #{transformer_forward.1} parent=1 // pred_check_branch
      %71 = sbr.rel (0) target = $region29
    $region28: #{transformer_forward.1} parent=1 // pred_region
      %s73 = ssub.s32 32, 32
      %74 = vsyncadd [#allocation9], %s73
      %s75 = sshll.u32 [#allocation8], 4
      %s76 = int_to_ptr.vmem [resolvable:$true] %s75
      %81 = dma.hbm_to_vmem [thread:$0]  %s6, 32, %s76, [#allocation9], 16, 16, 1
    $region29: #{transformer_forward.1} parent=1 // pred_fallthru
      _
    // Predicated region
    $region30: #{transformer_forward.1} parent=1 // pred_check
      _
    $region31: #{transformer_forward.1} parent=1 // pred_check_branch
      %83 = sbr.rel (0) target = $region33
    $region32: #{transformer_forward.1} parent=1 // pred_region
      %s85 = ssub.s32 32, 32
      %86 = vsyncadd [#allocation9], %s85
      %s87 = sshll.u32 [#allocation10], 4
      %s88 = int_to_ptr.vmem [resolvable:$true] %s87
      %93 = dma.hbm_to_vmem [thread:$0]  %s7, 32, %s88, [#allocation9], 16, 16, 1
    $region33: #{transformer_forward.1} parent=1 // pred_fallthru
      _
    // Predicated region
    $region34: #{transformer_forward.1} parent=1 // pred_check
      _
    $region35: #{transformer_forward.1} parent=1 // pred_check_branch
      %95 = sbr.rel (0) target = $region37
    $region36: #{transformer_forward.1} parent=1 // pred_region
      %s97 = ssub.s32 8192, 8192
      %98 = vsyncadd [#allocation12], %s97
      %s99 = sshll.u32 [#allocation11], 4
      %s100 = int_to_ptr.vmem [resolvable:$true] %s99
      %105 = dma.hbm_to_vmem [thread:$0]  %s8, 8192, %s100, [#allocation12], 256, 256, 16
    $region37: #{transformer_forward.1} parent=1 // pred_fallthru
      _
    // Predicated region
    $region38: #{transformer_forward.1} parent=1 // pred_check
      _
    $region39: #{transformer_forward.1} parent=1 // pred_check_branch
      %107 = sbr.rel (0) target = $region41
    $region40: #{transformer_forward.1} parent=1 // pred_region
      _
    $region41: #{transformer_forward.1} parent=1 // pred_fallthru
      _
    // Predicated region
    $region42: #{transformer_forward.1} parent=1 // pred_check
      _
    $region43: #{transformer_forward.1} parent=1 // pred_check_branch
      %109 = sbr.rel (0) target = $region45
    $region44: #{transformer_forward.1} parent=1 // pred_region
      %s111 = ssub.s32 8192, 8192
      %112 = vsyncadd [#allocation12], %s111
      %s113 = sshll.u32 [#allocation13], 4
      %s114 = int_to_ptr.vmem [resolvable:$true] %s113
      %119 = dma.hbm_to_vmem [thread:$0]  %s10, 8192, %s114, [#allocation12], 64, 64, 4
    $region45: #{transformer_forward.1} parent=1 // pred_fallthru
      _
    // Predicated region
    $region46: #{transformer_forward.1} parent=1 // pred_check
      _
    $region47: #{transformer_forward.1} parent=1 // pred_check_branch
      %121 = sbr.rel (0) target = $region49
    $region48: #{transformer_forward.1} parent=1 // pred_region
      %s123 = ssub.s32 32, 32
      %124 = vsyncadd [#allocation15], %s123
      %s125 = sshll.u32 [#allocation14], 4
      %s126 = int_to_ptr.vmem [resolvable:$true] %s125
      %131 = dma.hbm_to_vmem [thread:$0]  %s11, 32, %s126, [#allocation15], 16, 16, 1
    $region49: #{transformer_forward.1} parent=1 // pred_fallthru
      _
    // Predicated region
    $region50: #{transformer_forward.1} parent=1 // pred_check
      _
    $region51: #{transformer_forward.1} parent=1 // pred_check_branch
      %133 = sbr.rel (0) target = $region53
    $region52: #{transformer_forward.1} parent=1 // pred_region
      %s135 = ssub.s32 16, 16
      %136 = vsyncadd [#allocation15], %s135
      %s138 = sshll.u32 [#allocation16], 4
      %s139 = int_to_ptr.vmem [resolvable:$true] %s138
      %141 = dma.hbm_to_vmem [thread:$0]  %s12, 16, %s139, [#allocation15]
    $region53: #{transformer_forward.1} parent=1 // pred_fallthru
      _
    // Predicated region
    $region54: #{transformer_forward.1} parent=1 // pred_check
      _
    $region55: #{transformer_forward.1} parent=1 // pred_check_branch
      %143 = sbr.rel (0) target = $region57
    $region56: #{transformer_forward.1} parent=1 // pred_region
      %s145 = ssub.s32 16, 16
      %146 = vsyncadd [#allocation18], %s145
      %s148 = sshll.u32 [#allocation17], 4
      %s149 = int_to_ptr.vmem [resolvable:$true] %s148
      %151 = dma.hbm_to_vmem [thread:$0]  %s13, 16, %s149, [#allocation18]
    $region57: #{transformer_forward.1} parent=1 // pred_fallthru
      _
    // Predicated region
    $region58: #{transformer_forward.1} parent=1 // pred_check
      _
    $region59: #{transformer_forward.1} parent=1 // pred_check_branch
      %153 = sbr.rel (0) target = $region61
    $region60: #{transformer_forward.1} parent=1 // pred_region
      _
    $region61: #{transformer_forward.1} parent=1 // pred_fallthru
      _
    // Predicated region
    $region62: #{transformer_forward.1} parent=1 // pred_check
      _
    $region63: #{transformer_forward.1} parent=1 // pred_check_branch
      %155 = sbr.rel (0) target = $region65
    $region64: #{transformer_forward.1} parent=1 // pred_region
      %s157 = ssub.s32 16, 16
      %158 = vsyncadd [#allocation18], %s157
      %s160 = sshll.u32 [#allocation19], 4
      %s161 = int_to_ptr.vmem [resolvable:$true] %s160
      %163 = dma.hbm_to_vmem [thread:$0]  %s15, 16, %s161, [#allocation18]
    $region65: #{transformer_forward.1} parent=1 // pred_fallthru
      _
    // Predicated region
    $region66: #{transformer_forward.1} parent=1 // pred_check
      _
    $region67: #{transformer_forward.1} parent=1 // pred_check_branch
      %165 = sbr.rel (0) target = $region69
    $region68: #{transformer_forward.1} parent=1 // pred_region
      %166 = dma.done [#allocation3], 32
    $region69: #{transformer_forward.1} parent=1 // pred_fallthru
      _
    // Predicated region
    $region70: #{transformer_forward.1} parent=1 // pred_check
      _
    $region71: #{transformer_forward.1} parent=1 // pred_check_branch
      %168 = sbr.rel (0) target = $region73
    $region72: #{transformer_forward.1} parent=1 // pred_region
      %169 = dma.done [#allocation6], 2048
    $region73: #{transformer_forward.1} parent=1 // pred_fallthru
      _
    // Predicated region
    $region74: #{transformer_forward.1} parent=1 // pred_check
      _
    $region75: #{transformer_forward.1} parent=1 // pred_check_branch
      %171 = sbr.rel (0) target = $region77
    $region76: #{transformer_forward.1} parent=1 // pred_region
      %172 = dma.done [#allocation6], 32
    $region77: #{transformer_forward.1} parent=1 // pred_fallthru
      _
    // Predicated region
    $region78: #{transformer_forward.1} parent=1 // pred_check
      _
    $region79: #{transformer_forward.1} parent=1 // pred_check_branch
      %174 = sbr.rel (0) target = $region81
    $region80: #{transformer_forward.1} parent=1 // pred_region
      %175 = dma.done [#allocation9], 32
    $region81: #{transformer_forward.1} parent=1 // pred_fallthru
      _
    // Predicated region
    $region82: #{transformer_forward.1} parent=1 // pred_check
      _
    $region83: #{transformer_forward.1} parent=1 // pred_check_branch
      %177 = sbr.rel (0) target = $region85
    $region84: #{transformer_forward.1} parent=1 // pred_region
      %178 = dma.done [#allocation9], 32
    $region85: #{transformer_forward.1} parent=1 // pred_fallthru
      _
    // Predicated region
    $region86: #{transformer_forward.1} parent=1 // pred_check
      _
    $region87: #{transformer_forward.1} parent=1 // pred_check_branch
      %180 = sbr.rel (0) target = $region89
    $region88: #{transformer_forward.1} parent=1 // pred_region
      %181 = dma.done [#allocation12], 8192
    $region89: #{transformer_forward.1} parent=1 // pred_fallthru
      _
    // Predicated region
    $region90: #{transformer_forward.1} parent=1 // pred_check
      _
    $region91: #{transformer_forward.1} parent=1 // pred_check_branch
      %183 = sbr.rel (0) target = $region93
    $region92: #{transformer_forward.1} parent=1 // pred_region
      %184 = dma.done [#allocation12], 8192
    $region93: #{transformer_forward.1} parent=1 // pred_fallthru
      _
    // Predicated region
    $region94: #{transformer_forward.1} parent=1 // pred_check
      _
    $region95: #{transformer_forward.1} parent=1 // pred_check_branch
      %186 = sbr.rel (0) target = $region97
    $region96: #{transformer_forward.1} parent=1 // pred_region
      %187 = dma.done [#allocation15], 32
    $region97: #{transformer_forward.1} parent=1 // pred_fallthru
      _
    // Predicated region
    $region98: #{transformer_forward.1} parent=1 // pred_check
      _
    $region99: #{transformer_forward.1} parent=1 // pred_check_branch
      %189 = sbr.rel (0) target = $region101
    $region100: #{transformer_forward.1} parent=1 // pred_region
      %190 = dma.done [#allocation15], 16
    $region101: #{transformer_forward.1} parent=1 // pred_fallthru
      _
    // Predicated region
    $region102: #{transformer_forward.1} parent=1 // pred_check
      _
    $region103: #{transformer_forward.1} parent=1 // pred_check_branch
      %192 = sbr.rel (0) target = $region105
    $region104: #{transformer_forward.1} parent=1 // pred_region
      %193 = dma.done [#allocation18], 16
    $region105: #{transformer_forward.1} parent=1 // pred_fallthru
      _
    // Predicated region
    $region106: #{transformer_forward.1} parent=1 // pred_check
      _
    $region107: #{transformer_forward.1} parent=1 // pred_check_branch
      %195 = sbr.rel (0) target = $region109
    $region108: #{transformer_forward.1} parent=1 // pred_region
      %196 = dma.done [#allocation18], 16
    $region109: #{transformer_forward.1} parent=1 // pred_fallthru
      _
    %v198 = vld [vmem:[%s0] sm:$0xff]
    %v199 = vld [vmem:[%s0 + $0x8] sm:$0xff]
    %v200 = vld [vmem:[%s0 + $0x10] sm:$0xff]
    %v201 = vld [vmem:[%s0 + $0x18] sm:$0xff]
    %v202 = vlaneseq
    %v203 = vshrl.u32 %v202, 7
    %v204 = vadd.s32 %v203, 8
    %v205 = vlaneseq
    %v206 = vand.u32 %v205, 127
    %vm207 = vcmp.ge.s32.totalorder %v203, %v206
    %vm208 = vcmp.ge.s32.totalorder %v204, %v206
    %v209 = vsel %vm207, 0.0, -1e+30
    %v210 = vsel %vm208, 0.0, -1e+30
    %v211 = vld [vmem:[%s1] sm:$0x1]
    %v212 = vld [vmem:[#allocation2] sm:$0x1]
    %213 = vadd.xlane.f32.xlu0 %v198
    %v214 = vpop.xlane.xlu0 %213
    %215 = vadd.xlane.f32.xlu0 %v199
    %v216 = vpop.xlane.xlu0 %215
    %217 = vadd.xlane.f32.xlu0 %v200
    %v218 = vpop.xlane.xlu0 %217
    %219 = vadd.xlane.f32.xlu0 %v201
    %v220 = vpop.xlane.xlu0 %219
    %v221 = vrcp.pop 128.0
    %v222 = vmul.f32 %v214, %v221
    %v223 = vmul.f32 %v216, %v221
    %v224 = vmul.f32 %v218, %v221
    %v225 = vmul.f32 %v220, %v221
    %v226 = vsub.f32 %v198, %v222
    %v227 = vsub.f32 %v199, %v223
    %v228 = vsub.f32 %v200, %v224
    %v229 = vsub.f32 %v201, %v225
    %v230 = vmul.f32 %v226, %v226
    %v231 = vmul.f32 %v227, %v227
    %v232 = vmul.f32 %v228, %v228
    %v233 = vmul.f32 %v229, %v229
    %234 = vadd.xlane.f32.xlu0 %v230
    %v235 = vpop.xlane.xlu0 %234
    %236 = vadd.xlane.f32.xlu0 %v231
    %v237 = vpop.xlane.xlu0 %236
    %238 = vadd.xlane.f32.xlu0 %v232
    %v239 = vpop.xlane.xlu0 %238
    %240 = vadd.xlane.f32.xlu0 %v233
    %v241 = vpop.xlane.xlu0 %240
    %v242 = vmul.f32 %v235, %v221
    %v243 = vmul.f32 %v237, %v221
    %v244 = vmul.f32 %v239, %v221
    %v245 = vmul.f32 %v241, %v221
    %v246 = vadd.f32 %v242, 1e-05
    %v247 = vadd.f32 %v243, 1e-05
    %v248 = vadd.f32 %v244, 1e-05
    %v249 = vadd.f32 %v245, 1e-05
    %v250 = vrsqrt.pop %v246
    %v251 = vrsqrt.pop %v247
    %v252 = vrsqrt.pop %v248
    %v253 = vrsqrt.pop %v249
    %v254 = vmul.f32 %v226, %v250
    %v255 = vmul.f32 %v227, %v251
    %v256 = vmul.f32 %v228, %v252
    %v257 = vmul.f32 %v229, %v253
    %v259 = vlaneseq
    %v260 = vshrl.u32 %v259, 7
    %v261 = vsub.s32 0, %v260
    %v262 = vrot.slane %v211, %v261
    %v264 = vmul.f32 %v254, %v262
    %v265 = vmul.f32 %v255, %v262
    %v266 = vmul.f32 %v256, %v262
    %v267 = vmul.f32 %v257, %v262
    %v269 = vlaneseq
    %v270 = vshrl.u32 %v269, 7
    %v271 = vsub.s32 0, %v270
    %v272 = vrot.slane %v212, %v271
    %v274 = vadd.f32 %v264, %v272
    %v275 = vadd.f32 %v265, %v272
    %v276 = vadd.f32 %v266, %v272
    %v277 = vadd.f32 %v267, %v272
    %v278 = vpack.c.bf16 %v275, %v274
    %v279 = vpack.c.bf16 %v277, %v276
    %v280 = vld [vmem:[%s3] sm:$0xff]
    %v281 = vld [vmem:[%s3 + $0x8] sm:$0xf]
    %v282 = vld [vmem:[%s3 + $0xc] sm:$0xff]
    %v283 = vld [vmem:[%s3 + $0x14] sm:$0xf]
    %v284 = vld [vmem:[%s3 + $0x18] sm:$0xff]
    %v285 = vld [vmem:[%s3 + $0x20] sm:$0xf]
    %v286 = vld [vmem:[%s3 + $0x24] sm:$0xff]
    %v287 = vld [vmem:[%s3 + $0x2c] sm:$0xf]
    %v288 = vld [vmem:[%s3 + $0x30] sm:$0xff]
    %v289 = vld [vmem:[%s3 + $0x38] sm:$0xf]
    %v290 = vld [vmem:[%s3 + $0x3c] sm:$0xff]
    %v291 = vld [vmem:[%s3 + $0x44] sm:$0xf]
    %v292 = vld [vmem:[%s3 + $0x48] sm:$0xff]
    %v293 = vld [vmem:[%s3 + $0x50] sm:$0xf]
    %v294 = vld [vmem:[%s3 + $0x54] sm:$0xff]
    %v295 = vld [vmem:[%s3 + $0x5c] sm:$0xf]
    %v296 = vld [vmem:[%s3 + $0x60] sm:$0xff]
    %v297 = vld [vmem:[%s3 + $0x68] sm:$0xf]
    %v298 = vld [vmem:[%s3 + $0x6c] sm:$0xff]
    %v299 = vld [vmem:[%s3 + $0x74] sm:$0xf]
    %v300 = vld [vmem:[%s3 + $0x78] sm:$0xff]
    %v301 = vld [vmem:[%s3 + $0x80] sm:$0xf]
    %v302 = vld [vmem:[%s3 + $0x84] sm:$0xff]
    %v303 = vld [vmem:[%s3 + $0x8c] sm:$0xf]
    %v304 = vld [vmem:[%s3 + $0x90] sm:$0xff]
    %v305 = vld [vmem:[%s3 + $0x98] sm:$0xf]
    %v306 = vld [vmem:[%s3 + $0x9c] sm:$0xff]
    %v307 = vld [vmem:[%s3 + $0xa4] sm:$0xf]
    %v308 = vld [vmem:[%s3 + $0xa8] sm:$0xff]
    %v309 = vld [vmem:[%s3 + $0xb0] sm:$0xf]
    %v310 = vld [vmem:[%s3 + $0xb4] sm:$0xff]
    %v311 = vld [vmem:[%s3 + $0xbc] sm:$0xf]
    %v344 = vunpack.c.l.b16 %v280
    %v345 = vunpack.c.h.b16 %v280
    %v346 = vunpack.c.l.b16 %v281
    %v347 = vunpack.c.l.b16 %v282
    %v348 = vunpack.c.h.b16 %v282
    %v349 = vunpack.c.l.b16 %v283
    %v350 = vunpack.c.l.b16 %v284
    %v351 = vunpack.c.h.b16 %v284
    %v352 = vunpack.c.l.b16 %v285
    %v353 = vunpack.c.l.b16 %v286
    %v354 = vunpack.c.h.b16 %v286
    %v355 = vunpack.c.l.b16 %v287
    %v356 = vunpack.c.l.b16 %v288
    %v357 = vunpack.c.h.b16 %v288
    %v358 = vunpack.c.l.b16 %v289
    %v359 = vunpack.c.l.b16 %v290
    %v360 = vunpack.c.h.b16 %v290
    %v361 = vunpack.c.l.b16 %v291
    %v362 = vunpack.c.l.b16 %v292
    %v363 = vunpack.c.h.b16 %v292
    %v364 = vunpack.c.l.b16 %v293
    %v365 = vunpack.c.l.b16 %v294
    %v366 = vunpack.c.h.b16 %v294
    %v367 = vunpack.c.l.b16 %v295
    %v368 = vunpack.c.l.b16 %v296
    %v369 = vunpack.c.h.b16 %v296
    %v370 = vunpack.c.l.b16 %v297
    %v371 = vunpack.c.l.b16 %v298
    %v372 = vunpack.c.h.b16 %v298
    %v373 = vunpack.c.l.b16 %v299
    %v374 = vunpack.c.l.b16 %v300
    %v375 = vunpack.c.h.b16 %v300
    %v376 = vunpack.c.l.b16 %v301
    %v377 = vunpack.c.l.b16 %v302
    %v378 = vunpack.c.h.b16 %v302
    %v379 = vunpack.c.l.b16 %v303
    %v380 = vunpack.c.l.b16 %v304
    %v381 = vunpack.c.h.b16 %v304
    %v382 = vunpack.c.l.b16 %v305
    %v383 = vunpack.c.l.b16 %v306
    %v384 = vunpack.c.h.b16 %v306
    %v385 = vunpack.c.l.b16 %v307
    %v386 = vunpack.c.l.b16 %v308
    %v387 = vunpack.c.h.b16 %v308
    %v388 = vunpack.c.l.b16 %v309
    %v389 = vunpack.c.l.b16 %v310
    %v390 = vunpack.c.h.b16 %v310
    %v391 = vunpack.c.l.b16 %v311
    %v392 = vpack.c.b16 %v347, %v344
    %v393 = vpack.c.b16 %v348, %v345
    %v394 = vpack.c.b16 %v349, %v346
    %v395 = vpack.c.b16 %v353, %v350
    %v396 = vpack.c.b16 %v354, %v351
    %v397 = vpack.c.b16 %v355, %v352
    %v398 = vpack.c.b16 %v359, %v356
    %v399 = vpack.c.b16 %v360, %v357
    %v400 = vpack.c.b16 %v361, %v358
    %v401 = vpack.c.b16 %v365, %v362
    %v402 = vpack.c.b16 %v366, %v363
    %v403 = vpack.c.b16 %v367, %v364
    %v404 = vpack.c.b16 %v371, %v368
    %v405 = vpack.c.b16 %v372, %v369
    %v406 = vpack.c.b16 %v373, %v370
    %v407 = vpack.c.b16 %v377, %v374
    %v408 = vpack.c.b16 %v378, %v375
    %v409 = vpack.c.b16 %v379, %v376
    %v410 = vpack.c.b16 %v383, %v380
    %v411 = vpack.c.b16 %v384, %v381
    %v412 = vpack.c.b16 %v385, %v382
    %v413 = vpack.c.b16 %v389, %v386
    %v414 = vpack.c.b16 %v390, %v387
    %v415 = vpack.c.b16 %v391, %v388
    %440 = vmatprep.subr.bf16.mxu0 %v393
    %441 = vmatpush1.bf16.msra.mxu0 %v392
    %442 = vmatprep.subr.bf16.mxu0 %v396
    %443 = vmatpush1.bf16.msra.mxu0 %v395
    %444 = vmatprep.subr.bf16.mxu0 %v399
    %445 = vmatpush1.bf16.msra.mxu0 %v398
    %446 = vmatprep.subr.bf16.mxu0 %v402
    %447 = vmatpush1.bf16.msra.mxu0 %v401
    %448 = vmatprep.subr.bf16.mxu0 %v405
    %449 = vmatpush1.bf16.msra.mxu0 %v404
    %450 = vmatprep.subr.bf16.mxu0 %v408
    %451 = vmatpush1.bf16.msra.mxu0 %v407
    %452 = vmatprep.subr.bf16.mxu0 %v411
    %453 = vmatpush1.bf16.msra.mxu0 %v410
    %454 = vmatprep.subr.bf16.mxu0 %v414
    %455 = vmatpush1.bf16.msra.mxu0 %v413
    %456 = vmatprep.subr.bf16.mxu0 0
    %457 = vmatpush1.bf16.msra.mxu0 0
    %458 = vmatprep.subr.bf16.mxu0 0
    %459 = vmatpush1.bf16.msra.mxu0 0
    %460 = vmatprep.subr.bf16.mxu0 0
    %461 = vmatpush1.bf16.msra.mxu0 0
    %462 = vmatprep.subr.bf16.mxu0 0
    %463 = vmatpush1.bf16.msra.mxu0 0
    %464 = vmatprep.subr.bf16.mxu0 0
    %465 = vmatpush1.bf16.msra.mxu0 0
    %466 = vmatprep.subr.bf16.mxu0 0
    %467 = vmatpush1.bf16.msra.mxu0 0
    %468 = vmatprep.subr.bf16.mxu0 0
    %469 = vmatpush1.bf16.msra.mxu0 0
    %470 = vmatprep.subr.bf16.mxu0 0
    %471 = vmatpush1.bf16.msra.mxu0 0
    %472 = vmatprep.mubr.bf16.mxu0 0
    %473 = vmatmul.mubr.bf16.gmra.mrb[0].mxu0 %v278
    %v474 = vpop.f32.mrb[0].mxu0
    %v475 = vadd.f32 0.0, %v474
    %v476 = vpop.f32.mrb[0].mxu0
    %v477 = vadd.f32 0.0, %v476
    %v478 = vpop.f32.mrb[0].mxu0
    %v479 = vadd.f32 0.0, %v478
    %v480 = vpop.f32.mrb[0].mxu0
    %v481 = vadd.f32 0.0, %v480
    %482 = vmatprep.mubr.bf16.mxu0 0
    %483 = vmatmul.mubr.bf16.gmra.mrb[0].mxu0 %v279
    %v484 = vpop.f32.mrb[0].mxu0
    %v485 = vadd.f32 0.0, %v484
    %v486 = vpop.f32.mrb[0].mxu0
    %v487 = vadd.f32 0.0, %v486
    %v488 = vpop.f32.mrb[0].mxu0
    %v489 = vadd.f32 0.0, %v488
    %v490 = vpop.f32.mrb[0].mxu0
    %v491 = vadd.f32 0.0, %v490
    %492 = vdwg.mxu0
    %493 = vmatprep.subr.bf16.mxu0 0
    %494 = vmatpush1.bf16.msra.mxu0 %v394
    %495 = vmatprep.subr.bf16.mxu0 0
    %496 = vmatpush1.bf16.msra.mxu0 %v397
    %497 = vmatprep.subr.bf16.mxu0 0
    %498 = vmatpush1.bf16.msra.mxu0 %v400
    %499 = vmatprep.subr.bf16.mxu0 0
    %500 = vmatpush1.bf16.msra.mxu0 %v403
    %501 = vmatprep.subr.bf16.mxu0 0
    %502 = vmatpush1.bf16.msra.mxu0 %v406
    %503 = vmatprep.subr.bf16.mxu0 0
    %504 = vmatpush1.bf16.msra.mxu0 %v409
    %505 = vmatprep.subr.bf16.mxu0 0
    %506 = vmatpush1.bf16.msra.mxu0 %v412
    %507 = vmatprep.subr.bf16.mxu0 0
    %508 = vmatpush1.bf16.msra.mxu0 %v415
    %509 = vmatprep.subr.bf16.mxu0 0
    %510 = vmatpush1.bf16.msra.mxu0 0
    %511 = vmatprep.subr.bf16.mxu0 0
    %512 = vmatpush1.bf16.msra.mxu0 0
    %513 = vmatprep.subr.bf16.mxu0 0
    %514 = vmatpush1.bf16.msra.mxu0 0
    %515 = vmatprep.subr.bf16.mxu0 0
    %516 = vmatpush1.bf16.msra.mxu0 0
    %517 = vmatprep.subr.bf16.mxu0 0
    %518 = vmatpush1.bf16.msra.mxu0 0
    %519 = vmatprep.subr.bf16.mxu0 0
    %520 = vmatpush1.bf16.msra.mxu0 0
    %521 = vmatprep.subr.bf16.mxu0 0
    %522 = vmatpush1.bf16.msra.mxu0 0
    %523 = vmatprep.subr.bf16.mxu0 0
    %524 = vmatpush1.bf16.msra.mxu0 0
    %525 = vmatprep.mubr.bf16.mxu0 0
    %526 = vmatmul.mubr.bf16.gmra.mrb[0].mxu0 %v278
    %v527 = vpop.f32.mrb[0].mxu0
    %v528 = vadd.f32 0.0, %v527
    %v529 = vpop.f32.mrb[0].mxu0
    %v530 = vpop.f32.mrb[0].mxu0
    %v531 = vadd.f32 0.0, %v530
    %v532 = vpop.f32.mrb[0].mxu0
    %533 = vmatprep.mubr.bf16.mxu0 0
    %534 = vmatmul.mubr.bf16.gmra.mrb[0].mxu0 %v279
    %v535 = vpop.f32.mrb[0].mxu0
    %v536 = vadd.f32 0.0, %v535
    %v537 = vpop.f32.mrb[0].mxu0
    %v538 = vpop.f32.mrb[0].mxu0
    %v539 = vadd.f32 0.0, %v538
    %v540 = vpop.f32.mrb[0].mxu0
    %541 = vdwg.mxu0
    %v542 = vpack.c.bf16 %v479, %v475
    %v543 = vpack.c.bf16 %v489, %v485
    %v544 = vpack.c.bf16 %v481, %v477
    %v545 = vpack.c.bf16 %v491, %v487
    %v546 = vpack.c.bf16 %v531, %v528
    %v547 = vpack.c.bf16 %v539, %v536
    %vm548 = vcmask 261120
    %v550 = vsel %vm548, %v542, 0
    %v553 = vsel %vm548, %v544, 0
    %555 = vmatprep.subr.bf16.mxu0 0
    %556 = vmatpush1.bf16.xpose.msra.mxu0 %v553
    %557 = vmatprep.subr.bf16.mxu0 0
    %558 = vmatpush1.bf16.xpose.msra.mxu0 0
    %559 = vmatprep.subr.bf16.mxu0 0
    %560 = vmatpush1.bf16.xpose.msra.mxu0 0
    %561 = vmatprep.subr.bf16.mxu0 0
    %562 = vmatpush1.bf16.xpose.msra.mxu0 0
    %563 = vmatprep.subr.bf16.mxu0 0
    %564 = vmatpush1.bf16.xpose.msra.mxu0 0
    %565 = vmatprep.subr.bf16.mxu0 0
    %566 = vmatpush1.bf16.xpose.msra.mxu0 0
    %567 = vmatprep.subr.bf16.mxu0 0
    %568 = vmatpush1.bf16.xpose.msra.mxu0 0
    %569 = vmatprep.subr.bf16.mxu0 0
    %570 = vmatpush1.bf16.xpose.msra.mxu0 0
    %571 = vmatprep.subr.bf16.mxu0 0
    %572 = vmatpush1.bf16.xpose.msra.mxu0 0
    %573 = vmatprep.subr.bf16.mxu0 0
    %574 = vmatpush1.bf16.xpose.msra.mxu0 0
    %575 = vmatprep.subr.bf16.mxu0 0
    %576 = vmatpush1.bf16.xpose.msra.mxu0 0
    %577 = vmatprep.subr.bf16.mxu0 0
    %578 = vmatpush1.bf16.xpose.msra.mxu0 0
    %579 = vmatprep.subr.bf16.mxu0 0
    %580 = vmatpush1.bf16.xpose.msra.mxu0 0
    %581 = vmatprep.subr.bf16.mxu0 0
    %582 = vmatpush1.bf16.xpose.msra.mxu0 0
    %583 = vmatprep.subr.bf16.mxu0 0
    %584 = vmatpush1.bf16.xpose.msra.mxu0 0
    %585 = vmatprep.subr.bf16.mxu0 0
    %586 = vmatpush1.bf16.xpose.msra.mxu0 0
    %587 = vmatprep.mubr.bf16.mxu0 0
    %588 = vmatmul.mubr.bf16.gmra.mrb[0].mxu0 %v550
    %v589 = vpop.f32.mrb[0].mxu0
    %v590 = vadd.f32 %v209, %v589
    %v591 = vpop.f32.mrb[0].mxu0
    %v592 = vpop.f32.mrb[0].mxu0
    %v593 = vadd.f32 %v210, %v592
    %v594 = vpop.f32.mrb[0].mxu0
    %595 = vdwg.mxu0
    %v596 = vmul.f32 %v590, 1.442695
    %v597 = vpow.pop %v596
    %v598 = vmul.f32 %v593, 1.442695
    %v599 = vpow.pop %v598
    %vm600 = vcmask 130048
    %v601 = vsel %vm600, %v597, 0.0
    %602 = vadd.xlane.f32.xlu0 %v601
    %v603 = vpop.xlane.xlu0 %602
    %v604 = vsel %vm600, %v599, 0.0
    %605 = vadd.xlane.f32.xlu0 %v604
    %v606 = vpop.xlane.xlu0 %605
    %v607 = vrcp.pop %v603
    %v608 = vrcp.pop %v606
    %v609 = vmul.f32 %v597, %v607
    %v610 = vmul.f32 %v599, %v608
    %v611 = vpack.c.bf16 %v610, %v609
    %v613 = vsel %vm600, %v611, 0
    %615 = vmatprep.subr.bf16.mxu0 0
    %616 = vmatpush1.bf16.msra.mxu0 %v546
    %617 = vmatprep.subr.bf16.mxu0 0
    %618 = vmatpush1.bf16.msra.mxu0 0
    %619 = vmatprep.subr.bf16.mxu0 0
    %620 = vmatpush1.bf16.msra.mxu0 0
    %621 = vmatprep.subr.bf16.mxu0 0
    %622 = vmatpush1.bf16.msra.mxu0 0
    %623 = vmatprep.subr.bf16.mxu0 0
    %624 = vmatpush1.bf16.msra.mxu0 0
    %625 = vmatprep.subr.bf16.mxu0 0
    %626 = vmatpush1.bf16.msra.mxu0 0
    %627 = vmatprep.subr.bf16.mxu0 0
    %628 = vmatpush1.bf16.msra.mxu0 0
    %629 = vmatprep.subr.bf16.mxu0 0
    %630 = vmatpush1.bf16.msra.mxu0 0
    %631 = vmatprep.subr.bf16.mxu0 0
    %632 = vmatpush1.bf16.msra.mxu0 0
    %633 = vmatprep.subr.bf16.mxu0 0
    %634 = vmatpush1.bf16.msra.mxu0 0
    %635 = vmatprep.subr.bf16.mxu0 0
    %636 = vmatpush1.bf16.msra.mxu0 0
    %637 = vmatprep.subr.bf16.mxu0 0
    %638 = vmatpush1.bf16.msra.mxu0 0
    %639 = vmatprep.subr.bf16.mxu0 0
    %640 = vmatpush1.bf16.msra.mxu0 0
    %641 = vmatprep.subr.bf16.mxu0 0
    %642 = vmatpush1.bf16.msra.mxu0 0
    %643 = vmatprep.subr.bf16.mxu0 0
    %644 = vmatpush1.bf16.msra.mxu0 0
    %645 = vmatprep.subr.bf16.mxu0 0
    %646 = vmatpush1.bf16.msra.mxu0 0
    %647 = vmatprep.mubr.bf16.mxu0 0
    %648 = vmatmul.mubr.bf16.gmra.mrb[0].mxu0 %v613
    %v649 = vpop.f32.mrb[0].mxu0
    %v650 = vadd.f32 0.0, %v649
    %v651 = vpop.f32.mrb[0].mxu0
    %v652 = vpop.f32.mrb[0].mxu0
    %v653 = vadd.f32 0.0, %v652
    %v654 = vpop.f32.mrb[0].mxu0
    %655 = vdwg.mxu0
    %657 = vrot.lane.b32.xlu0 %v542, 96
    %v658 = vpop.permute.xlu0 %657
    %660 = vrot.lane.b32.xlu0 %v544, 96
    %v661 = vpop.permute.xlu0 %660
    %v663 = vsel %vm548, %v658, 0
    %v666 = vsel %vm548, %v661, 0
    %668 = vmatprep.subr.bf16.mxu0 0
    %669 = vmatpush1.bf16.xpose.msra.mxu0 %v666
    %670 = vmatprep.subr.bf16.mxu0 0
    %671 = vmatpush1.bf16.xpose.msra.mxu0 0
    %672 = vmatprep.subr.bf16.mxu0 0
    %673 = vmatpush1.bf16.xpose.msra.mxu0 0
    %674 = vmatprep.subr.bf16.mxu0 0
    %675 = vmatpush1.bf16.xpose.msra.mxu0 0
    %676 = vmatprep.subr.bf16.mxu0 0
    %677 = vmatpush1.bf16.xpose.msra.mxu0 0
    %678 = vmatprep.subr.bf16.mxu0 0
    %679 = vmatpush1.bf16.xpose.msra.mxu0 0
    %680 = vmatprep.subr.bf16.mxu0 0
    %681 = vmatpush1.bf16.xpose.msra.mxu0 0
    %682 = vmatprep.subr.bf16.mxu0 0
    %683 = vmatpush1.bf16.xpose.msra.mxu0 0
    %684 = vmatprep.subr.bf16.mxu0 0
    %685 = vmatpush1.bf16.xpose.msra.mxu0 0
    %686 = vmatprep.subr.bf16.mxu0 0
    %687 = vmatpush1.bf16.xpose.msra.mxu0 0
    %688 = vmatprep.subr.bf16.mxu0 0
    %689 = vmatpush1.bf16.xpose.msra.mxu0 0
    %690 = vmatprep.subr.bf16.mxu0 0
    %691 = vmatpush1.bf16.xpose.msra.mxu0 0
    %692 = vmatprep.subr.bf16.mxu0 0
    %693 = vmatpush1.bf16.xpose.msra.mxu0 0
    %694 = vmatprep.subr.bf16.mxu0 0
    %695 = vmatpush1.bf16.xpose.msra.mxu0 0
    %696 = vmatprep.subr.bf16.mxu0 0
    %697 = vmatpush1.bf16.xpose.msra.mxu0 0
    %698 = vmatprep.subr.bf16.mxu0 0
    %699 = vmatpush1.bf16.xpose.msra.mxu0 0
    %700 = vmatprep.mubr.bf16.mxu0 0
    %701 = vmatmul.mubr.bf16.gmra.mrb[0].mxu0 %v663
    %v702 = vpop.f32.mrb[0].mxu0
    %v703 = vadd.f32 %v209, %v702
    %v704 = vpop.f32.mrb[0].mxu0
    %v705 = vpop.f32.mrb[0].mxu0
    %v706 = vadd.f32 %v210, %v705
    %v707 = vpop.f32.mrb[0].mxu0
    %708 = vdwg.mxu0
    %v709 = vmul.f32 %v703, 1.442695
    %v710 = vpow.pop %v709
    %v711 = vmul.f32 %v706, 1.442695
    %v712 = vpow.pop %v711
    %v713 = vsel %vm600, %v710, 0.0
    %714 = vadd.xlane.f32.xlu0 %v713
    %v715 = vpop.xlane.xlu0 %714
    %v716 = vsel %vm600, %v712, 0.0
    %717 = vadd.xlane.f32.xlu0 %v716
    %v718 = vpop.xlane.xlu0 %717
    %v719 = vrcp.pop %v715
    %v720 = vrcp.pop %v718
    %v721 = vmul.f32 %v710, %v719
    %v722 = vmul.f32 %v712, %v720
    %v723 = vpack.c.bf16 %v722, %v721
    %725 = vrot.lane.b32.xlu0 %v546, 96
    %v726 = vpop.permute.xlu0 %725
    %v729 = vsel %vm600, %v723, 0
    %731 = vmatprep.subr.bf16.mxu0 0
    %732 = vmatpush1.bf16.msra.mxu0 %v726
    %733 = vmatprep.subr.bf16.mxu0 0
    %734 = vmatpush1.bf16.msra.mxu0 0
    %735 = vmatprep.subr.bf16.mxu0 0
    %736 = vmatpush1.bf16.msra.mxu0 0
    %737 = vmatprep.subr.bf16.mxu0 0
    %738 = vmatpush1.bf16.msra.mxu0 0
    %739 = vmatprep.subr.bf16.mxu0 0
    %740 = vmatpush1.bf16.msra.mxu0 0
    %741 = vmatprep.subr.bf16.mxu0 0
    %742 = vmatpush1.bf16.msra.mxu0 0
    %743 = vmatprep.subr.bf16.mxu0 0
    %744 = vmatpush1.bf16.msra.mxu0 0
    %745 = vmatprep.subr.bf16.mxu0 0
    %746 = vmatpush1.bf16.msra.mxu0 0
    %747 = vmatprep.subr.bf16.mxu0 0
    %748 = vmatpush1.bf16.msra.mxu0 0
    %749 = vmatprep.subr.bf16.mxu0 0
    %750 = vmatpush1.bf16.msra.mxu0 0
    %751 = vmatprep.subr.bf16.mxu0 0
    %752 = vmatpush1.bf16.msra.mxu0 0
    %753 = vmatprep.subr.bf16.mxu0 0
    %754 = vmatpush1.bf16.msra.mxu0 0
    %755 = vmatprep.subr.bf16.mxu0 0
    %756 = vmatpush1.bf16.msra.mxu0 0
    %757 = vmatprep.subr.bf16.mxu0 0
    %758 = vmatpush1.bf16.msra.mxu0 0
    %759 = vmatprep.subr.bf16.mxu0 0
    %760 = vmatpush1.bf16.msra.mxu0 0
    %761 = vmatprep.subr.bf16.mxu0 0
    %762 = vmatpush1.bf16.msra.mxu0 0
    %763 = vmatprep.mubr.bf16.mxu0 0
    %764 = vmatmul.mubr.bf16.gmra.mrb[0].mxu0 %v729
    %v765 = vpop.f32.mrb[0].mxu0
    %v766 = vadd.f32 0.0, %v765
    %v767 = vpop.f32.mrb[0].mxu0
    %v768 = vpop.f32.mrb[0].mxu0
    %v769 = vadd.f32 0.0, %v768
    %v770 = vpop.f32.mrb[0].mxu0
    %771 = vdwg.mxu0
    %772 = vrot.lane.b32.xlu0 %v542, 64
    %v773 = vpop.permute.xlu0 %772
    %774 = vrot.lane.b32.xlu0 %v544, 64
    %v775 = vpop.permute.xlu0 %774
    %v777 = vsel %vm548, %v773, 0
    %v780 = vsel %vm548, %v775, 0
    %782 = vmatprep.subr.bf16.mxu0 0
    %783 = vmatpush1.bf16.xpose.msra.mxu0 %v780
    %784 = vmatprep.subr.bf16.mxu0 0
    %785 = vmatpush1.bf16.xpose.msra.mxu0 0
    %786 = vmatprep.subr.bf16.mxu0 0
    %787 = vmatpush1.bf16.xpose.msra.mxu0 0
    %788 = vmatprep.subr.bf16.mxu0 0
    %789 = vmatpush1.bf16.xpose.msra.mxu0 0
    %790 = vmatprep.subr.bf16.mxu0 0
    %791 = vmatpush1.bf16.xpose.msra.mxu0 0
    %792 = vmatprep.subr.bf16.mxu0 0
    %793 = vmatpush1.bf16.xpose.msra.mxu0 0
    %794 = vmatprep.subr.bf16.mxu0 0
    %795 = vmatpush1.bf16.xpose.msra.mxu0 0
    %796 = vmatprep.subr.bf16.mxu0 0
    %797 = vmatpush1.bf16.xpose.msra.mxu0 0
    %798 = vmatprep.subr.bf16.mxu0 0
    %799 = vmatpush1.bf16.xpose.msra.mxu0 0
    %800 = vmatprep.subr.bf16.mxu0 0
    %801 = vmatpush1.bf16.xpose.msra.mxu0 0
    %802 = vmatprep.subr.bf16.mxu0 0
    %803 = vmatpush1.bf16.xpose.msra.mxu0 0
    %804 = vmatprep.subr.bf16.mxu0 0
    %805 = vmatpush1.bf16.xpose.msra.mxu0 0
    %806 = vmatprep.subr.bf16.mxu0 0
    %807 = vmatpush1.bf16.xpose.msra.mxu0 0
    %808 = vmatprep.subr.bf16.mxu0 0
    %809 = vmatpush1.bf16.xpose.msra.mxu0 0
    %810 = vmatprep.subr.bf16.mxu0 0
    %811 = vmatpush1.bf16.xpose.msra.mxu0 0
    %812 = vmatprep.subr.bf16.mxu0 0
    %813 = vmatpush1.bf16.xpose.msra.mxu0 0
    %814 = vmatprep.mubr.bf16.mxu0 0
    %815 = vmatmul.mubr.bf16.gmra.mrb[0].mxu0 %v777
    %v816 = vpop.f32.mrb[0].mxu0
    %v817 = vadd.f32 %v209, %v816
    %v818 = vpop.f32.mrb[0].mxu0
    %v819 = vpop.f32.mrb[0].mxu0
    %v820 = vadd.f32 %v210, %v819
    %v821 = vpop.f32.mrb[0].mxu0
    %822 = vdwg.mxu0
    %v823 = vmul.f32 %v817, 1.442695
    %v824 = vpow.pop %v823
    %v825 = vmul.f32 %v820, 1.442695
    %v826 = vpow.pop %v825
    %v827 = vsel %vm600, %v824, 0.0
    %828 = vadd.xlane.f32.xlu0 %v827
    %v829 = vpop.xlane.xlu0 %828
    %v830 = vsel %vm600, %v826, 0.0
    %831 = vadd.xlane.f32.xlu0 %v830
    %v832 = vpop.xlane.xlu0 %831
    %v833 = vrcp.pop %v829
    %v834 = vrcp.pop %v832
    %v835 = vmul.f32 %v824, %v833
    %v836 = vmul.f32 %v826, %v834
    %v837 = vpack.c.bf16 %v836, %v835
    %838 = vrot.lane.b32.xlu0 %v546, 64
    %v839 = vpop.permute.xlu0 %838
    %v842 = vsel %vm600, %v837, 0
    %844 = vmatprep.subr.bf16.mxu0 0
    %845 = vmatpush1.bf16.msra.mxu0 %v839
    %846 = vmatprep.subr.bf16.mxu0 0
    %847 = vmatpush1.bf16.msra.mxu0 0
    %848 = vmatprep.subr.bf16.mxu0 0
    %849 = vmatpush1.bf16.msra.mxu0 0
    %850 = vmatprep.subr.bf16.mxu0 0
    %851 = vmatpush1.bf16.msra.mxu0 0
    %852 = vmatprep.subr.bf16.mxu0 0
    %853 = vmatpush1.bf16.msra.mxu0 0
    %854 = vmatprep.subr.bf16.mxu0 0
    %855 = vmatpush1.bf16.msra.mxu0 0
    %856 = vmatprep.subr.bf16.mxu0 0
    %857 = vmatpush1.bf16.msra.mxu0 0
    %858 = vmatprep.subr.bf16.mxu0 0
    %859 = vmatpush1.bf16.msra.mxu0 0
    %860 = vmatprep.subr.bf16.mxu0 0
    %861 = vmatpush1.bf16.msra.mxu0 0
    %862 = vmatprep.subr.bf16.mxu0 0
    %863 = vmatpush1.bf16.msra.mxu0 0
    %864 = vmatprep.subr.bf16.mxu0 0
    %865 = vmatpush1.bf16.msra.mxu0 0
    %866 = vmatprep.subr.bf16.mxu0 0
    %867 = vmatpush1.bf16.msra.mxu0 0
    %868 = vmatprep.subr.bf16.mxu0 0
    %869 = vmatpush1.bf16.msra.mxu0 0
    %870 = vmatprep.subr.bf16.mxu0 0
    %871 = vmatpush1.bf16.msra.mxu0 0
    %872 = vmatprep.subr.bf16.mxu0 0
    %873 = vmatpush1.bf16.msra.mxu0 0
    %874 = vmatprep.subr.bf16.mxu0 0
    %875 = vmatpush1.bf16.msra.mxu0 0
    %876 = vmatprep.mubr.bf16.mxu0 0
    %877 = vmatmul.mubr.bf16.gmra.mrb[0].mxu0 %v842
    %v878 = vpop.f32.mrb[0].mxu0
    %v879 = vadd.f32 0.0, %v878
    %v880 = vpop.f32.mrb[0].mxu0
    %v881 = vpop.f32.mrb[0].mxu0
    %v882 = vadd.f32 0.0, %v881
    %v883 = vpop.f32.mrb[0].mxu0
    %884 = vdwg.mxu0
    %885 = vrot.lane.b32.xlu0 %v542, 32
    %v886 = vpop.permute.xlu0 %885
    %887 = vrot.lane.b32.xlu0 %v544, 32
    %v888 = vpop.permute.xlu0 %887
    %v890 = vsel %vm548, %v886, 0
    %v893 = vsel %vm548, %v888, 0
    %895 = vmatprep.subr.bf16.mxu0 0
    %896 = vmatpush1.bf16.xpose.msra.mxu0 %v893
    %897 = vmatprep.subr.bf16.mxu0 0
    %898 = vmatpush1.bf16.xpose.msra.mxu0 0
    %899 = vmatprep.subr.bf16.mxu0 0
    %900 = vmatpush1.bf16.xpose.msra.mxu0 0
    %901 = vmatprep.subr.bf16.mxu0 0
    %902 = vmatpush1.bf16.xpose.msra.mxu0 0
    %903 = vmatprep.subr.bf16.mxu0 0
    %904 = vmatpush1.bf16.xpose.msra.mxu0 0
    %905 = vmatprep.subr.bf16.mxu0 0
    %906 = vmatpush1.bf16.xpose.msra.mxu0 0
    %907 = vmatprep.subr.bf16.mxu0 0
    %908 = vmatpush1.bf16.xpose.msra.mxu0 0
    %909 = vmatprep.subr.bf16.mxu0 0
    %910 = vmatpush1.bf16.xpose.msra.mxu0 0
    %911 = vmatprep.subr.bf16.mxu0 0
    %912 = vmatpush1.bf16.xpose.msra.mxu0 0
    %913 = vmatprep.subr.bf16.mxu0 0
    %914 = vmatpush1.bf16.xpose.msra.mxu0 0
    %915 = vmatprep.subr.bf16.mxu0 0
    %916 = vmatpush1.bf16.xpose.msra.mxu0 0
    %917 = vmatprep.subr.bf16.mxu0 0
    %918 = vmatpush1.bf16.xpose.msra.mxu0 0
    %919 = vmatprep.subr.bf16.mxu0 0
    %920 = vmatpush1.bf16.xpose.msra.mxu0 0
    %921 = vmatprep.subr.bf16.mxu0 0
    %922 = vmatpush1.bf16.xpose.msra.mxu0 0
    %923 = vmatprep.subr.bf16.mxu0 0
    %924 = vmatpush1.bf16.xpose.msra.mxu0 0
    %925 = vmatprep.subr.bf16.mxu0 0
    %926 = vmatpush1.bf16.xpose.msra.mxu0 0
    %927 = vmatprep.mubr.bf16.mxu0 0
    %928 = vmatmul.mubr.bf16.gmra.mrb[0].mxu0 %v890
    %v929 = vpop.f32.mrb[0].mxu0
    %v930 = vadd.f32 %v209, %v929
    %v931 = vpop.f32.mrb[0].mxu0
    %v932 = vpop.f32.mrb[0].mxu0
    %v933 = vadd.f32 %v210, %v932
    %v934 = vpop.f32.mrb[0].mxu0
    %935 = vdwg.mxu0
    %v936 = vmul.f32 %v930, 1.442695
    %v937 = vpow.pop %v936
    %v938 = vmul.f32 %v933, 1.442695
    %v939 = vpow.pop %v938
    %v940 = vsel %vm600, %v937, 0.0
    %941 = vadd.xlane.f32.xlu0 %v940
    %v942 = vpop.xlane.xlu0 %941
    %v943 = vsel %vm600, %v939, 0.0
    %944 = vadd.xlane.f32.xlu0 %v943
    %v945 = vpop.xlane.xlu0 %944
    %v946 = vrcp.pop %v942
    %v947 = vrcp.pop %v945
    %v948 = vmul.f32 %v937, %v946
    %v949 = vmul.f32 %v939, %v947
    %v950 = vpack.c.bf16 %v949, %v948
    %951 = vrot.lane.b32.xlu0 %v546, 32
    %v952 = vpop.permute.xlu0 %951
    %v955 = vsel %vm600, %v950, 0
    %957 = vmatprep.subr.bf16.mxu0 0
    %958 = vmatpush1.bf16.msra.mxu0 %v952
    %959 = vmatprep.subr.bf16.mxu0 0
    %960 = vmatpush1.bf16.msra.mxu0 0
    %961 = vmatprep.subr.bf16.mxu0 0
    %962 = vmatpush1.bf16.msra.mxu0 0
    %963 = vmatprep.subr.bf16.mxu0 0
    %964 = vmatpush1.bf16.msra.mxu0 0
    %965 = vmatprep.subr.bf16.mxu0 0
    %966 = vmatpush1.bf16.msra.mxu0 0
    %967 = vmatprep.subr.bf16.mxu0 0
    %968 = vmatpush1.bf16.msra.mxu0 0
    %969 = vmatprep.subr.bf16.mxu0 0
    %970 = vmatpush1.bf16.msra.mxu0 0
    %971 = vmatprep.subr.bf16.mxu0 0
    %972 = vmatpush1.bf16.msra.mxu0 0
    %973 = vmatprep.subr.bf16.mxu0 0
    %974 = vmatpush1.bf16.msra.mxu0 0
    %975 = vmatprep.subr.bf16.mxu0 0
    %976 = vmatpush1.bf16.msra.mxu0 0
    %977 = vmatprep.subr.bf16.mxu0 0
    %978 = vmatpush1.bf16.msra.mxu0 0
    %979 = vmatprep.subr.bf16.mxu0 0
    %980 = vmatpush1.bf16.msra.mxu0 0
    %981 = vmatprep.subr.bf16.mxu0 0
    %982 = vmatpush1.bf16.msra.mxu0 0
    %983 = vmatprep.subr.bf16.mxu0 0
    %984 = vmatpush1.bf16.msra.mxu0 0
    %985 = vmatprep.subr.bf16.mxu0 0
    %986 = vmatpush1.bf16.msra.mxu0 0
    %987 = vmatprep.subr.bf16.mxu0 0
    %988 = vmatpush1.bf16.msra.mxu0 0
    %989 = vmatprep.mubr.bf16.mxu0 0
    %990 = vmatmul.mubr.bf16.gmra.mrb[0].mxu0 %v955
    %v991 = vpop.f32.mrb[0].mxu0
    %v992 = vadd.f32 0.0, %v991
    %v993 = vpop.f32.mrb[0].mxu0
    %v994 = vpop.f32.mrb[0].mxu0
    %v995 = vadd.f32 0.0, %v994
    %v996 = vpop.f32.mrb[0].mxu0
    %997 = vdwg.mxu0
    %1000 = vrot.lane.b32.xlu0 %v766, 32
    %v1001 = vpop.permute.xlu0 %1000
    %1002 = vrot.lane.b32.xlu0 %v769, 32
    %v1003 = vpop.permute.xlu0 %1002
    %1008 = vrot.lane.b32.xlu0 %v879, 64
    %v1009 = vpop.permute.xlu0 %1008
    %1010 = vrot.lane.b32.xlu0 %v882, 64
    %v1011 = vpop.permute.xlu0 %1010
    %1016 = vrot.lane.b32.xlu0 %v992, 96
    %v1017 = vpop.permute.xlu0 %1016
    %1018 = vrot.lane.b32.xlu0 %v995, 96
    %v1019 = vpop.permute.xlu0 %1018
    %v1022 = vsel %vm548, %v650, %v1001
    %v1023 = vsel %vm548, %v653, %v1003
    %vm1024 = vcmask 523264
    %v1025 = vsel %vm1024, %v1022, %v1009
    %v1026 = vsel %vm1024, %v1023, %v1011
    %vm1027 = vcmask 785408
    %v1028 = vsel %vm1027, %v1025, %v1017
    %v1029 = vsel %vm1027, %v1026, %v1019
    %v1031 = vsel %vm548, %v543, 0
    %v1034 = vsel %vm548, %v545, 0
    %1036 = vmatprep.subr.bf16.mxu0 0
    %1037 = vmatpush1.bf16.xpose.msra.mxu0 %v1034
    %1038 = vmatprep.subr.bf16.mxu0 0
    %1039 = vmatpush1.bf16.xpose.msra.mxu0 0
    %1040 = vmatprep.subr.bf16.mxu0 0
    %1041 = vmatpush1.bf16.xpose.msra.mxu0 0
    %1042 = vmatprep.subr.bf16.mxu0 0
    %1043 = vmatpush1.bf16.xpose.msra.mxu0 0
    %1044 = vmatprep.subr.bf16.mxu0 0
    %1045 = vmatpush1.bf16.xpose.msra.mxu0 0
    %1046 = vmatprep.subr.bf16.mxu0 0
    %1047 = vmatpush1.bf16.xpose.msra.mxu0 0
    %1048 = vmatprep.subr.bf16.mxu0 0
    %1049 = vmatpush1.bf16.xpose.msra.mxu0 0
    %1050 = vmatprep.subr.bf16.mxu0 0
    %1051 = vmatpush1.bf16.xpose.msra.mxu0 0
    %1052 = vmatprep.subr.bf16.mxu0 0
    %1053 = vmatpush1.bf16.xpose.msra.mxu0 0
    %1054 = vmatprep.subr.bf16.mxu0 0
    %1055 = vmatpush1.bf16.xpose.msra.mxu0 0
    %1056 = vmatprep.subr.bf16.mxu0 0
    %1057 = vmatpush1.bf16.xpose.msra.mxu0 0
    %1058 = vmatprep.subr.bf16.mxu0 0
    %1059 = vmatpush1.bf16.xpose.msra.mxu0 0
    %1060 = vmatprep.subr.bf16.mxu0 0
    %1061 = vmatpush1.bf16.xpose.msra.mxu0 0
    %1062 = vmatprep.subr.bf16.mxu0 0
    %1063 = vmatpush1.bf16.xpose.msra.mxu0 0
    %1064 = vmatprep.subr.bf16.mxu0 0
    %1065 = vmatpush1.bf16.xpose.msra.mxu0 0
    %1066 = vmatprep.subr.bf16.mxu0 0
    %1067 = vmatpush1.bf16.xpose.msra.mxu0 0
    %1068 = vmatprep.mubr.bf16.mxu0 0
    %1069 = vmatmul.mubr.bf16.gmra.mrb[0].mxu0 %v1031
    %v1070 = vpop.f32.mrb[0].mxu0
    %v1071 = vadd.f32 %v209, %v1070
    %v1072 = vpop.f32.mrb[0].mxu0
    %v1073 = vpop.f32.mrb[0].mxu0
    %v1074 = vadd.f32 %v210, %v1073
    %v1075 = vpop.f32.mrb[0].mxu0
    %1076 = vdwg.mxu0
    %v1077 = vmul.f32 %v1071, 1.442695
    %v1078 = vpow.pop %v1077
    %v1079 = vmul.f32 %v1074, 1.442695
    %v1080 = vpow.pop %v1079
    %v1081 = vsel %vm600, %v1078, 0.0
    %1082 = vadd.xlane.f32.xlu0 %v1081
    %v1083 = vpop.xlane.xlu0 %1082
    %v1084 = vsel %vm600, %v1080, 0.0
    %1085 = vadd.xlane.f32.xlu0 %v1084
    %v1086 = vpop.xlane.xlu0 %1085
    %v1087 = vrcp.pop %v1083
    %v1088 = vrcp.pop %v1086
    %v1089 = vmul.f32 %v1078, %v1087
    %v1090 = vmul.f32 %v1080, %v1088
    %v1091 = vpack.c.bf16 %v1090, %v1089
    %v1093 = vsel %vm600, %v1091, 0
    %1095 = vmatprep.subr.bf16.mxu0 0
    %1096 = vmatpush1.bf16.msra.mxu0 %v547
    %1097 = vmatprep.subr.bf16.mxu0 0
    %1098 = vmatpush1.bf16.msra.mxu0 0
    %1099 = vmatprep.subr.bf16.mxu0 0
    %1100 = vmatpush1.bf16.msra.mxu0 0
    %1101 = vmatprep.subr.bf16.mxu0 0
    %1102 = vmatpush1.bf16.msra.mxu0 0
    %1103 = vmatprep.subr.bf16.mxu0 0
    %1104 = vmatpush1.bf16.msra.mxu0 0
    %1105 = vmatprep.subr.bf16.mxu0 0
    %1106 = vmatpush1.bf16.msra.mxu0 0
    %1107 = vmatprep.subr.bf16.mxu0 0
    %1108 = vmatpush1.bf16.msra.mxu0 0
    %1109 = vmatprep.subr.bf16.mxu0 0
    %1110 = vmatpush1.bf16.msra.mxu0 0
    %1111 = vmatprep.subr.bf16.mxu0 0
    %1112 = vmatpush1.bf16.msra.mxu0 0
    %1113 = vmatprep.subr.bf16.mxu0 0
    %1114 = vmatpush1.bf16.msra.mxu0 0
    %1115 = vmatprep.subr.bf16.mxu0 0
    %1116 = vmatpush1.bf16.msra.mxu0 0
    %1117 = vmatprep.subr.bf16.mxu0 0
    %1118 = vmatpush1.bf16.msra.mxu0 0
    %1119 = vmatprep.subr.bf16.mxu0 0
    %1120 = vmatpush1.bf16.msra.mxu0 0
    %1121 = vmatprep.subr.bf16.mxu0 0
    %1122 = vmatpush1.bf16.msra.mxu0 0
    %1123 = vmatprep.subr.bf16.mxu0 0
    %1124 = vmatpush1.bf16.msra.mxu0 0
    %1125 = vmatprep.subr.bf16.mxu0 0
    %1126 = vmatpush1.bf16.msra.mxu0 0
    %1127 = vmatprep.mubr.bf16.mxu0 0
    %1128 = vmatmul.mubr.bf16.gmra.mrb[0].mxu0 %v1093
    %v1129 = vpop.f32.mrb[0].mxu0
    %v1130 = vadd.f32 0.0, %v1129
    %v1131 = vpop.f32.mrb[0].mxu0
    %v1132 = vpop.f32.mrb[0].mxu0
    %v1133 = vadd.f32 0.0, %v1132
    %v1134 = vpop.f32.mrb[0].mxu0
    %1135 = vdwg.mxu0
    %1137 = vrot.lane.b32.xlu0 %v543, 96
    %v1138 = vpop.permute.xlu0 %1137
    %1140 = vrot.lane.b32.xlu0 %v545, 96
    %v1141 = vpop.permute.xlu0 %1140
    %v1143 = vsel %vm548, %v1138, 0
    %v1146 = vsel %vm548, %v1141, 0
    %1148 = vmatprep.subr.bf16.mxu0 0
    %1149 = vmatpush1.bf16.xpose.msra.mxu0 %v1146
    %1150 = vmatprep.subr.bf16.mxu0 0
    %1151 = vmatpush1.bf16.xpose.msra.mxu0 0
    %1152 = vmatprep.subr.bf16.mxu0 0
    %1153 = vmatpush1.bf16.xpose.msra.mxu0 0
    %1154 = vmatprep.subr.bf16.mxu0 0
    %1155 = vmatpush1.bf16.xpose.msra.mxu0 0
    %1156 = vmatprep.subr.bf16.mxu0 0
    %1157 = vmatpush1.bf16.xpose.msra.mxu0 0
    %1158 = vmatprep.subr.bf16.mxu0 0
    %1159 = vmatpush1.bf16.xpose.msra.mxu0 0
    %1160 = vmatprep.subr.bf16.mxu0 0
    %1161 = vmatpush1.bf16.xpose.msra.mxu0 0
    %1162 = vmatprep.subr.bf16.mxu0 0
    %1163 = vmatpush1.bf16.xpose.msra.mxu0 0
    %1164 = vmatprep.subr.bf16.mxu0 0
    %1165 = vmatpush1.bf16.xpose.msra.mxu0 0
    %1166 = vmatprep.subr.bf16.mxu0 0
    %1167 = vmatpush1.bf16.xpose.msra.mxu0 0
    %1168 = vmatprep.subr.bf16.mxu0 0
    %1169 = vmatpush1.bf16.xpose.msra.mxu0 0
    %1170 = vmatprep.subr.bf16.mxu0 0
    %1171 = vmatpush1.bf16.xpose.msra.mxu0 0
    %1172 = vmatprep.subr.bf16.mxu0 0
    %1173 = vmatpush1.bf16.xpose.msra.mxu0 0
    %1174 = vmatprep.subr.bf16.mxu0 0
    %1175 = vmatpush1.bf16.xpose.msra.mxu0 0
    %1176 = vmatprep.subr.bf16.mxu0 0
    %1177 = vmatpush1.bf16.xpose.msra.mxu0 0
    %1178 = vmatprep.subr.bf16.mxu0 0
    %1179 = vmatpush1.bf16.xpose.msra.mxu0 0
    %1180 = vmatprep.mubr.bf16.mxu0 0
    %1181 = vmatmul.mubr.bf16.gmra.mrb[0].mxu0 %v1143
    %v1182 = vpop.f32.mrb[0].mxu0
    %v1183 = vadd.f32 %v209, %v1182
    %v1184 = vpop.f32.mrb[0].mxu0
    %v1185 = vpop.f32.mrb[0].mxu0
    %v1186 = vadd.f32 %v210, %v1185
    %v1187 = vpop.f32.mrb[0].mxu0
    %1188 = vdwg.mxu0
    %v1189 = vmul.f32 %v1183, 1.442695
    %v1190 = vpow.pop %v1189
    %v1191 = vmul.f32 %v1186, 1.442695
    %v1192 = vpow.pop %v1191
    %v1193 = vsel %vm600, %v1190, 0.0
    %1194 = vadd.xlane.f32.xlu0 %v1193
    %v1195 = vpop.xlane.xlu0 %1194
    %v1196 = vsel %vm600, %v1192, 0.0
    %1197 = vadd.xlane.f32.xlu0 %v1196
    %v1198 = vpop.xlane.xlu0 %1197
    %v1199 = vrcp.pop %v1195
    %v1200 = vrcp.pop %v1198
    %v1201 = vmul.f32 %v1190, %v1199
    %v1202 = vmul.f32 %v1192, %v1200
    %v1203 = vpack.c.bf16 %v1202, %v1201
    %1205 = vrot.lane.b32.xlu0 %v547, 96
    %v1206 = vpop.permute.xlu0 %1205
    %v1209 = vsel %vm600, %v1203, 0
    %1211 = vmatprep.subr.bf16.mxu0 0
    %1212 = vmatpush1.bf16.msra.mxu0 %v1206
    %1213 = vmatprep.subr.bf16.mxu0 0
    %1214 = vmatpush1.bf16.msra.mxu0 0
    %1215 = vmatprep.subr.bf16.mxu0 0
    %1216 = vmatpush1.bf16.msra.mxu0 0
    %1217 = vmatprep.subr.bf16.mxu0 0
    %1218 = vmatpush1.bf16.msra.mxu0 0
    %1219 = vmatprep.subr.bf16.mxu0 0
    %1220 = vmatpush1.bf16.msra.mxu0 0
    %1221 = vmatprep.subr.bf16.mxu0 0
    %1222 = vmatpush1.bf16.msra.mxu0 0
    %1223 = vmatprep.subr.bf16.mxu0 0
    %1224 = vmatpush1.bf16.msra.mxu0 0
    %1225 = vmatprep.subr.bf16.mxu0 0
    %1226 = vmatpush1.bf16.msra.mxu0 0
    %1227 = vmatprep.subr.bf16.mxu0 0
    %1228 = vmatpush1.bf16.msra.mxu0 0
    %1229 = vmatprep.subr.bf16.mxu0 0
    %1230 = vmatpush1.bf16.msra.mxu0 0
    %1231 = vmatprep.subr.bf16.mxu0 0
    %1232 = vmatpush1.bf16.msra.mxu0 0
    %1233 = vmatprep.subr.bf16.mxu0 0
    %1234 = vmatpush1.bf16.msra.mxu0 0
    %1235 = vmatprep.subr.bf16.mxu0 0
    %1236 = vmatpush1.bf16.msra.mxu0 0
    %1237 = vmatprep.subr.bf16.mxu0 0
    %1238 = vmatpush1.bf16.msra.mxu0 0
    %1239 = vmatprep.subr.bf16.mxu0 0
    %1240 = vmatpush1.bf16.msra.mxu0 0
    %1241 = vmatprep.subr.bf16.mxu0 0
    %1242 = vmatpush1.bf16.msra.mxu0 0
    %1243 = vmatprep.mubr.bf16.mxu0 0
    %1244 = vmatmul.mubr.bf16.gmra.mrb[0].mxu0 %v1209
    %v1245 = vpop.f32.mrb[0].mxu0
    %v1246 = vadd.f32 0.0, %v1245
    %v1247 = vpop.f32.mrb[0].mxu0
    %v1248 = vpop.f32.mrb[0].mxu0
    %v1249 = vadd.f32 0.0, %v1248
    %v1250 = vpop.f32.mrb[0].mxu0
    %1251 = vdwg.mxu0
    %1252 = vrot.lane.b32.xlu0 %v543, 64
    %v1253 = vpop.permute.xlu0 %1252
    %1254 = vrot.lane.b32.xlu0 %v545, 64
    %v1255 = vpop.permute.xlu0 %1254
    %v1257 = vsel %vm548, %v1253, 0
    %v1260 = vsel %vm548, %v1255, 0
    %1262 = vmatprep.subr.bf16.mxu0 0
    %1263 = vmatpush1.bf16.xpose.msra.mxu0 %v1260
    %1264 = vmatprep.subr.bf16.mxu0 0
    %1265 = vmatpush1.bf16.xpose.msra.mxu0 0
    %1266 = vmatprep.subr.bf16.mxu0 0
    %1267 = vmatpush1.bf16.xpose.msra.mxu0 0
    %1268 = vmatprep.subr.bf16.mxu0 0
    %1269 = vmatpush1.bf16.xpose.msra.mxu0 0
    %1270 = vmatprep.subr.bf16.mxu0 0
    %1271 = vmatpush1.bf16.xpose.msra.mxu0 0
    %1272 = vmatprep.subr.bf16.mxu0 0
    %1273 = vmatpush1.bf16.xpose.msra.mxu0 0
    %1274 = vmatprep.subr.bf16.mxu0 0
    %1275 = vmatpush1.bf16.xpose.msra.mxu0 0
    %1276 = vmatprep.subr.bf16.mxu0 0
    %1277 = vmatpush1.bf16.xpose.msra.mxu0 0
    %1278 = vmatprep.subr.bf16.mxu0 0
    %1279 = vmatpush1.bf16.xpose.msra.mxu0 0
    %1280 = vmatprep.subr.bf16.mxu0 0
    %1281 = vmatpush1.bf16.xpose.msra.mxu0 0
    %1282 = vmatprep.subr.bf16.mxu0 0
    %1283 = vmatpush1.bf16.xpose.msra.mxu0 0
    %1284 = vmatprep.subr.bf16.mxu0 0
    %1285 = vmatpush1.bf16.xpose.msra.mxu0 0
    %1286 = vmatprep.subr.bf16.mxu0 0
    %1287 = vmatpush1.bf16.xpose.msra.mxu0 0
    %1288 = vmatprep.subr.bf16.mxu0 0
    %1289 = vmatpush1.bf16.xpose.msra.mxu0 0
    %1290 = vmatprep.subr.bf16.mxu0 0
    %1291 = vmatpush1.bf16.xpose.msra.mxu0 0
    %1292 = vmatprep.subr.bf16.mxu0 0
    %1293 = vmatpush1.bf16.xpose.msra.mxu0 0
    %1294 = vmatprep.mubr.bf16.mxu0 0
    %1295 = vmatmul.mubr.bf16.gmra.mrb[0].mxu0 %v1257
    %v1296 = vpop.f32.mrb[0].mxu0
    %v1297 = vadd.f32 %v209, %v1296
    %v1298 = vpop.f32.mrb[0].mxu0
    %v1299 = vpop.f32.mrb[0].mxu0
    %v1300 = vadd.f32 %v210, %v1299
    %v1301 = vpop.f32.mrb[0].mxu0
    %1302 = vdwg.mxu0
    %v1303 = vmul.f32 %v1297, 1.442695
    %v1304 = vpow.pop %v1303
    %v1305 = vmul.f32 %v1300, 1.442695
    %v1306 = vpow.pop %v1305
    %v1307 = vsel %vm600, %v1304, 0.0
    %1308 = vadd.xlane.f32.xlu0 %v1307
    %v1309 = vpop.xlane.xlu0 %1308
    %v1310 = vsel %vm600, %v1306, 0.0
    %1311 = vadd.xlane.f32.xlu0 %v1310
    %v1312 = vpop.xlane.xlu0 %1311
    %v1313 = vrcp.pop %v1309
    %v1314 = vrcp.pop %v1312
    %v1315 = vmul.f32 %v1304, %v1313
    %v1316 = vmul.f32 %v1306, %v1314
    %v1317 = vpack.c.bf16 %v1316, %v1315
    %1318 = vrot.lane.b32.xlu0 %v547, 64
    %v1319 = vpop.permute.xlu0 %1318
    %v1322 = vsel %vm600, %v1317, 0
    %1324 = vmatprep.subr.bf16.mxu0 0
    %1325 = vmatpush1.bf16.msra.mxu0 %v1319
    %1326 = vmatprep.subr.bf16.mxu0 0
    %1327 = vmatpush1.bf16.msra.mxu0 0
    %1328 = vmatprep.subr.bf16.mxu0 0
    %1329 = vmatpush1.bf16.msra.mxu0 0
    %1330 = vmatprep.subr.bf16.mxu0 0
    %1331 = vmatpush1.bf16.msra.mxu0 0
    %1332 = vmatprep.subr.bf16.mxu0 0
    %1333 = vmatpush1.bf16.msra.mxu0 0
    %1334 = vmatprep.subr.bf16.mxu0 0
    %1335 = vmatpush1.bf16.msra.mxu0 0
    %1336 = vmatprep.subr.bf16.mxu0 0
    %1337 = vmatpush1.bf16.msra.mxu0 0
    %1338 = vmatprep.subr.bf16.mxu0 0
    %1339 = vmatpush1.bf16.msra.mxu0 0
    %1340 = vmatprep.subr.bf16.mxu0 0
    %1341 = vmatpush1.bf16.msra.mxu0 0
    %1342 = vmatprep.subr.bf16.mxu0 0
    %1343 = vmatpush1.bf16.msra.mxu0 0
    %1344 = vmatprep.subr.bf16.mxu0 0
    %1345 = vmatpush1.bf16.msra.mxu0 0
    %1346 = vmatprep.subr.bf16.mxu0 0
    %1347 = vmatpush1.bf16.msra.mxu0 0
    %1348 = vmatprep.subr.bf16.mxu0 0
    %1349 = vmatpush1.bf16.msra.mxu0 0
    %1350 = vmatprep.subr.bf16.mxu0 0
    %1351 = vmatpush1.bf16.msra.mxu0 0
    %1352 = vmatprep.subr.bf16.mxu0 0
    %1353 = vmatpush1.bf16.msra.mxu0 0
    %1354 = vmatprep.subr.bf16.mxu0 0
    %1355 = vmatpush1.bf16.msra.mxu0 0
    %1356 = vmatprep.mubr.bf16.mxu0 0
    %1357 = vmatmul.mubr.bf16.gmra.mrb[0].mxu0 %v1322
    %v1358 = vpop.f32.mrb[0].mxu0
    %v1359 = vadd.f32 0.0, %v1358
    %v1360 = vpop.f32.mrb[0].mxu0
    %v1361 = vpop.f32.mrb[0].mxu0
    %v1362 = vadd.f32 0.0, %v1361
    %v1363 = vpop.f32.mrb[0].mxu0
    %1364 = vdwg.mxu0
    %1365 = vrot.lane.b32.xlu0 %v543, 32
    %v1366 = vpop.permute.xlu0 %1365
    %1367 = vrot.lane.b32.xlu0 %v545, 32
    %v1368 = vpop.permute.xlu0 %1367
    %v1370 = vsel %vm548, %v1366, 0
    %v1373 = vsel %vm548, %v1368, 0
    %1375 = vmatprep.subr.bf16.mxu0 0
    %1376 = vmatpush1.bf16.xpose.msra.mxu0 %v1373
    %1377 = vmatprep.subr.bf16.mxu0 0
    %1378 = vmatpush1.bf16.xpose.msra.mxu0 0
    %1379 = vmatprep.subr.bf16.mxu0 0
    %1380 = vmatpush1.bf16.xpose.msra.mxu0 0
    %1381 = vmatprep.subr.bf16.mxu0 0
    %1382 = vmatpush1.bf16.xpose.msra.mxu0 0
    %1383 = vmatprep.subr.bf16.mxu0 0
    %1384 = vmatpush1.bf16.xpose.msra.mxu0 0
    %1385 = vmatprep.subr.bf16.mxu0 0
    %1386 = vmatpush1.bf16.xpose.msra.mxu0 0
    %1387 = vmatprep.subr.bf16.mxu0 0
    %1388 = vmatpush1.bf16.xpose.msra.mxu0 0
    %1389 = vmatprep.subr.bf16.mxu0 0
    %1390 = vmatpush1.bf16.xpose.msra.mxu0 0
    %1391 = vmatprep.subr.bf16.mxu0 0
    %1392 = vmatpush1.bf16.xpose.msra.mxu0 0
    %1393 = vmatprep.subr.bf16.mxu0 0
    %1394 = vmatpush1.bf16.xpose.msra.mxu0 0
    %1395 = vmatprep.subr.bf16.mxu0 0
    %1396 = vmatpush1.bf16.xpose.msra.mxu0 0
    %1397 = vmatprep.subr.bf16.mxu0 0
    %1398 = vmatpush1.bf16.xpose.msra.mxu0 0
    %1399 = vmatprep.subr.bf16.mxu0 0
    %1400 = vmatpush1.bf16.xpose.msra.mxu0 0
    %1401 = vmatprep.subr.bf16.mxu0 0
    %1402 = vmatpush1.bf16.xpose.msra.mxu0 0
    %1403 = vmatprep.subr.bf16.mxu0 0
    %1404 = vmatpush1.bf16.xpose.msra.mxu0 0
    %1405 = vmatprep.subr.bf16.mxu0 0
    %1406 = vmatpush1.bf16.xpose.msra.mxu0 0
    %1407 = vmatprep.mubr.bf16.mxu0 0
    %1408 = vmatmul.mubr.bf16.gmra.mrb[0].mxu0 %v1370
    %v1409 = vpop.f32.mrb[0].mxu0
    %v1410 = vadd.f32 %v209, %v1409
    %v1411 = vpop.f32.mrb[0].mxu0
    %v1412 = vpop.f32.mrb[0].mxu0
    %v1413 = vadd.f32 %v210, %v1412
    %v1414 = vpop.f32.mrb[0].mxu0
    %1415 = vdwg.mxu0
    %v1416 = vmul.f32 %v1410, 1.442695
    %v1417 = vpow.pop %v1416
    %v1418 = vmul.f32 %v1413, 1.442695
    %v1419 = vpow.pop %v1418
    %v1420 = vsel %vm600, %v1417, 0.0
    %1421 = vadd.xlane.f32.xlu0 %v1420
    %v1422 = vpop.xlane.xlu0 %1421
    %v1423 = vsel %vm600, %v1419, 0.0
    %1424 = vadd.xlane.f32.xlu0 %v1423
    %v1425 = vpop.xlane.xlu0 %1424
    %v1426 = vrcp.pop %v1422
    %v1427 = vrcp.pop %v1425
    %v1428 = vmul.f32 %v1417, %v1426
    %v1429 = vmul.f32 %v1419, %v1427
    %v1430 = vpack.c.bf16 %v1429, %v1428
    %1431 = vrot.lane.b32.xlu0 %v547, 32
    %v1432 = vpop.permute.xlu0 %1431
    %v1435 = vsel %vm600, %v1430, 0
    %1437 = vmatprep.subr.bf16.mxu0 0
    %1438 = vmatpush1.bf16.msra.mxu0 %v1432
    %1439 = vmatprep.subr.bf16.mxu0 0
    %1440 = vmatpush1.bf16.msra.mxu0 0
    %1441 = vmatprep.subr.bf16.mxu0 0
    %1442 = vmatpush1.bf16.msra.mxu0 0
    %1443 = vmatprep.subr.bf16.mxu0 0
    %1444 = vmatpush1.bf16.msra.mxu0 0
    %1445 = vmatprep.subr.bf16.mxu0 0
    %1446 = vmatpush1.bf16.msra.mxu0 0
    %1447 = vmatprep.subr.bf16.mxu0 0
    %1448 = vmatpush1.bf16.msra.mxu0 0
    %1449 = vmatprep.subr.bf16.mxu0 0
    %1450 = vmatpush1.bf16.msra.mxu0 0
    %1451 = vmatprep.subr.bf16.mxu0 0
    %1452 = vmatpush1.bf16.msra.mxu0 0
    %1453 = vmatprep.subr.bf16.mxu0 0
    %1454 = vmatpush1.bf16.msra.mxu0 0
    %1455 = vmatprep.subr.bf16.mxu0 0
    %1456 = vmatpush1.bf16.msra.mxu0 0
    %1457 = vmatprep.subr.bf16.mxu0 0
    %1458 = vmatpush1.bf16.msra.mxu0 0
    %1459 = vmatprep.subr.bf16.mxu0 0
    %1460 = vmatpush1.bf16.msra.mxu0 0
    %1461 = vmatprep.subr.bf16.mxu0 0
    %1462 = vmatpush1.bf16.msra.mxu0 0
    %1463 = vmatprep.subr.bf16.mxu0 0
    %1464 = vmatpush1.bf16.msra.mxu0 0
    %1465 = vmatprep.subr.bf16.mxu0 0
    %1466 = vmatpush1.bf16.msra.mxu0 0
    %1467 = vmatprep.subr.bf16.mxu0 0
    %1468 = vmatpush1.bf16.msra.mxu0 0
    %1469 = vmatprep.mubr.bf16.mxu0 0
    %1470 = vmatmul.mubr.bf16.gmra.mrb[0].mxu0 %v1435
    %v1471 = vpop.f32.mrb[0].mxu0
    %v1472 = vadd.f32 0.0, %v1471
    %v1473 = vpop.f32.mrb[0].mxu0
    %v1474 = vpop.f32.mrb[0].mxu0
    %v1475 = vadd.f32 0.0, %v1474
    %v1476 = vpop.f32.mrb[0].mxu0
    %1477 = vdwg.mxu0
    %1480 = vrot.lane.b32.xlu0 %v1246, 32
    %v1481 = vpop.permute.xlu0 %1480
    %1482 = vrot.lane.b32.xlu0 %v1249, 32
    %v1483 = vpop.permute.xlu0 %1482
    %1488 = vrot.lane.b32.xlu0 %v1359, 64
    %v1489 = vpop.permute.xlu0 %1488
    %1490 = vrot.lane.b32.xlu0 %v1362, 64
    %v1491 = vpop.permute.xlu0 %1490
    %1496 = vrot.lane.b32.xlu0 %v1472, 96
    %v1497 = vpop.permute.xlu0 %1496
    %1498 = vrot.lane.b32.xlu0 %v1475, 96
    %v1499 = vpop.permute.xlu0 %1498
    %v1502 = vsel %vm548, %v1130, %v1481
    %v1503 = vsel %vm548, %v1133, %v1483
    %v1504 = vsel %vm1024, %v1502, %v1489
    %v1505 = vsel %vm1024, %v1503, %v1491
    %v1506 = vsel %vm1027, %v1504, %v1497
    %v1507 = vsel %vm1027, %v1505, %v1499
    %v1508 = vpack.c.bf16 %v1029, %v1028
    %v1509 = vpack.c.bf16 %v1507, %v1506
    %v1510 = vld [vmem:[#allocation5] sm:$0xf]
    %v1511 = vld [vmem:[#allocation5 + $0x4] sm:$0xf]
    %v1512 = vld [vmem:[#allocation5 + $0x8] sm:$0xf]
    %v1513 = vld [vmem:[#allocation5 + $0xc] sm:$0xf]
    %v1514 = vld [vmem:[#allocation5 + $0x10] sm:$0xf]
    %v1515 = vld [vmem:[#allocation5 + $0x14] sm:$0xf]
    %v1516 = vld [vmem:[#allocation5 + $0x18] sm:$0xf]
    %v1517 = vld [vmem:[#allocation5 + $0x1c] sm:$0xf]
    %v1518 = vld [vmem:[#allocation5 + $0x20] sm:$0xf]
    %v1519 = vld [vmem:[#allocation5 + $0x24] sm:$0xf]
    %v1520 = vld [vmem:[#allocation5 + $0x28] sm:$0xf]
    %v1521 = vld [vmem:[#allocation5 + $0x2c] sm:$0xf]
    %v1522 = vld [vmem:[#allocation5 + $0x30] sm:$0xf]
    %v1523 = vld [vmem:[#allocation5 + $0x34] sm:$0xf]
    %v1524 = vld [vmem:[#allocation5 + $0x38] sm:$0xf]
    %v1525 = vld [vmem:[#allocation5 + $0x3c] sm:$0xf]
    %v1526 = vld [vmem:[#allocation7] sm:$0x1]
    %v1528 = vlaneseq
    %v1529 = vshrl.u32 %v1528, 7
    %v1530 = vsub.s32 0, %v1529
    %v1531 = vrot.slane %v1526, %v1530
    %v1549 = vunpack.c.l.b16 %v1510
    %v1550 = vunpack.c.l.b16 %v1511
    %v1551 = vunpack.c.l.b16 %v1512
    %v1552 = vunpack.c.l.b16 %v1513
    %v1553 = vunpack.c.l.b16 %v1514
    %v1554 = vunpack.c.l.b16 %v1515
    %v1555 = vunpack.c.l.b16 %v1516
    %v1556 = vunpack.c.l.b16 %v1517
    %v1557 = vunpack.c.l.b16 %v1518
    %v1558 = vunpack.c.l.b16 %v1519
    %v1559 = vunpack.c.l.b16 %v1520
    %v1560 = vunpack.c.l.b16 %v1521
    %v1561 = vunpack.c.l.b16 %v1522
    %v1562 = vunpack.c.l.b16 %v1523
    %v1563 = vunpack.c.l.b16 %v1524
    %v1564 = vunpack.c.l.b16 %v1525
    %v1565 = vpack.c.b16 %v1550, %v1549
    %v1566 = vpack.c.b16 %v1552, %v1551
    %v1567 = vpack.c.b16 %v1554, %v1553
    %v1568 = vpack.c.b16 %v1556, %v1555
    %v1569 = vpack.c.b16 %v1558, %v1557
    %v1570 = vpack.c.b16 %v1560, %v1559
    %v1571 = vpack.c.b16 %v1562, %v1561
    %v1572 = vpack.c.b16 %v1564, %v1563
    %1581 = vmatprep.subr.bf16.mxu0 0
    %1582 = vmatpush1.bf16.msra.mxu0 %v1565
    %1583 = vmatprep.subr.bf16.mxu0 0
    %1584 = vmatpush1.bf16.msra.mxu0 %v1566
    %1585 = vmatprep.subr.bf16.mxu0 0
    %1586 = vmatpush1.bf16.msra.mxu0 %v1567
    %1587 = vmatprep.subr.bf16.mxu0 0
    %1588 = vmatpush1.bf16.msra.mxu0 %v1568
    %1589 = vmatprep.subr.bf16.mxu0 0
    %1590 = vmatpush1.bf16.msra.mxu0 %v1569
    %1591 = vmatprep.subr.bf16.mxu0 0
    %1592 = vmatpush1.bf16.msra.mxu0 %v1570
    %1593 = vmatprep.subr.bf16.mxu0 0
    %1594 = vmatpush1.bf16.msra.mxu0 %v1571
    %1595 = vmatprep.subr.bf16.mxu0 0
    %1596 = vmatpush1.bf16.msra.mxu0 %v1572
    %1597 = vmatprep.subr.bf16.mxu0 0
    %1598 = vmatpush1.bf16.msra.mxu0 0
    %1599 = vmatprep.subr.bf16.mxu0 0
    %1600 = vmatpush1.bf16.msra.mxu0 0
    %1601 = vmatprep.subr.bf16.mxu0 0
    %1602 = vmatpush1.bf16.msra.mxu0 0
    %1603 = vmatprep.subr.bf16.mxu0 0
    %1604 = vmatpush1.bf16.msra.mxu0 0
    %1605 = vmatprep.subr.bf16.mxu0 0
    %1606 = vmatpush1.bf16.msra.mxu0 0
    %1607 = vmatprep.subr.bf16.mxu0 0
    %1608 = vmatpush1.bf16.msra.mxu0 0
    %1609 = vmatprep.subr.bf16.mxu0 0
    %1610 = vmatpush1.bf16.msra.mxu0 0
    %1611 = vmatprep.subr.bf16.mxu0 0
    %1612 = vmatpush1.bf16.msra.mxu0 0
    %1613 = vmatprep.mubr.bf16.mxu0 0
    %1614 = vmatmul.mubr.bf16.gmra.mrb[0].mxu0 %v1508
    %v1615 = vpop.f32.mrb[0].mxu0
    %v1616 = vadd.f32 %v1531, %v1615
    %v1617 = vpop.f32.mrb[0].mxu0
    %v1618 = vpop.f32.mrb[0].mxu0
    %v1619 = vadd.f32 %v1531, %v1618
    %v1620 = vpop.f32.mrb[0].mxu0
    %1621 = vmatprep.mubr.bf16.mxu0 0
    %1622 = vmatmul.mubr.bf16.gmra.mrb[0].mxu0 %v1509
    %v1623 = vpop.f32.mrb[0].mxu0
    %v1624 = vadd.f32 %v1531, %v1623
    %v1625 = vpop.f32.mrb[0].mxu0
    %v1626 = vpop.f32.mrb[0].mxu0
    %v1627 = vadd.f32 %v1531, %v1626
    %v1628 = vpop.f32.mrb[0].mxu0
    %1629 = vdwg.mxu0
    %v1630 = vadd.f32 %v198, %v1616
    %v1631 = vadd.f32 %v199, %v1619
    %v1632 = vadd.f32 %v200, %v1624
    %v1633 = vadd.f32 %v201, %v1627
    %v1634 = vld [vmem:[#allocation8] sm:$0x1]
    %v1635 = vld [vmem:[#allocation10] sm:$0x1]
    %1636 = vadd.xlane.f32.xlu0 %v1630
    %v1637 = vpop.xlane.xlu0 %1636
    %1638 = vadd.xlane.f32.xlu0 %v1631
    %v1639 = vpop.xlane.xlu0 %1638
    %1640 = vadd.xlane.f32.xlu0 %v1632
    %v1641 = vpop.xlane.xlu0 %1640
    %1642 = vadd.xlane.f32.xlu0 %v1633
    %v1643 = vpop.xlane.xlu0 %1642
    %v1644 = vmul.f32 %v1637, %v221
    %v1645 = vmul.f32 %v1639, %v221
    %v1646 = vmul.f32 %v1641, %v221
    %v1647 = vmul.f32 %v1643, %v221
    %v1648 = vsub.f32 %v1630, %v1644
    %v1649 = vsub.f32 %v1631, %v1645
    %v1650 = vsub.f32 %v1632, %v1646
    %v1651 = vsub.f32 %v1633, %v1647
    %v1652 = vmul.f32 %v1648, %v1648
    %v1653 = vmul.f32 %v1649, %v1649
    %v1654 = vmul.f32 %v1650, %v1650
    %v1655 = vmul.f32 %v1651, %v1651
    %1656 = vadd.xlane.f32.xlu0 %v1652
    %v1657 = vpop.xlane.xlu0 %1656
    %1658 = vadd.xlane.f32.xlu0 %v1653
    %v1659 = vpop.xlane.xlu0 %1658
    %1660 = vadd.xlane.f32.xlu0 %v1654
    %v1661 = vpop.xlane.xlu0 %1660
    %1662 = vadd.xlane.f32.xlu0 %v1655
    %v1663 = vpop.xlane.xlu0 %1662
    %v1664 = vmul.f32 %v1657, %v221
    %v1665 = vmul.f32 %v1659, %v221
    %v1666 = vmul.f32 %v1661, %v221
    %v1667 = vmul.f32 %v1663, %v221
    %v1668 = vadd.f32 %v1664, 1e-05
    %v1669 = vadd.f32 %v1665, 1e-05
    %v1670 = vadd.f32 %v1666, 1e-05
    %v1671 = vadd.f32 %v1667, 1e-05
    %v1672 = vrsqrt.pop %v1668
    %v1673 = vrsqrt.pop %v1669
    %v1674 = vrsqrt.pop %v1670
    %v1675 = vrsqrt.pop %v1671
    %v1676 = vmul.f32 %v1648, %v1672
    %v1677 = vmul.f32 %v1649, %v1673
    %v1678 = vmul.f32 %v1650, %v1674
    %v1679 = vmul.f32 %v1651, %v1675
    %v1681 = vlaneseq
    %v1682 = vshrl.u32 %v1681, 7
    %v1683 = vsub.s32 0, %v1682
    %v1684 = vrot.slane %v1634, %v1683
    %v1686 = vmul.f32 %v1676, %v1684
    %v1687 = vmul.f32 %v1677, %v1684
    %v1688 = vmul.f32 %v1678, %v1684
    %v1689 = vmul.f32 %v1679, %v1684
    %v1691 = vlaneseq
    %v1692 = vshrl.u32 %v1691, 7
    %v1693 = vsub.s32 0, %v1692
    %v1694 = vrot.slane %v1635, %v1693
    %v1696 = vadd.f32 %v1686, %v1694
    %v1697 = vadd.f32 %v1687, %v1694
    %v1698 = vadd.f32 %v1688, %v1694
    %v1699 = vadd.f32 %v1689, %v1694
    %v1700 = vpack.c.bf16 %v1697, %v1696
    %v1701 = vpack.c.bf16 %v1699, %v1698
    %v1702 = vld [vmem:[#allocation11] sm:$0xff]
    %v1703 = vld [vmem:[#allocation11 + $0x8] sm:$0xff]
    %v1704 = vld [vmem:[#allocation11 + $0x10] sm:$0xff]
    %v1705 = vld [vmem:[#allocation11 + $0x18] sm:$0xff]
    %v1706 = vld [vmem:[#allocation11 + $0x20] sm:$0xff]
    %v1707 = vld [vmem:[#allocation11 + $0x28] sm:$0xff]
    %v1708 = vld [vmem:[#allocation11 + $0x30] sm:$0xff]
    %v1709 = vld [vmem:[#allocation11 + $0x38] sm:$0xff]
    %v1710 = vld [vmem:[#allocation11 + $0x40] sm:$0xff]
    %v1711 = vld [vmem:[#allocation11 + $0x48] sm:$0xff]
    %v1712 = vld [vmem:[#allocation11 + $0x50] sm:$0xff]
    %v1713 = vld [vmem:[#allocation11 + $0x58] sm:$0xff]
    %v1714 = vld [vmem:[#allocation11 + $0x60] sm:$0xff]
    %v1715 = vld [vmem:[#allocation11 + $0x68] sm:$0xff]
    %v1716 = vld [vmem:[#allocation11 + $0x70] sm:$0xff]
    %v1717 = vld [vmem:[#allocation11 + $0x78] sm:$0xff]
    %v1718 = vld [vmem:[#allocation11 + $0x80] sm:$0xff]
    %v1719 = vld [vmem:[#allocation11 + $0x88] sm:$0xff]
    %v1720 = vld [vmem:[#allocation11 + $0x90] sm:$0xff]
    %v1721 = vld [vmem:[#allocation11 + $0x98] sm:$0xff]
    %v1722 = vld [vmem:[#allocation11 + $0xa0] sm:$0xff]
    %v1723 = vld [vmem:[#allocation11 + $0xa8] sm:$0xff]
    %v1724 = vld [vmem:[#allocation11 + $0xb0] sm:$0xff]
    %v1725 = vld [vmem:[#allocation11 + $0xb8] sm:$0xff]
    %v1726 = vld [vmem:[#allocation11 + $0xc0] sm:$0xff]
    %v1727 = vld [vmem:[#allocation11 + $0xc8] sm:$0xff]
    %v1728 = vld [vmem:[#allocation11 + $0xd0] sm:$0xff]
    %v1729 = vld [vmem:[#allocation11 + $0xd8] sm:$0xff]
    %v1730 = vld [vmem:[#allocation11 + $0xe0] sm:$0xff]
    %v1731 = vld [vmem:[#allocation11 + $0xe8] sm:$0xff]
    %v1732 = vld [vmem:[#allocation11 + $0xf0] sm:$0xff]
    %v1733 = vld [vmem:[#allocation11 + $0xf8] sm:$0xff]
    %v1734 = vld [vmem:[%s9] sm:$0xf]
    %v1736 = vlaneseq
    %v1737 = vshrl.u32 %v1736, 7
    %v1738 = vsub.s32 0, %v1737
    %v1739 = vrot.slane %v1734, %v1738
    %v1740 = vlaneseq
    %v1741 = vshrl.u32 %v1740, 7
    %v1742 = vsub.s32 1, %v1741
    %v1743 = vrot.slane %v1734, %v1742
    %v1744 = vlaneseq
    %v1745 = vshrl.u32 %v1744, 7
    %v1746 = vsub.s32 2, %v1745
    %v1747 = vrot.slane %v1734, %v1746
    %v1748 = vlaneseq
    %v1749 = vshrl.u32 %v1748, 7
    %v1750 = vsub.s32 3, %v1749
    %v1751 = vrot.slane %v1734, %v1750
    %v1788 = vunpack.c.l.b16 %v1702
    %v1789 = vunpack.c.h.b16 %v1702
    %v1790 = vunpack.c.l.b16 %v1703
    %v1791 = vunpack.c.h.b16 %v1703
    %v1792 = vunpack.c.l.b16 %v1704
    %v1793 = vunpack.c.h.b16 %v1704
    %v1794 = vunpack.c.l.b16 %v1705
    %v1795 = vunpack.c.h.b16 %v1705
    %v1796 = vunpack.c.l.b16 %v1706
    %v1797 = vunpack.c.h.b16 %v1706
    %v1798 = vunpack.c.l.b16 %v1707
    %v1799 = vunpack.c.h.b16 %v1707
    %v1800 = vunpack.c.l.b16 %v1708
    %v1801 = vunpack.c.h.b16 %v1708
    %v1802 = vunpack.c.l.b16 %v1709
    %v1803 = vunpack.c.h.b16 %v1709
    %v1804 = vunpack.c.l.b16 %v1710
    %v1805 = vunpack.c.h.b16 %v1710
    %v1806 = vunpack.c.l.b16 %v1711
    %v1807 = vunpack.c.h.b16 %v1711
    %v1808 = vunpack.c.l.b16 %v1712
    %v1809 = vunpack.c.h.b16 %v1712
    %v1810 = vunpack.c.l.b16 %v1713
    %v1811 = vunpack.c.h.b16 %v1713
    %v1812 = vunpack.c.l.b16 %v1714
    %v1813 = vunpack.c.h.b16 %v1714
    %v1814 = vunpack.c.l.b16 %v1715
    %v1815 = vunpack.c.h.b16 %v1715
    %v1816 = vunpack.c.l.b16 %v1716
    %v1817 = vunpack.c.h.b16 %v1716
    %v1818 = vunpack.c.l.b16 %v1717
    %v1819 = vunpack.c.h.b16 %v1717
    %v1820 = vunpack.c.l.b16 %v1718
    %v1821 = vunpack.c.h.b16 %v1718
    %v1822 = vunpack.c.l.b16 %v1719
    %v1823 = vunpack.c.h.b16 %v1719
    %v1824 = vunpack.c.l.b16 %v1720
    %v1825 = vunpack.c.h.b16 %v1720
    %v1826 = vunpack.c.l.b16 %v1721
    %v1827 = vunpack.c.h.b16 %v1721
    %v1828 = vunpack.c.l.b16 %v1722
    %v1829 = vunpack.c.h.b16 %v1722
    %v1830 = vunpack.c.l.b16 %v1723
    %v1831 = vunpack.c.h.b16 %v1723
    %v1832 = vunpack.c.l.b16 %v1724
    %v1833 = vunpack.c.h.b16 %v1724
    %v1834 = vunpack.c.l.b16 %v1725
    %v1835 = vunpack.c.h.b16 %v1725
    %v1836 = vunpack.c.l.b16 %v1726
    %v1837 = vunpack.c.h.b16 %v1726
    %v1838 = vunpack.c.l.b16 %v1727
    %v1839 = vunpack.c.h.b16 %v1727
    %v1840 = vunpack.c.l.b16 %v1728
    %v1841 = vunpack.c.h.b16 %v1728
    %v1842 = vunpack.c.l.b16 %v1729
    %v1843 = vunpack.c.h.b16 %v1729
    %v1844 = vunpack.c.l.b16 %v1730
    %v1845 = vunpack.c.h.b16 %v1730
    %v1846 = vunpack.c.l.b16 %v1731
    %v1847 = vunpack.c.h.b16 %v1731
    %v1848 = vunpack.c.l.b16 %v1732
    %v1849 = vunpack.c.h.b16 %v1732
    %v1850 = vunpack.c.l.b16 %v1733
    %v1851 = vunpack.c.h.b16 %v1733
    %v1852 = vpack.c.b16 %v1792, %v1788
    %v1853 = vpack.c.b16 %v1793, %v1789
    %v1854 = vpack.c.b16 %v1794, %v1790
    %v1855 = vpack.c.b16 %v1795, %v1791
    %v1856 = vpack.c.b16 %v1800, %v1796
    %v1857 = vpack.c.b16 %v1801, %v1797
    %v1858 = vpack.c.b16 %v1802, %v1798
    %v1859 = vpack.c.b16 %v1803, %v1799
    %v1860 = vpack.c.b16 %v1808, %v1804
    %v1861 = vpack.c.b16 %v1809, %v1805
    %v1862 = vpack.c.b16 %v1810, %v1806
    %v1863 = vpack.c.b16 %v1811, %v1807
    %v1864 = vpack.c.b16 %v1816, %v1812
    %v1865 = vpack.c.b16 %v1817, %v1813
    %v1866 = vpack.c.b16 %v1818, %v1814
    %v1867 = vpack.c.b16 %v1819, %v1815
    %v1868 = vpack.c.b16 %v1824, %v1820
    %v1869 = vpack.c.b16 %v1825, %v1821
    %v1870 = vpack.c.b16 %v1826, %v1822
    %v1871 = vpack.c.b16 %v1827, %v1823
    %v1872 = vpack.c.b16 %v1832, %v1828
    %v1873 = vpack.c.b16 %v1833, %v1829
    %v1874 = vpack.c.b16 %v1834, %v1830
    %v1875 = vpack.c.b16 %v1835, %v1831
    %v1876 = vpack.c.b16 %v1840, %v1836
    %v1877 = vpack.c.b16 %v1841, %v1837
    %v1878 = vpack.c.b16 %v1842, %v1838
    %v1879 = vpack.c.b16 %v1843, %v1839
    %v1880 = vpack.c.b16 %v1848, %v1844
    %v1881 = vpack.c.b16 %v1849, %v1845
    %v1882 = vpack.c.b16 %v1850, %v1846
    %v1883 = vpack.c.b16 %v1851, %v1847
    %1916 = vmatprep.subr.bf16.mxu0 %v1853
    %1917 = vmatpush1.bf16.msra.mxu0 %v1852
    %1918 = vmatprep.subr.bf16.mxu0 %v1857
    %1919 = vmatpush1.bf16.msra.mxu0 %v1856
    %1920 = vmatprep.subr.bf16.mxu0 %v1861
    %1921 = vmatpush1.bf16.msra.mxu0 %v1860
    %1922 = vmatprep.subr.bf16.mxu0 %v1865
    %1923 = vmatpush1.bf16.msra.mxu0 %v1864
    %1924 = vmatprep.subr.bf16.mxu0 %v1869
    %1925 = vmatpush1.bf16.msra.mxu0 %v1868
    %1926 = vmatprep.subr.bf16.mxu0 %v1873
    %1927 = vmatpush1.bf16.msra.mxu0 %v1872
    %1928 = vmatprep.subr.bf16.mxu0 %v1877
    %1929 = vmatpush1.bf16.msra.mxu0 %v1876
    %1930 = vmatprep.subr.bf16.mxu0 %v1881
    %1931 = vmatpush1.bf16.msra.mxu0 %v1880
    %1932 = vmatprep.subr.bf16.mxu0 0
    %1933 = vmatpush1.bf16.msra.mxu0 0
    %1934 = vmatprep.subr.bf16.mxu0 0
    %1935 = vmatpush1.bf16.msra.mxu0 0
    %1936 = vmatprep.subr.bf16.mxu0 0
    %1937 = vmatpush1.bf16.msra.mxu0 0
    %1938 = vmatprep.subr.bf16.mxu0 0
    %1939 = vmatpush1.bf16.msra.mxu0 0
    %1940 = vmatprep.subr.bf16.mxu0 0
    %1941 = vmatpush1.bf16.msra.mxu0 0
    %1942 = vmatprep.subr.bf16.mxu0 0
    %1943 = vmatpush1.bf16.msra.mxu0 0
    %1944 = vmatprep.subr.bf16.mxu0 0
    %1945 = vmatpush1.bf16.msra.mxu0 0
    %1946 = vmatprep.subr.bf16.mxu0 0
    %1947 = vmatpush1.bf16.msra.mxu0 0
    %1948 = vmatprep.mubr.bf16.mxu0 0
    %1949 = vmatmul.mubr.bf16.gmra.mrb[0].mxu0 %v1700
    %v1950 = vpop.f32.mrb[0].mxu0
    %v1951 = vadd.f32 %v1739, %v1950
    %v1952 = vpop.f32.mrb[0].mxu0
    %v1953 = vadd.f32 %v1743, %v1952
    %v1954 = vpop.f32.mrb[0].mxu0
    %v1955 = vadd.f32 %v1739, %v1954
    %v1956 = vpop.f32.mrb[0].mxu0
    %v1957 = vadd.f32 %v1743, %v1956
    %1958 = vmatprep.mubr.bf16.mxu0 0
    %1959 = vmatmul.mubr.bf16.gmra.mrb[0].mxu0 %v1701
    %v1960 = vpop.f32.mrb[0].mxu0
    %v1961 = vadd.f32 %v1739, %v1960
    %v1962 = vpop.f32.mrb[0].mxu0
    %v1963 = vadd.f32 %v1743, %v1962
    %v1964 = vpop.f32.mrb[0].mxu0
    %v1965 = vadd.f32 %v1739, %v1964
    %v1966 = vpop.f32.mrb[0].mxu0
    %v1967 = vadd.f32 %v1743, %v1966
    %1968 = vdwg.mxu0
    %1969 = vmatprep.subr.bf16.mxu0 %v1855
    %1970 = vmatpush1.bf16.msra.mxu0 %v1854
    %1971 = vmatprep.subr.bf16.mxu0 %v1859
    %1972 = vmatpush1.bf16.msra.mxu0 %v1858
    %1973 = vmatprep.subr.bf16.mxu0 %v1863
    %1974 = vmatpush1.bf16.msra.mxu0 %v1862
    %1975 = vmatprep.subr.bf16.mxu0 %v1867
    %1976 = vmatpush1.bf16.msra.mxu0 %v1866
    %1977 = vmatprep.subr.bf16.mxu0 %v1871
    %1978 = vmatpush1.bf16.msra.mxu0 %v1870
    %1979 = vmatprep.subr.bf16.mxu0 %v1875
    %1980 = vmatpush1.bf16.msra.mxu0 %v1874
    %1981 = vmatprep.subr.bf16.mxu0 %v1879
    %1982 = vmatpush1.bf16.msra.mxu0 %v1878
    %1983 = vmatprep.subr.bf16.mxu0 %v1883
    %1984 = vmatpush1.bf16.msra.mxu0 %v1882
    %1985 = vmatprep.subr.bf16.mxu0 0
    %1986 = vmatpush1.bf16.msra.mxu0 0
    %1987 = vmatprep.subr.bf16.mxu0 0
    %1988 = vmatpush1.bf16.msra.mxu0 0
    %1989 = vmatprep.subr.bf16.mxu0 0
    %1990 = vmatpush1.bf16.msra.mxu0 0
    %1991 = vmatprep.subr.bf16.mxu0 0
    %1992 = vmatpush1.bf16.msra.mxu0 0
    %1993 = vmatprep.subr.bf16.mxu0 0
    %1994 = vmatpush1.bf16.msra.mxu0 0
    %1995 = vmatprep.subr.bf16.mxu0 0
    %1996 = vmatpush1.bf16.msra.mxu0 0
    %1997 = vmatprep.subr.bf16.mxu0 0
    %1998 = vmatpush1.bf16.msra.mxu0 0
    %1999 = vmatprep.subr.bf16.mxu0 0
    %2000 = vmatpush1.bf16.msra.mxu0 0
    %2001 = vmatprep.mubr.bf16.mxu0 0
    %2002 = vmatmul.mubr.bf16.gmra.mrb[0].mxu0 %v1700
    %v2003 = vpop.f32.mrb[0].mxu0
    %v2004 = vadd.f32 %v1747, %v2003
    %v2005 = vpop.f32.mrb[0].mxu0
    %v2006 = vadd.f32 %v1751, %v2005
    %v2007 = vpop.f32.mrb[0].mxu0
    %v2008 = vadd.f32 %v1747, %v2007
    %v2009 = vpop.f32.mrb[0].mxu0
    %v2010 = vadd.f32 %v1751, %v2009
    %2011 = vmatprep.mubr.bf16.mxu0 0
    %2012 = vmatmul.mubr.bf16.gmra.mrb[0].mxu0 %v1701
    %v2013 = vpop.f32.mrb[0].mxu0
    %v2014 = vadd.f32 %v1747, %v2013
    %v2015 = vpop.f32.mrb[0].mxu0
    %v2016 = vadd.f32 %v1751, %v2015
    %v2017 = vpop.f32.mrb[0].mxu0
    %v2018 = vadd.f32 %v1747, %v2017
    %v2019 = vpop.f32.mrb[0].mxu0
    %v2020 = vadd.f32 %v1751, %v2019
    %2021 = vdwg.mxu0
    %v2022 = vmax.f32 %v1951, 0.0
    %v2023 = vmax.f32 %v1953, 0.0
    %v2024 = vmax.f32 %v2004, 0.0
    %v2025 = vmax.f32 %v2006, 0.0
    %v2026 = vmax.f32 %v1955, 0.0
    %v2027 = vmax.f32 %v1957, 0.0
    %v2028 = vmax.f32 %v2008, 0.0
    %v2029 = vmax.f32 %v2010, 0.0
    %v2030 = vmax.f32 %v1961, 0.0
    %v2031 = vmax.f32 %v1963, 0.0
    %v2032 = vmax.f32 %v2014, 0.0
    %v2033 = vmax.f32 %v2016, 0.0
    %v2034 = vmax.f32 %v1965, 0.0
    %v2035 = vmax.f32 %v1967, 0.0
    %v2036 = vmax.f32 %v2018, 0.0
    %v2037 = vmax.f32 %v2020, 0.0
    %v2038 = vpack.c.bf16 %v2026, %v2022
    %v2039 = vpack.c.bf16 %v2027, %v2023
    %v2040 = vpack.c.bf16 %v2028, %v2024
    %v2041 = vpack.c.bf16 %v2029, %v2025
    %v2042 = vpack.c.bf16 %v2034, %v2030
    %v2043 = vpack.c.bf16 %v2035, %v2031
    %v2044 = vpack.c.bf16 %v2036, %v2032
    %v2045 = vpack.c.bf16 %v2037, %v2033
    %v2046 = vld [vmem:[#allocation13] sm:$0xf]
    %v2047 = vld [vmem:[#allocation13 + $0x4] sm:$0xf]
    %v2048 = vld [vmem:[#allocation13 + $0x8] sm:$0xf]
    %v2049 = vld [vmem:[#allocation13 + $0xc] sm:$0xf]
    %v2050 = vld [vmem:[#allocation13 + $0x10] sm:$0xf]
    %v2051 = vld [vmem:[#allocation13 + $0x14] sm:$0xf]
    %v2052 = vld [vmem:[#allocation13 + $0x18] sm:$0xf]
    %v2053 = vld [vmem:[#allocation13 + $0x1c] sm:$0xf]
    %v2054 = vld [vmem:[#allocation13 + $0x20] sm:$0xf]
    %v2055 = vld [vmem:[#allocation13 + $0x24] sm:$0xf]
    %v2056 = vld [vmem:[#allocation13 + $0x28] sm:$0xf]
    %v2057 = vld [vmem:[#allocation13 + $0x2c] sm:$0xf]
    %v2058 = vld [vmem:[#allocation13 + $0x30] sm:$0xf]
    %v2059 = vld [vmem:[#allocation13 + $0x34] sm:$0xf]
    %v2060 = vld [vmem:[#allocation13 + $0x38] sm:$0xf]
    %v2061 = vld [vmem:[#allocation13 + $0x3c] sm:$0xf]
    %v2062 = vld [vmem:[#allocation13 + $0x40] sm:$0xf]
    %v2063 = vld [vmem:[#allocation13 + $0x44] sm:$0xf]
    %v2064 = vld [vmem:[#allocation13 + $0x48] sm:$0xf]
    %v2065 = vld [vmem:[#allocation13 + $0x4c] sm:$0xf]
    %v2066 = vld [vmem:[#allocation13 + $0x50] sm:$0xf]
    %v2067 = vld [vmem:[#allocation13 + $0x54] sm:$0xf]
    %v2068 = vld [vmem:[#allocation13 + $0x58] sm:$0xf]
    %v2069 = vld [vmem:[#allocation13 + $0x5c] sm:$0xf]
    %v2070 = vld [vmem:[#allocation13 + $0x60] sm:$0xf]
    %v2071 = vld [vmem:[#allocation13 + $0x64] sm:$0xf]
    %v2072 = vld [vmem:[#allocation13 + $0x68] sm:$0xf]
    %v2073 = vld [vmem:[#allocation13 + $0x6c] sm:$0xf]
    %v2074 = vld [vmem:[#allocation13 + $0x70] sm:$0xf]
    %v2075 = vld [vmem:[#allocation13 + $0x74] sm:$0xf]
    %v2076 = vld [vmem:[#allocation13 + $0x78] sm:$0xf]
    %v2077 = vld [vmem:[#allocation13 + $0x7c] sm:$0xf]
    %v2078 = vld [vmem:[#allocation13 + $0x80] sm:$0xf]
    %v2079 = vld [vmem:[#allocation13 + $0x84] sm:$0xf]
    %v2080 = vld [vmem:[#allocation13 + $0x88] sm:$0xf]
    %v2081 = vld [vmem:[#allocation13 + $0x8c] sm:$0xf]
    %v2082 = vld [vmem:[#allocation13 + $0x90] sm:$0xf]
    %v2083 = vld [vmem:[#allocation13 + $0x94] sm:$0xf]
    %v2084 = vld [vmem:[#allocation13 + $0x98] sm:$0xf]
    %v2085 = vld [vmem:[#allocation13 + $0x9c] sm:$0xf]
    %v2086 = vld [vmem:[#allocation13 + $0xa0] sm:$0xf]
    %v2087 = vld [vmem:[#allocation13 + $0xa4] sm:$0xf]
    %v2088 = vld [vmem:[#allocation13 + $0xa8] sm:$0xf]
    %v2089 = vld [vmem:[#allocation13 + $0xac] sm:$0xf]
    %v2090 = vld [vmem:[#allocation13 + $0xb0] sm:$0xf]
    %v2091 = vld [vmem:[#allocation13 + $0xb4] sm:$0xf]
    %v2092 = vld [vmem:[#allocation13 + $0xb8] sm:$0xf]
    %v2093 = vld [vmem:[#allocation13 + $0xbc] sm:$0xf]
    %v2094 = vld [vmem:[#allocation13 + $0xc0] sm:$0xf]
    %v2095 = vld [vmem:[#allocation13 + $0xc4] sm:$0xf]
    %v2096 = vld [vmem:[#allocation13 + $0xc8] sm:$0xf]
    %v2097 = vld [vmem:[#allocation13 + $0xcc] sm:$0xf]
    %v2098 = vld [vmem:[#allocation13 + $0xd0] sm:$0xf]
    %v2099 = vld [vmem:[#allocation13 + $0xd4] sm:$0xf]
    %v2100 = vld [vmem:[#allocation13 + $0xd8] sm:$0xf]
    %v2101 = vld [vmem:[#allocation13 + $0xdc] sm:$0xf]
    %v2102 = vld [vmem:[#allocation13 + $0xe0] sm:$0xf]
    %v2103 = vld [vmem:[#allocation13 + $0xe4] sm:$0xf]
    %v2104 = vld [vmem:[#allocation13 + $0xe8] sm:$0xf]
    %v2105 = vld [vmem:[#allocation13 + $0xec] sm:$0xf]
    %v2106 = vld [vmem:[#allocation13 + $0xf0] sm:$0xf]
    %v2107 = vld [vmem:[#allocation13 + $0xf4] sm:$0xf]
    %v2108 = vld [vmem:[#allocation13 + $0xf8] sm:$0xf]
    %v2109 = vld [vmem:[#allocation13 + $0xfc] sm:$0xf]
    %v2110 = vld [vmem:[#allocation14] sm:$0x1]
    %v2112 = vlaneseq
    %v2113 = vshrl.u32 %v2112, 7
    %v2114 = vsub.s32 0, %v2113
    %v2115 = vrot.slane %v2110, %v2114
    %v2181 = vunpack.c.l.b16 %v2046
    %v2182 = vunpack.c.l.b16 %v2047
    %v2183 = vunpack.c.l.b16 %v2048
    %v2184 = vunpack.c.l.b16 %v2049
    %v2185 = vunpack.c.l.b16 %v2050
    %v2186 = vunpack.c.l.b16 %v2051
    %v2187 = vunpack.c.l.b16 %v2052
    %v2188 = vunpack.c.l.b16 %v2053
    %v2189 = vunpack.c.l.b16 %v2054
    %v2190 = vunpack.c.l.b16 %v2055
    %v2191 = vunpack.c.l.b16 %v2056
    %v2192 = vunpack.c.l.b16 %v2057
    %v2193 = vunpack.c.l.b16 %v2058
    %v2194 = vunpack.c.l.b16 %v2059
    %v2195 = vunpack.c.l.b16 %v2060
    %v2196 = vunpack.c.l.b16 %v2061
    %v2197 = vunpack.c.l.b16 %v2062
    %v2198 = vunpack.c.l.b16 %v2063
    %v2199 = vunpack.c.l.b16 %v2064
    %v2200 = vunpack.c.l.b16 %v2065
    %v2201 = vunpack.c.l.b16 %v2066
    %v2202 = vunpack.c.l.b16 %v2067
    %v2203 = vunpack.c.l.b16 %v2068
    %v2204 = vunpack.c.l.b16 %v2069
    %v2205 = vunpack.c.l.b16 %v2070
    %v2206 = vunpack.c.l.b16 %v2071
    %v2207 = vunpack.c.l.b16 %v2072
    %v2208 = vunpack.c.l.b16 %v2073
    %v2209 = vunpack.c.l.b16 %v2074
    %v2210 = vunpack.c.l.b16 %v2075
    %v2211 = vunpack.c.l.b16 %v2076
    %v2212 = vunpack.c.l.b16 %v2077
    %v2213 = vunpack.c.l.b16 %v2078
    %v2214 = vunpack.c.l.b16 %v2079
    %v2215 = vunpack.c.l.b16 %v2080
    %v2216 = vunpack.c.l.b16 %v2081
    %v2217 = vunpack.c.l.b16 %v2082
    %v2218 = vunpack.c.l.b16 %v2083
    %v2219 = vunpack.c.l.b16 %v2084
    %v2220 = vunpack.c.l.b16 %v2085
    %v2221 = vunpack.c.l.b16 %v2086
    %v2222 = vunpack.c.l.b16 %v2087
    %v2223 = vunpack.c.l.b16 %v2088
    %v2224 = vunpack.c.l.b16 %v2089
    %v2225 = vunpack.c.l.b16 %v2090
    %v2226 = vunpack.c.l.b16 %v2091
    %v2227 = vunpack.c.l.b16 %v2092
    %v2228 = vunpack.c.l.b16 %v2093
    %v2229 = vunpack.c.l.b16 %v2094
    %v2230 = vunpack.c.l.b16 %v2095
    %v2231 = vunpack.c.l.b16 %v2096
    %v2232 = vunpack.c.l.b16 %v2097
    %v2233 = vunpack.c.l.b16 %v2098
    %v2234 = vunpack.c.l.b16 %v2099
    %v2235 = vunpack.c.l.b16 %v2100
    %v2236 = vunpack.c.l.b16 %v2101
    %v2237 = vunpack.c.l.b16 %v2102
    %v2238 = vunpack.c.l.b16 %v2103
    %v2239 = vunpack.c.l.b16 %v2104
    %v2240 = vunpack.c.l.b16 %v2105
    %v2241 = vunpack.c.l.b16 %v2106
    %v2242 = vunpack.c.l.b16 %v2107
    %v2243 = vunpack.c.l.b16 %v2108
    %v2244 = vunpack.c.l.b16 %v2109
    %v2245 = vpack.c.b16 %v2182, %v2181
    %v2246 = vpack.c.b16 %v2184, %v2183
    %v2247 = vpack.c.b16 %v2186, %v2185
    %v2248 = vpack.c.b16 %v2188, %v2187
    %v2249 = vpack.c.b16 %v2190, %v2189
    %v2250 = vpack.c.b16 %v2192, %v2191
    %v2251 = vpack.c.b16 %v2194, %v2193
    %v2252 = vpack.c.b16 %v2196, %v2195
    %v2253 = vpack.c.b16 %v2198, %v2197
    %v2254 = vpack.c.b16 %v2200, %v2199
    %v2255 = vpack.c.b16 %v2202, %v2201
    %v2256 = vpack.c.b16 %v2204, %v2203
    %v2257 = vpack.c.b16 %v2206, %v2205
    %v2258 = vpack.c.b16 %v2208, %v2207
    %v2259 = vpack.c.b16 %v2210, %v2209
    %v2260 = vpack.c.b16 %v2212, %v2211
    %v2261 = vpack.c.b16 %v2214, %v2213
    %v2262 = vpack.c.b16 %v2216, %v2215
    %v2263 = vpack.c.b16 %v2218, %v2217
    %v2264 = vpack.c.b16 %v2220, %v2219
    %v2265 = vpack.c.b16 %v2222, %v2221
    %v2266 = vpack.c.b16 %v2224, %v2223
    %v2267 = vpack.c.b16 %v2226, %v2225
    %v2268 = vpack.c.b16 %v2228, %v2227
    %v2269 = vpack.c.b16 %v2230, %v2229
    %v2270 = vpack.c.b16 %v2232, %v2231
    %v2271 = vpack.c.b16 %v2234, %v2233
    %v2272 = vpack.c.b16 %v2236, %v2235
    %v2273 = vpack.c.b16 %v2238, %v2237
    %v2274 = vpack.c.b16 %v2240, %v2239
    %v2275 = vpack.c.b16 %v2242, %v2241
    %v2276 = vpack.c.b16 %v2244, %v2243
    %2309 = vmatprep.subr.bf16.mxu0 0
    %2310 = vmatpush1.bf16.msra.mxu0 %v2245
    %2311 = vmatprep.subr.bf16.mxu0 0
    %2312 = vmatpush1.bf16.msra.mxu0 %v2246
    %2313 = vmatprep.subr.bf16.mxu0 0
    %2314 = vmatpush1.bf16.msra.mxu0 %v2247
    %2315 = vmatprep.subr.bf16.mxu0 0
    %2316 = vmatpush1.bf16.msra.mxu0 %v2248
    %2317 = vmatprep.subr.bf16.mxu0 0
    %2318 = vmatpush1.bf16.msra.mxu0 %v2249
    %2319 = vmatprep.subr.bf16.mxu0 0
    %2320 = vmatpush1.bf16.msra.mxu0 %v2250
    %2321 = vmatprep.subr.bf16.mxu0 0
    %2322 = vmatpush1.bf16.msra.mxu0 %v2251
    %2323 = vmatprep.subr.bf16.mxu0 0
    %2324 = vmatpush1.bf16.msra.mxu0 %v2252
    %2325 = vmatprep.subr.bf16.mxu0 0
    %2326 = vmatpush1.bf16.msra.mxu0 %v2253
    %2327 = vmatprep.subr.bf16.mxu0 0
    %2328 = vmatpush1.bf16.msra.mxu0 %v2254
    %2329 = vmatprep.subr.bf16.mxu0 0
    %2330 = vmatpush1.bf16.msra.mxu0 %v2255
    %2331 = vmatprep.subr.bf16.mxu0 0
    %2332 = vmatpush1.bf16.msra.mxu0 %v2256
    %2333 = vmatprep.subr.bf16.mxu0 0
    %2334 = vmatpush1.bf16.msra.mxu0 %v2257
    %2335 = vmatprep.subr.bf16.mxu0 0
    %2336 = vmatpush1.bf16.msra.mxu0 %v2258
    %2337 = vmatprep.subr.bf16.mxu0 0
    %2338 = vmatpush1.bf16.msra.mxu0 %v2259
    %2339 = vmatprep.subr.bf16.mxu0 0
    %2340 = vmatpush1.bf16.msra.mxu0 %v2260
    %2341 = vmatprep.mubr.bf16.mxu0 %v2039
    %2342 = vmatmul.mubr.bf16.gmra.mrb[0].mxu0 %v2038
    %v2343 = vpop.f32.mrb[0].mxu0
    %v2344 = vadd.f32 %v2115, %v2343
    %v2345 = vpop.f32.mrb[0].mxu0
    %v2346 = vpop.f32.mrb[0].mxu0
    %v2347 = vadd.f32 %v2115, %v2346
    %v2348 = vpop.f32.mrb[0].mxu0
    %2349 = vmatprep.mubr.bf16.mxu0 %v2043
    %2350 = vmatmul.mubr.bf16.gmra.mrb[0].mxu0 %v2042
    %v2351 = vpop.f32.mrb[0].mxu0
    %v2352 = vadd.f32 %v2115, %v2351
    %v2353 = vpop.f32.mrb[0].mxu0
    %v2354 = vpop.f32.mrb[0].mxu0
    %v2355 = vadd.f32 %v2115, %v2354
    %v2356 = vpop.f32.mrb[0].mxu0
    %2357 = vdwg.mxu0
    %2358 = vmatprep.subr.bf16.mxu0 0
    %2359 = vmatpush1.bf16.msra.mxu0 %v2261
    %2360 = vmatprep.subr.bf16.mxu0 0
    %2361 = vmatpush1.bf16.msra.mxu0 %v2262
    %2362 = vmatprep.subr.bf16.mxu0 0
    %2363 = vmatpush1.bf16.msra.mxu0 %v2263
    %2364 = vmatprep.subr.bf16.mxu0 0
    %2365 = vmatpush1.bf16.msra.mxu0 %v2264
    %2366 = vmatprep.subr.bf16.mxu0 0
    %2367 = vmatpush1.bf16.msra.mxu0 %v2265
    %2368 = vmatprep.subr.bf16.mxu0 0
    %2369 = vmatpush1.bf16.msra.mxu0 %v2266
    %2370 = vmatprep.subr.bf16.mxu0 0
    %2371 = vmatpush1.bf16.msra.mxu0 %v2267
    %2372 = vmatprep.subr.bf16.mxu0 0
    %2373 = vmatpush1.bf16.msra.mxu0 %v2268
    %2374 = vmatprep.subr.bf16.mxu0 0
    %2375 = vmatpush1.bf16.msra.mxu0 %v2269
    %2376 = vmatprep.subr.bf16.mxu0 0
    %2377 = vmatpush1.bf16.msra.mxu0 %v2270
    %2378 = vmatprep.subr.bf16.mxu0 0
    %2379 = vmatpush1.bf16.msra.mxu0 %v2271
    %2380 = vmatprep.subr.bf16.mxu0 0
    %2381 = vmatpush1.bf16.msra.mxu0 %v2272
    %2382 = vmatprep.subr.bf16.mxu0 0
    %2383 = vmatpush1.bf16.msra.mxu0 %v2273
    %2384 = vmatprep.subr.bf16.mxu0 0
    %2385 = vmatpush1.bf16.msra.mxu0 %v2274
    %2386 = vmatprep.subr.bf16.mxu0 0
    %2387 = vmatpush1.bf16.msra.mxu0 %v2275
    %2388 = vmatprep.subr.bf16.mxu0 0
    %2389 = vmatpush1.bf16.msra.mxu0 %v2276
    %2390 = vmatprep.mubr.bf16.mxu0 %v2041
    %2391 = vmatmul.mubr.bf16.gmra.mrb[0].mxu0 %v2040
    %v2392 = vpop.f32.mrb[0].mxu0
    %v2393 = vadd.f32 %v2344, %v2392
    %v2394 = vpop.f32.mrb[0].mxu0
    %v2395 = vpop.f32.mrb[0].mxu0
    %v2396 = vadd.f32 %v2347, %v2395
    %v2397 = vpop.f32.mrb[0].mxu0
    %2398 = vmatprep.mubr.bf16.mxu0 %v2045
    %2399 = vmatmul.mubr.bf16.gmra.mrb[0].mxu0 %v2044
    %v2400 = vpop.f32.mrb[0].mxu0
    %v2401 = vadd.f32 %v2352, %v2400
    %v2402 = vpop.f32.mrb[0].mxu0
    %v2403 = vpop.f32.mrb[0].mxu0
    %v2404 = vadd.f32 %v2355, %v2403
    %v2405 = vpop.f32.mrb[0].mxu0
    %2406 = vdwg.mxu0
    %v2407 = vadd.f32 %v1630, %v2393
    %v2408 = vadd.f32 %v1631, %v2396
    %v2409 = vadd.f32 %v1632, %v2401
    %v2410 = vadd.f32 %v1633, %v2404
    %s2411 = scalar_lea.vmem %s1, 1
    %v2412 = vld [vmem:[%s2411] sm:$0x1]
    %s2413 = scalar_lea.vmem [#allocation2], 1
    %v2414 = vld [vmem:[%s2413] sm:$0x1]
    %2415 = vadd.xlane.f32.xlu0 %v2407
    %v2416 = vpop.xlane.xlu0 %2415
    %2417 = vadd.xlane.f32.xlu0 %v2408
    %v2418 = vpop.xlane.xlu0 %2417
    %2419 = vadd.xlane.f32.xlu0 %v2409
    %v2420 = vpop.xlane.xlu0 %2419
    %2421 = vadd.xlane.f32.xlu0 %v2410
    %v2422 = vpop.xlane.xlu0 %2421
    %v2423 = vmul.f32 %v2416, %v221
    %v2424 = vmul.f32 %v2418, %v221
    %v2425 = vmul.f32 %v2420, %v221
    %v2426 = vmul.f32 %v2422, %v221
    %v2427 = vsub.f32 %v2407, %v2423
    %v2428 = vsub.f32 %v2408, %v2424
    %v2429 = vsub.f32 %v2409, %v2425
    %v2430 = vsub.f32 %v2410, %v2426
    %v2431 = vmul.f32 %v2427, %v2427
    %v2432 = vmul.f32 %v2428, %v2428
    %v2433 = vmul.f32 %v2429, %v2429
    %v2434 = vmul.f32 %v2430, %v2430
    %2435 = vadd.xlane.f32.xlu0 %v2431
    %v2436 = vpop.xlane.xlu0 %2435
    %2437 = vadd.xlane.f32.xlu0 %v2432
    %v2438 = vpop.xlane.xlu0 %2437
    %2439 = vadd.xlane.f32.xlu0 %v2433
    %v2440 = vpop.xlane.xlu0 %2439
    %2441 = vadd.xlane.f32.xlu0 %v2434
    %v2442 = vpop.xlane.xlu0 %2441
    %v2443 = vmul.f32 %v2436, %v221
    %v2444 = vmul.f32 %v2438, %v221
    %v2445 = vmul.f32 %v2440, %v221
    %v2446 = vmul.f32 %v2442, %v221
    %v2447 = vadd.f32 %v2443, 1e-05
    %v2448 = vadd.f32 %v2444, 1e-05
    %v2449 = vadd.f32 %v2445, 1e-05
    %v2450 = vadd.f32 %v2446, 1e-05
    %v2451 = vrsqrt.pop %v2447
    %v2452 = vrsqrt.pop %v2448
    %v2453 = vrsqrt.pop %v2449
    %v2454 = vrsqrt.pop %v2450
    %v2455 = vmul.f32 %v2427, %v2451
    %v2456 = vmul.f32 %v2428, %v2452
    %v2457 = vmul.f32 %v2429, %v2453
    %v2458 = vmul.f32 %v2430, %v2454
    %v2460 = vlaneseq
    %v2461 = vshrl.u32 %v2460, 7
    %v2462 = vsub.s32 0, %v2461
    %v2463 = vrot.slane %v2412, %v2462
    %v2465 = vmul.f32 %v2455, %v2463
    %v2466 = vmul.f32 %v2456, %v2463
    %v2467 = vmul.f32 %v2457, %v2463
    %v2468 = vmul.f32 %v2458, %v2463
    %v2470 = vlaneseq
    %v2471 = vshrl.u32 %v2470, 7
    %v2472 = vsub.s32 0, %v2471
    %v2473 = vrot.slane %v2414, %v2472
    %v2475 = vadd.f32 %v2465, %v2473
    %v2476 = vadd.f32 %v2466, %v2473
    %v2477 = vadd.f32 %v2467, %v2473
    %v2478 = vadd.f32 %v2468, %v2473
    %v2479 = vpack.c.bf16 %v2476, %v2475
    %v2480 = vpack.c.bf16 %v2478, %v2477
    %s2481 = scalar_lea.vmem %s3, 192
    %v2482 = vld [vmem:[%s2481] sm:$0xff]
    %v2483 = vld [vmem:[%s2481 + $0x8] sm:$0xf]
    %v2484 = vld [vmem:[%s2481 + $0xc] sm:$0xff]
    %v2485 = vld [vmem:[%s2481 + $0x14] sm:$0xf]
    %v2486 = vld [vmem:[%s2481 + $0x18] sm:$0xff]
    %v2487 = vld [vmem:[%s2481 + $0x20] sm:$0xf]
    %v2488 = vld [vmem:[%s2481 + $0x24] sm:$0xff]
    %v2489 = vld [vmem:[%s2481 + $0x2c] sm:$0xf]
    %v2490 = vld [vmem:[%s2481 + $0x30] sm:$0xff]
    %v2491 = vld [vmem:[%s2481 + $0x38] sm:$0xf]
    %v2492 = vld [vmem:[%s2481 + $0x3c] sm:$0xff]
    %v2493 = vld [vmem:[%s2481 + $0x44] sm:$0xf]
    %v2494 = vld [vmem:[%s2481 + $0x48] sm:$0xff]
    %v2495 = vld [vmem:[%s2481 + $0x50] sm:$0xf]
    %v2496 = vld [vmem:[%s2481 + $0x54] sm:$0xff]
    %v2497 = vld [vmem:[%s2481 + $0x5c] sm:$0xf]
    %v2498 = vld [vmem:[%s2481 + $0x60] sm:$0xff]
    %v2499 = vld [vmem:[%s2481 + $0x68] sm:$0xf]
    %v2500 = vld [vmem:[%s2481 + $0x6c] sm:$0xff]
    %v2501 = vld [vmem:[%s2481 + $0x74] sm:$0xf]
    %v2502 = vld [vmem:[%s2481 + $0x78] sm:$0xff]
    %v2503 = vld [vmem:[%s2481 + $0x80] sm:$0xf]
    %v2504 = vld [vmem:[%s2481 + $0x84] sm:$0xff]
    %v2505 = vld [vmem:[%s2481 + $0x8c] sm:$0xf]
    %v2506 = vld [vmem:[%s2481 + $0x90] sm:$0xff]
    %v2507 = vld [vmem:[%s2481 + $0x98] sm:$0xf]
    %v2508 = vld [vmem:[%s2481 + $0x9c] sm:$0xff]
    %v2509 = vld [vmem:[%s2481 + $0xa4] sm:$0xf]
    %v2510 = vld [vmem:[%s2481 + $0xa8] sm:$0xff]
    %v2511 = vld [vmem:[%s2481 + $0xb0] sm:$0xf]
    %v2512 = vld [vmem:[%s2481 + $0xb4] sm:$0xff]
    %v2513 = vld [vmem:[%s2481 + $0xbc] sm:$0xf]
    %v2546 = vunpack.c.l.b16 %v2482
    %v2547 = vunpack.c.h.b16 %v2482
    %v2548 = vunpack.c.l.b16 %v2483
    %v2549 = vunpack.c.l.b16 %v2484
    %v2550 = vunpack.c.h.b16 %v2484
    %v2551 = vunpack.c.l.b16 %v2485
    %v2552 = vunpack.c.l.b16 %v2486
    %v2553 = vunpack.c.h.b16 %v2486
    %v2554 = vunpack.c.l.b16 %v2487
    %v2555 = vunpack.c.l.b16 %v2488
    %v2556 = vunpack.c.h.b16 %v2488
    %v2557 = vunpack.c.l.b16 %v2489
    %v2558 = vunpack.c.l.b16 %v2490
    %v2559 = vunpack.c.h.b16 %v2490
    %v2560 = vunpack.c.l.b16 %v2491
    %v2561 = vunpack.c.l.b16 %v2492
    %v2562 = vunpack.c.h.b16 %v2492
    %v2563 = vunpack.c.l.b16 %v2493
    %v2564 = vunpack.c.l.b16 %v2494
    %v2565 = vunpack.c.h.b16 %v2494
    %v2566 = vunpack.c.l.b16 %v2495
    %v2567 = vunpack.c.l.b16 %v2496
    %v2568 = vunpack.c.h.b16 %v2496
    %v2569 = vunpack.c.l.b16 %v2497
    %v2570 = vunpack.c.l.b16 %v2498
    %v2571 = vunpack.c.h.b16 %v2498
    %v2572 = vunpack.c.l.b16 %v2499
    %v2573 = vunpack.c.l.b16 %v2500
    %v2574 = vunpack.c.h.b16 %v2500
    %v2575 = vunpack.c.l.b16 %v2501
    %v2576 = vunpack.c.l.b16 %v2502
    %v2577 = vunpack.c.h.b16 %v2502
    %v2578 = vunpack.c.l.b16 %v2503
    %v2579 = vunpack.c.l.b16 %v2504
    %v2580 = vunpack.c.h.b16 %v2504
    %v2581 = vunpack.c.l.b16 %v2505
    %v2582 = vunpack.c.l.b16 %v2506
    %v2583 = vunpack.c.h.b16 %v2506
    %v2584 = vunpack.c.l.b16 %v2507
    %v2585 = vunpack.c.l.b16 %v2508
    %v2586 = vunpack.c.h.b16 %v2508
    %v2587 = vunpack.c.l.b16 %v2509
    %v2588 = vunpack.c.l.b16 %v2510
    %v2589 = vunpack.c.h.b16 %v2510
    %v2590 = vunpack.c.l.b16 %v2511
    %v2591 = vunpack.c.l.b16 %v2512
    %v2592 = vunpack.c.h.b16 %v2512
    %v2593 = vunpack.c.l.b16 %v2513
    %v2594 = vpack.c.b16 %v2549, %v2546
    %v2595 = vpack.c.b16 %v2550, %v2547
    %v2596 = vpack.c.b16 %v2551, %v2548
    %v2597 = vpack.c.b16 %v2555, %v2552
    %v2598 = vpack.c.b16 %v2556, %v2553
    %v2599 = vpack.c.b16 %v2557, %v2554
    %v2600 = vpack.c.b16 %v2561, %v2558
    %v2601 = vpack.c.b16 %v2562, %v2559
    %v2602 = vpack.c.b16 %v2563, %v2560
    %v2603 = vpack.c.b16 %v2567, %v2564
    %v2604 = vpack.c.b16 %v2568, %v2565
    %v2605 = vpack.c.b16 %v2569, %v2566
    %v2606 = vpack.c.b16 %v2573, %v2570
    %v2607 = vpack.c.b16 %v2574, %v2571
    %v2608 = vpack.c.b16 %v2575, %v2572
    %v2609 = vpack.c.b16 %v2579, %v2576
    %v2610 = vpack.c.b16 %v2580, %v2577
    %v2611 = vpack.c.b16 %v2581, %v2578
    %v2612 = vpack.c.b16 %v2585, %v2582
    %v2613 = vpack.c.b16 %v2586, %v2583
    %v2614 = vpack.c.b16 %v2587, %v2584
    %v2615 = vpack.c.b16 %v2591, %v2588
    %v2616 = vpack.c.b16 %v2592, %v2589
    %v2617 = vpack.c.b16 %v2593, %v2590
    %2642 = vmatprep.subr.bf16.mxu0 %v2595
    %2643 = vmatpush1.bf16.msra.mxu0 %v2594
    %2644 = vmatprep.subr.bf16.mxu0 %v2598
    %2645 = vmatpush1.bf16.msra.mxu0 %v2597
    %2646 = vmatprep.subr.bf16.mxu0 %v2601
    %2647 = vmatpush1.bf16.msra.mxu0 %v2600
    %2648 = vmatprep.subr.bf16.mxu0 %v2604
    %2649 = vmatpush1.bf16.msra.mxu0 %v2603
    %2650 = vmatprep.subr.bf16.mxu0 %v2607
    %2651 = vmatpush1.bf16.msra.mxu0 %v2606
    %2652 = vmatprep.subr.bf16.mxu0 %v2610
    %2653 = vmatpush1.bf16.msra.mxu0 %v2609
    %2654 = vmatprep.subr.bf16.mxu0 %v2613
    %2655 = vmatpush1.bf16.msra.mxu0 %v2612
    %2656 = vmatprep.subr.bf16.mxu0 %v2616
    %2657 = vmatpush1.bf16.msra.mxu0 %v2615
    %2658 = vmatprep.subr.bf16.mxu0 0
    %2659 = vmatpush1.bf16.msra.mxu0 0
    %2660 = vmatprep.subr.bf16.mxu0 0
    %2661 = vmatpush1.bf16.msra.mxu0 0
    %2662 = vmatprep.subr.bf16.mxu0 0
    %2663 = vmatpush1.bf16.msra.mxu0 0
    %2664 = vmatprep.subr.bf16.mxu0 0
    %2665 = vmatpush1.bf16.msra.mxu0 0
    %2666 = vmatprep.subr.bf16.mxu0 0
    %2667 = vmatpush1.bf16.msra.mxu0 0
    %2668 = vmatprep.subr.bf16.mxu0 0
    %2669 = vmatpush1.bf16.msra.mxu0 0
    %2670 = vmatprep.subr.bf16.mxu0 0
    %2671 = vmatpush1.bf16.msra.mxu0 0
    %2672 = vmatprep.subr.bf16.mxu0 0
    %2673 = vmatpush1.bf16.msra.mxu0 0
    %2674 = vmatprep.mubr.bf16.mxu0 0
    %2675 = vmatmul.mubr.bf16.gmra.mrb[0].mxu0 %v2479
    %v2676 = vpop.f32.mrb[0].mxu0
    %v2677 = vadd.f32 0.0, %v2676
    %v2678 = vpop.f32.mrb[0].mxu0
    %v2679 = vadd.f32 0.0, %v2678
    %v2680 = vpop.f32.mrb[0].mxu0
    %v2681 = vadd.f32 0.0, %v2680
    %v2682 = vpop.f32.mrb[0].mxu0
    %v2683 = vadd.f32 0.0, %v2682
    %2684 = vmatprep.mubr.bf16.mxu0 0
    %2685 = vmatmul.mubr.bf16.gmra.mrb[0].mxu0 %v2480
    %v2686 = vpop.f32.mrb[0].mxu0
    %v2687 = vadd.f32 0.0, %v2686
    %v2688 = vpop.f32.mrb[0].mxu0
    %v2689 = vadd.f32 0.0, %v2688
    %v2690 = vpop.f32.mrb[0].mxu0
    %v2691 = vadd.f32 0.0, %v2690
    %v2692 = vpop.f32.mrb[0].mxu0
    %v2693 = vadd.f32 0.0, %v2692
    %2694 = vdwg.mxu0
    %2695 = vmatprep.subr.bf16.mxu0 0
    %2696 = vmatpush1.bf16.msra.mxu0 %v2596
    %2697 = vmatprep.subr.bf16.mxu0 0
    %2698 = vmatpush1.bf16.msra.mxu0 %v2599
    %2699 = vmatprep.subr.bf16.mxu0 0
    %2700 = vmatpush1.bf16.msra.mxu0 %v2602
    %2701 = vmatprep.subr.bf16.mxu0 0
    %2702 = vmatpush1.bf16.msra.mxu0 %v2605
    %2703 = vmatprep.subr.bf16.mxu0 0
    %2704 = vmatpush1.bf16.msra.mxu0 %v2608
    %2705 = vmatprep.subr.bf16.mxu0 0
    %2706 = vmatpush1.bf16.msra.mxu0 %v2611
    %2707 = vmatprep.subr.bf16.mxu0 0
    %2708 = vmatpush1.bf16.msra.mxu0 %v2614
    %2709 = vmatprep.subr.bf16.mxu0 0
    %2710 = vmatpush1.bf16.msra.mxu0 %v2617
    %2711 = vmatprep.subr.bf16.mxu0 0
    %2712 = vmatpush1.bf16.msra.mxu0 0
    %2713 = vmatprep.subr.bf16.mxu0 0
    %2714 = vmatpush1.bf16.msra.mxu0 0
    %2715 = vmatprep.subr.bf16.mxu0 0
    %2716 = vmatpush1.bf16.msra.mxu0 0
    %2717 = vmatprep.subr.bf16.mxu0 0
    %2718 = vmatpush1.bf16.msra.mxu0 0
    %2719 = vmatprep.subr.bf16.mxu0 0
    %2720 = vmatpush1.bf16.msra.mxu0 0
    %2721 = vmatprep.subr.bf16.mxu0 0
    %2722 = vmatpush1.bf16.msra.mxu0 0
    %2723 = vmatprep.subr.bf16.mxu0 0
    %2724 = vmatpush1.bf16.msra.mxu0 0
    %2725 = vmatprep.subr.bf16.mxu0 0
    %2726 = vmatpush1.bf16.msra.mxu0 0
    %2727 = vmatprep.mubr.bf16.mxu0 0
    %2728 = vmatmul.mubr.bf16.gmra.mrb[0].mxu0 %v2479
    %v2729 = vpop.f32.mrb[0].mxu0
    %v2730 = vadd.f32 0.0, %v2729
    %v2731 = vpop.f32.mrb[0].mxu0
    %v2732 = vpop.f32.mrb[0].mxu0
    %v2733 = vadd.f32 0.0, %v2732
    %v2734 = vpop.f32.mrb[0].mxu0
    %2735 = vmatprep.mubr.bf16.mxu0 0
    %2736 = vmatmul.mubr.bf16.gmra.mrb[0].mxu0 %v2480
    %v2737 = vpop.f32.mrb[0].mxu0
    %v2738 = vadd.f32 0.0, %v2737
    %v2739 = vpop.f32.mrb[0].mxu0
    %v2740 = vpop.f32.mrb[0].mxu0
    %v2741 = vadd.f32 0.0, %v2740
    %v2742 = vpop.f32.mrb[0].mxu0
    %2743 = vdwg.mxu0
    %v2744 = vpack.c.bf16 %v2681, %v2677
    %v2745 = vpack.c.bf16 %v2691, %v2687
    %v2746 = vpack.c.bf16 %v2683, %v2679
    %v2747 = vpack.c.bf16 %v2693, %v2689
    %v2748 = vpack.c.bf16 %v2733, %v2730
    %v2749 = vpack.c.bf16 %v2741, %v2738
    %v2751 = vsel %vm548, %v2744, 0
    %v2754 = vsel %vm548, %v2746, 0
    %2756 = vmatprep.subr.bf16.mxu0 0
    %2757 = vmatpush1.bf16.xpose.msra.mxu0 %v2754
    %2758 = vmatprep.subr.bf16.mxu0 0
    %2759 = vmatpush1.bf16.xpose.msra.mxu0 0
    %2760 = vmatprep.subr.bf16.mxu0 0
    %2761 = vmatpush1.bf16.xpose.msra.mxu0 0
    %2762 = vmatprep.subr.bf16.mxu0 0
    %2763 = vmatpush1.bf16.xpose.msra.mxu0 0
    %2764 = vmatprep.subr.bf16.mxu0 0
    %2765 = vmatpush1.bf16.xpose.msra.mxu0 0
    %2766 = vmatprep.subr.bf16.mxu0 0
    %2767 = vmatpush1.bf16.xpose.msra.mxu0 0
    %2768 = vmatprep.subr.bf16.mxu0 0
    %2769 = vmatpush1.bf16.xpose.msra.mxu0 0
    %2770 = vmatprep.subr.bf16.mxu0 0
    %2771 = vmatpush1.bf16.xpose.msra.mxu0 0
    %2772 = vmatprep.subr.bf16.mxu0 0
    %2773 = vmatpush1.bf16.xpose.msra.mxu0 0
    %2774 = vmatprep.subr.bf16.mxu0 0
    %2775 = vmatpush1.bf16.xpose.msra.mxu0 0
    %2776 = vmatprep.subr.bf16.mxu0 0
    %2777 = vmatpush1.bf16.xpose.msra.mxu0 0
    %2778 = vmatprep.subr.bf16.mxu0 0
    %2779 = vmatpush1.bf16.xpose.msra.mxu0 0
    %2780 = vmatprep.subr.bf16.mxu0 0
    %2781 = vmatpush1.bf16.xpose.msra.mxu0 0
    %2782 = vmatprep.subr.bf16.mxu0 0
    %2783 = vmatpush1.bf16.xpose.msra.mxu0 0
    %2784 = vmatprep.subr.bf16.mxu0 0
    %2785 = vmatpush1.bf16.xpose.msra.mxu0 0
    %2786 = vmatprep.subr.bf16.mxu0 0
    %2787 = vmatpush1.bf16.xpose.msra.mxu0 0
    %2788 = vmatprep.mubr.bf16.mxu0 0
    %2789 = vmatmul.mubr.bf16.gmra.mrb[0].mxu0 %v2751
    %v2790 = vpop.f32.mrb[0].mxu0
    %v2791 = vadd.f32 %v209, %v2790
    %v2792 = vpop.f32.mrb[0].mxu0
    %v2793 = vpop.f32.mrb[0].mxu0
    %v2794 = vadd.f32 %v210, %v2793
    %v2795 = vpop.f32.mrb[0].mxu0
    %2796 = vdwg.mxu0
    %v2797 = vmul.f32 %v2791, 1.442695
    %v2798 = vpow.pop %v2797
    %v2799 = vmul.f32 %v2794, 1.442695
    %v2800 = vpow.pop %v2799
    %v2801 = vsel %vm600, %v2798, 0.0
    %2802 = vadd.xlane.f32.xlu0 %v2801
    %v2803 = vpop.xlane.xlu0 %2802
    %v2804 = vsel %vm600, %v2800, 0.0
    %2805 = vadd.xlane.f32.xlu0 %v2804
    %v2806 = vpop.xlane.xlu0 %2805
    %v2807 = vrcp.pop %v2803
    %v2808 = vrcp.pop %v2806
    %v2809 = vmul.f32 %v2798, %v2807
    %v2810 = vmul.f32 %v2800, %v2808
    %v2811 = vpack.c.bf16 %v2810, %v2809
    %v2813 = vsel %vm600, %v2811, 0
    %2815 = vmatprep.subr.bf16.mxu0 0
    %2816 = vmatpush1.bf16.msra.mxu0 %v2748
    %2817 = vmatprep.subr.bf16.mxu0 0
    %2818 = vmatpush1.bf16.msra.mxu0 0
    %2819 = vmatprep.subr.bf16.mxu0 0
    %2820 = vmatpush1.bf16.msra.mxu0 0
    %2821 = vmatprep.subr.bf16.mxu0 0
    %2822 = vmatpush1.bf16.msra.mxu0 0
    %2823 = vmatprep.subr.bf16.mxu0 0
    %2824 = vmatpush1.bf16.msra.mxu0 0
    %2825 = vmatprep.subr.bf16.mxu0 0
    %2826 = vmatpush1.bf16.msra.mxu0 0
    %2827 = vmatprep.subr.bf16.mxu0 0
    %2828 = vmatpush1.bf16.msra.mxu0 0
    %2829 = vmatprep.subr.bf16.mxu0 0
    %2830 = vmatpush1.bf16.msra.mxu0 0
    %2831 = vmatprep.subr.bf16.mxu0 0
    %2832 = vmatpush1.bf16.msra.mxu0 0
    %2833 = vmatprep.subr.bf16.mxu0 0
    %2834 = vmatpush1.bf16.msra.mxu0 0
    %2835 = vmatprep.subr.bf16.mxu0 0
    %2836 = vmatpush1.bf16.msra.mxu0 0
    %2837 = vmatprep.subr.bf16.mxu0 0
    %2838 = vmatpush1.bf16.msra.mxu0 0
    %2839 = vmatprep.subr.bf16.mxu0 0
    %2840 = vmatpush1.bf16.msra.mxu0 0
    %2841 = vmatprep.subr.bf16.mxu0 0
    %2842 = vmatpush1.bf16.msra.mxu0 0
    %2843 = vmatprep.subr.bf16.mxu0 0
    %2844 = vmatpush1.bf16.msra.mxu0 0
    %2845 = vmatprep.subr.bf16.mxu0 0
    %2846 = vmatpush1.bf16.msra.mxu0 0
    %2847 = vmatprep.mubr.bf16.mxu0 0
    %2848 = vmatmul.mubr.bf16.gmra.mrb[0].mxu0 %v2813
    %v2849 = vpop.f32.mrb[0].mxu0
    %v2850 = vadd.f32 0.0, %v2849
    %v2851 = vpop.f32.mrb[0].mxu0
    %v2852 = vpop.f32.mrb[0].mxu0
    %v2853 = vadd.f32 0.0, %v2852
    %v2854 = vpop.f32.mrb[0].mxu0
    %2855 = vdwg.mxu0
    %2857 = vrot.lane.b32.xlu0 %v2744, 96
    %v2858 = vpop.permute.xlu0 %2857
    %2860 = vrot.lane.b32.xlu0 %v2746, 96
    %v2861 = vpop.permute.xlu0 %2860
    %v2863 = vsel %vm548, %v2858, 0
    %v2866 = vsel %vm548, %v2861, 0
    %2868 = vmatprep.subr.bf16.mxu0 0
    %2869 = vmatpush1.bf16.xpose.msra.mxu0 %v2866
    %2870 = vmatprep.subr.bf16.mxu0 0
    %2871 = vmatpush1.bf16.xpose.msra.mxu0 0
    %2872 = vmatprep.subr.bf16.mxu0 0
    %2873 = vmatpush1.bf16.xpose.msra.mxu0 0
    %2874 = vmatprep.subr.bf16.mxu0 0
    %2875 = vmatpush1.bf16.xpose.msra.mxu0 0
    %2876 = vmatprep.subr.bf16.mxu0 0
    %2877 = vmatpush1.bf16.xpose.msra.mxu0 0
    %2878 = vmatprep.subr.bf16.mxu0 0
    %2879 = vmatpush1.bf16.xpose.msra.mxu0 0
    %2880 = vmatprep.subr.bf16.mxu0 0
    %2881 = vmatpush1.bf16.xpose.msra.mxu0 0
    %2882 = vmatprep.subr.bf16.mxu0 0
    %2883 = vmatpush1.bf16.xpose.msra.mxu0 0
    %2884 = vmatprep.subr.bf16.mxu0 0
    %2885 = vmatpush1.bf16.xpose.msra.mxu0 0
    %2886 = vmatprep.subr.bf16.mxu0 0
    %2887 = vmatpush1.bf16.xpose.msra.mxu0 0
    %2888 = vmatprep.subr.bf16.mxu0 0
    %2889 = vmatpush1.bf16.xpose.msra.mxu0 0
    %2890 = vmatprep.subr.bf16.mxu0 0
    %2891 = vmatpush1.bf16.xpose.msra.mxu0 0
    %2892 = vmatprep.subr.bf16.mxu0 0
    %2893 = vmatpush1.bf16.xpose.msra.mxu0 0
    %2894 = vmatprep.subr.bf16.mxu0 0
    %2895 = vmatpush1.bf16.xpose.msra.mxu0 0
    %2896 = vmatprep.subr.bf16.mxu0 0
    %2897 = vmatpush1.bf16.xpose.msra.mxu0 0
    %2898 = vmatprep.subr.bf16.mxu0 0
    %2899 = vmatpush1.bf16.xpose.msra.mxu0 0
    %2900 = vmatprep.mubr.bf16.mxu0 0
    %2901 = vmatmul.mubr.bf16.gmra.mrb[0].mxu0 %v2863
    %v2902 = vpop.f32.mrb[0].mxu0
    %v2903 = vadd.f32 %v209, %v2902
    %v2904 = vpop.f32.mrb[0].mxu0
    %v2905 = vpop.f32.mrb[0].mxu0
    %v2906 = vadd.f32 %v210, %v2905
    %v2907 = vpop.f32.mrb[0].mxu0
    %2908 = vdwg.mxu0
    %v2909 = vmul.f32 %v2903, 1.442695
    %v2910 = vpow.pop %v2909
    %v2911 = vmul.f32 %v2906, 1.442695
    %v2912 = vpow.pop %v2911
    %v2913 = vsel %vm600, %v2910, 0.0
    %2914 = vadd.xlane.f32.xlu0 %v2913
    %v2915 = vpop.xlane.xlu0 %2914
    %v2916 = vsel %vm600, %v2912, 0.0
    %2917 = vadd.xlane.f32.xlu0 %v2916
    %v2918 = vpop.xlane.xlu0 %2917
    %v2919 = vrcp.pop %v2915
    %v2920 = vrcp.pop %v2918
    %v2921 = vmul.f32 %v2910, %v2919
    %v2922 = vmul.f32 %v2912, %v2920
    %v2923 = vpack.c.bf16 %v2922, %v2921
    %2925 = vrot.lane.b32.xlu0 %v2748, 96
    %v2926 = vpop.permute.xlu0 %2925
    %v2929 = vsel %vm600, %v2923, 0
    %2931 = vmatprep.subr.bf16.mxu0 0
    %2932 = vmatpush1.bf16.msra.mxu0 %v2926
    %2933 = vmatprep.subr.bf16.mxu0 0
    %2934 = vmatpush1.bf16.msra.mxu0 0
    %2935 = vmatprep.subr.bf16.mxu0 0
    %2936 = vmatpush1.bf16.msra.mxu0 0
    %2937 = vmatprep.subr.bf16.mxu0 0
    %2938 = vmatpush1.bf16.msra.mxu0 0
    %2939 = vmatprep.subr.bf16.mxu0 0
    %2940 = vmatpush1.bf16.msra.mxu0 0
    %2941 = vmatprep.subr.bf16.mxu0 0
    %2942 = vmatpush1.bf16.msra.mxu0 0
    %2943 = vmatprep.subr.bf16.mxu0 0
    %2944 = vmatpush1.bf16.msra.mxu0 0
    %2945 = vmatprep.subr.bf16.mxu0 0
    %2946 = vmatpush1.bf16.msra.mxu0 0
    %2947 = vmatprep.subr.bf16.mxu0 0
    %2948 = vmatpush1.bf16.msra.mxu0 0
    %2949 = vmatprep.subr.bf16.mxu0 0
    %2950 = vmatpush1.bf16.msra.mxu0 0
    %2951 = vmatprep.subr.bf16.mxu0 0
    %2952 = vmatpush1.bf16.msra.mxu0 0
    %2953 = vmatprep.subr.bf16.mxu0 0
    %2954 = vmatpush1.bf16.msra.mxu0 0
    %2955 = vmatprep.subr.bf16.mxu0 0
    %2956 = vmatpush1.bf16.msra.mxu0 0
    %2957 = vmatprep.subr.bf16.mxu0 0
    %2958 = vmatpush1.bf16.msra.mxu0 0
    %2959 = vmatprep.subr.bf16.mxu0 0
    %2960 = vmatpush1.bf16.msra.mxu0 0
    %2961 = vmatprep.subr.bf16.mxu0 0
    %2962 = vmatpush1.bf16.msra.mxu0 0
    %2963 = vmatprep.mubr.bf16.mxu0 0
    %2964 = vmatmul.mubr.bf16.gmra.mrb[0].mxu0 %v2929
    %v2965 = vpop.f32.mrb[0].mxu0
    %v2966 = vadd.f32 0.0, %v2965
    %v2967 = vpop.f32.mrb[0].mxu0
    %v2968 = vpop.f32.mrb[0].mxu0
    %v2969 = vadd.f32 0.0, %v2968
    %v2970 = vpop.f32.mrb[0].mxu0
    %2971 = vdwg.mxu0
    %2972 = vrot.lane.b32.xlu0 %v2744, 64
    %v2973 = vpop.permute.xlu0 %2972
    %2974 = vrot.lane.b32.xlu0 %v2746, 64
    %v2975 = vpop.permute.xlu0 %2974
    %v2977 = vsel %vm548, %v2973, 0
    %v2980 = vsel %vm548, %v2975, 0
    %2982 = vmatprep.subr.bf16.mxu0 0
    %2983 = vmatpush1.bf16.xpose.msra.mxu0 %v2980
    %2984 = vmatprep.subr.bf16.mxu0 0
    %2985 = vmatpush1.bf16.xpose.msra.mxu0 0
    %2986 = vmatprep.subr.bf16.mxu0 0
    %2987 = vmatpush1.bf16.xpose.msra.mxu0 0
    %2988 = vmatprep.subr.bf16.mxu0 0
    %2989 = vmatpush1.bf16.xpose.msra.mxu0 0
    %2990 = vmatprep.subr.bf16.mxu0 0
    %2991 = vmatpush1.bf16.xpose.msra.mxu0 0
    %2992 = vmatprep.subr.bf16.mxu0 0
    %2993 = vmatpush1.bf16.xpose.msra.mxu0 0
    %2994 = vmatprep.subr.bf16.mxu0 0
    %2995 = vmatpush1.bf16.xpose.msra.mxu0 0
    %2996 = vmatprep.subr.bf16.mxu0 0
    %2997 = vmatpush1.bf16.xpose.msra.mxu0 0
    %2998 = vmatprep.subr.bf16.mxu0 0
    %2999 = vmatpush1.bf16.xpose.msra.mxu0 0
    %3000 = vmatprep.subr.bf16.mxu0 0
    %3001 = vmatpush1.bf16.xpose.msra.mxu0 0
    %3002 = vmatprep.subr.bf16.mxu0 0
    %3003 = vmatpush1.bf16.xpose.msra.mxu0 0
    %3004 = vmatprep.subr.bf16.mxu0 0
    %3005 = vmatpush1.bf16.xpose.msra.mxu0 0
    %3006 = vmatprep.subr.bf16.mxu0 0
    %3007 = vmatpush1.bf16.xpose.msra.mxu0 0
    %3008 = vmatprep.subr.bf16.mxu0 0
    %3009 = vmatpush1.bf16.xpose.msra.mxu0 0
    %3010 = vmatprep.subr.bf16.mxu0 0
    %3011 = vmatpush1.bf16.xpose.msra.mxu0 0
    %3012 = vmatprep.subr.bf16.mxu0 0
    %3013 = vmatpush1.bf16.xpose.msra.mxu0 0
    %3014 = vmatprep.mubr.bf16.mxu0 0
    %3015 = vmatmul.mubr.bf16.gmra.mrb[0].mxu0 %v2977
    %v3016 = vpop.f32.mrb[0].mxu0
    %v3017 = vadd.f32 %v209, %v3016
    %v3018 = vpop.f32.mrb[0].mxu0
    %v3019 = vpop.f32.mrb[0].mxu0
    %v3020 = vadd.f32 %v210, %v3019
    %v3021 = vpop.f32.mrb[0].mxu0
    %3022 = vdwg.mxu0
    %v3023 = vmul.f32 %v3017, 1.442695
    %v3024 = vpow.pop %v3023
    %v3025 = vmul.f32 %v3020, 1.442695
    %v3026 = vpow.pop %v3025
    %v3027 = vsel %vm600, %v3024, 0.0
    %3028 = vadd.xlane.f32.xlu0 %v3027
    %v3029 = vpop.xlane.xlu0 %3028
    %v3030 = vsel %vm600, %v3026, 0.0
    %3031 = vadd.xlane.f32.xlu0 %v3030
    %v3032 = vpop.xlane.xlu0 %3031
    %v3033 = vrcp.pop %v3029
    %v3034 = vrcp.pop %v3032
    %v3035 = vmul.f32 %v3024, %v3033
    %v3036 = vmul.f32 %v3026, %v3034
    %v3037 = vpack.c.bf16 %v3036, %v3035
    %3038 = vrot.lane.b32.xlu0 %v2748, 64
    %v3039 = vpop.permute.xlu0 %3038
    %v3042 = vsel %vm600, %v3037, 0
    %3044 = vmatprep.subr.bf16.mxu0 0
    %3045 = vmatpush1.bf16.msra.mxu0 %v3039
    %3046 = vmatprep.subr.bf16.mxu0 0
    %3047 = vmatpush1.bf16.msra.mxu0 0
    %3048 = vmatprep.subr.bf16.mxu0 0
    %3049 = vmatpush1.bf16.msra.mxu0 0
    %3050 = vmatprep.subr.bf16.mxu0 0
    %3051 = vmatpush1.bf16.msra.mxu0 0
    %3052 = vmatprep.subr.bf16.mxu0 0
    %3053 = vmatpush1.bf16.msra.mxu0 0
    %3054 = vmatprep.subr.bf16.mxu0 0
    %3055 = vmatpush1.bf16.msra.mxu0 0
    %3056 = vmatprep.subr.bf16.mxu0 0
    %3057 = vmatpush1.bf16.msra.mxu0 0
    %3058 = vmatprep.subr.bf16.mxu0 0
    %3059 = vmatpush1.bf16.msra.mxu0 0
    %3060 = vmatprep.subr.bf16.mxu0 0
    %3061 = vmatpush1.bf16.msra.mxu0 0
    %3062 = vmatprep.subr.bf16.mxu0 0
    %3063 = vmatpush1.bf16.msra.mxu0 0
    %3064 = vmatprep.subr.bf16.mxu0 0
    %3065 = vmatpush1.bf16.msra.mxu0 0
    %3066 = vmatprep.subr.bf16.mxu0 0
    %3067 = vmatpush1.bf16.msra.mxu0 0
    %3068 = vmatprep.subr.bf16.mxu0 0
    %3069 = vmatpush1.bf16.msra.mxu0 0
    %3070 = vmatprep.subr.bf16.mxu0 0
    %3071 = vmatpush1.bf16.msra.mxu0 0
    %3072 = vmatprep.subr.bf16.mxu0 0
    %3073 = vmatpush1.bf16.msra.mxu0 0
    %3074 = vmatprep.subr.bf16.mxu0 0
    %3075 = vmatpush1.bf16.msra.mxu0 0
    %3076 = vmatprep.mubr.bf16.mxu0 0
    %3077 = vmatmul.mubr.bf16.gmra.mrb[0].mxu0 %v3042
    %v3078 = vpop.f32.mrb[0].mxu0
    %v3079 = vadd.f32 0.0, %v3078
    %v3080 = vpop.f32.mrb[0].mxu0
    %v3081 = vpop.f32.mrb[0].mxu0
    %v3082 = vadd.f32 0.0, %v3081
    %v3083 = vpop.f32.mrb[0].mxu0
    %3084 = vdwg.mxu0
    %3085 = vrot.lane.b32.xlu0 %v2744, 32
    %v3086 = vpop.permute.xlu0 %3085
    %3087 = vrot.lane.b32.xlu0 %v2746, 32
    %v3088 = vpop.permute.xlu0 %3087
    %v3090 = vsel %vm548, %v3086, 0
    %v3093 = vsel %vm548, %v3088, 0
    %3095 = vmatprep.subr.bf16.mxu0 0
    %3096 = vmatpush1.bf16.xpose.msra.mxu0 %v3093
    %3097 = vmatprep.subr.bf16.mxu0 0
    %3098 = vmatpush1.bf16.xpose.msra.mxu0 0
    %3099 = vmatprep.subr.bf16.mxu0 0
    %3100 = vmatpush1.bf16.xpose.msra.mxu0 0
    %3101 = vmatprep.subr.bf16.mxu0 0
    %3102 = vmatpush1.bf16.xpose.msra.mxu0 0
    %3103 = vmatprep.subr.bf16.mxu0 0
    %3104 = vmatpush1.bf16.xpose.msra.mxu0 0
    %3105 = vmatprep.subr.bf16.mxu0 0
    %3106 = vmatpush1.bf16.xpose.msra.mxu0 0
    %3107 = vmatprep.subr.bf16.mxu0 0
    %3108 = vmatpush1.bf16.xpose.msra.mxu0 0
    %3109 = vmatprep.subr.bf16.mxu0 0
    %3110 = vmatpush1.bf16.xpose.msra.mxu0 0
    %3111 = vmatprep.subr.bf16.mxu0 0
    %3112 = vmatpush1.bf16.xpose.msra.mxu0 0
    %3113 = vmatprep.subr.bf16.mxu0 0
    %3114 = vmatpush1.bf16.xpose.msra.mxu0 0
    %3115 = vmatprep.subr.bf16.mxu0 0
    %3116 = vmatpush1.bf16.xpose.msra.mxu0 0
    %3117 = vmatprep.subr.bf16.mxu0 0
    %3118 = vmatpush1.bf16.xpose.msra.mxu0 0
    %3119 = vmatprep.subr.bf16.mxu0 0
    %3120 = vmatpush1.bf16.xpose.msra.mxu0 0
    %3121 = vmatprep.subr.bf16.mxu0 0
    %3122 = vmatpush1.bf16.xpose.msra.mxu0 0
    %3123 = vmatprep.subr.bf16.mxu0 0
    %3124 = vmatpush1.bf16.xpose.msra.mxu0 0
    %3125 = vmatprep.subr.bf16.mxu0 0
    %3126 = vmatpush1.bf16.xpose.msra.mxu0 0
    %3127 = vmatprep.mubr.bf16.mxu0 0
    %3128 = vmatmul.mubr.bf16.gmra.mrb[0].mxu0 %v3090
    %v3129 = vpop.f32.mrb[0].mxu0
    %v3130 = vadd.f32 %v209, %v3129
    %v3131 = vpop.f32.mrb[0].mxu0
    %v3132 = vpop.f32.mrb[0].mxu0
    %v3133 = vadd.f32 %v210, %v3132
    %v3134 = vpop.f32.mrb[0].mxu0
    %3135 = vdwg.mxu0
    %v3136 = vmul.f32 %v3130, 1.442695
    %v3137 = vpow.pop %v3136
    %v3138 = vmul.f32 %v3133, 1.442695
    %v3139 = vpow.pop %v3138
    %v3140 = vsel %vm600, %v3137, 0.0
    %3141 = vadd.xlane.f32.xlu0 %v3140
    %v3142 = vpop.xlane.xlu0 %3141
    %v3143 = vsel %vm600, %v3139, 0.0
    %3144 = vadd.xlane.f32.xlu0 %v3143
    %v3145 = vpop.xlane.xlu0 %3144
    %v3146 = vrcp.pop %v3142
    %v3147 = vrcp.pop %v3145
    %v3148 = vmul.f32 %v3137, %v3146
    %v3149 = vmul.f32 %v3139, %v3147
    %v3150 = vpack.c.bf16 %v3149, %v3148
    %3151 = vrot.lane.b32.xlu0 %v2748, 32
    %v3152 = vpop.permute.xlu0 %3151
    %v3155 = vsel %vm600, %v3150, 0
    %3157 = vmatprep.subr.bf16.mxu0 0
    %3158 = vmatpush1.bf16.msra.mxu0 %v3152
    %3159 = vmatprep.subr.bf16.mxu0 0
    %3160 = vmatpush1.bf16.msra.mxu0 0
    %3161 = vmatprep.subr.bf16.mxu0 0
    %3162 = vmatpush1.bf16.msra.mxu0 0
    %3163 = vmatprep.subr.bf16.mxu0 0
    %3164 = vmatpush1.bf16.msra.mxu0 0
    %3165 = vmatprep.subr.bf16.mxu0 0
    %3166 = vmatpush1.bf16.msra.mxu0 0
    %3167 = vmatprep.subr.bf16.mxu0 0
    %3168 = vmatpush1.bf16.msra.mxu0 0
    %3169 = vmatprep.subr.bf16.mxu0 0
    %3170 = vmatpush1.bf16.msra.mxu0 0
    %3171 = vmatprep.subr.bf16.mxu0 0
    %3172 = vmatpush1.bf16.msra.mxu0 0
    %3173 = vmatprep.subr.bf16.mxu0 0
    %3174 = vmatpush1.bf16.msra.mxu0 0
    %3175 = vmatprep.subr.bf16.mxu0 0
    %3176 = vmatpush1.bf16.msra.mxu0 0
    %3177 = vmatprep.subr.bf16.mxu0 0
    %3178 = vmatpush1.bf16.msra.mxu0 0
    %3179 = vmatprep.subr.bf16.mxu0 0
    %3180 = vmatpush1.bf16.msra.mxu0 0
    %3181 = vmatprep.subr.bf16.mxu0 0
    %3182 = vmatpush1.bf16.msra.mxu0 0
    %3183 = vmatprep.subr.bf16.mxu0 0
    %3184 = vmatpush1.bf16.msra.mxu0 0
    %3185 = vmatprep.subr.bf16.mxu0 0
    %3186 = vmatpush1.bf16.msra.mxu0 0
    %3187 = vmatprep.subr.bf16.mxu0 0
    %3188 = vmatpush1.bf16.msra.mxu0 0
    %3189 = vmatprep.mubr.bf16.mxu0 0
    %3190 = vmatmul.mubr.bf16.gmra.mrb[0].mxu0 %v3155
    %v3191 = vpop.f32.mrb[0].mxu0
    %v3192 = vadd.f32 0.0, %v3191
    %v3193 = vpop.f32.mrb[0].mxu0
    %v3194 = vpop.f32.mrb[0].mxu0
    %v3195 = vadd.f32 0.0, %v3194
    %v3196 = vpop.f32.mrb[0].mxu0
    %3197 = vdwg.mxu0
    %3200 = vrot.lane.b32.xlu0 %v2966, 32
    %v3201 = vpop.permute.xlu0 %3200
    %3202 = vrot.lane.b32.xlu0 %v2969, 32
    %v3203 = vpop.permute.xlu0 %3202
    %3208 = vrot.lane.b32.xlu0 %v3079, 64
    %v3209 = vpop.permute.xlu0 %3208
    %3210 = vrot.lane.b32.xlu0 %v3082, 64
    %v3211 = vpop.permute.xlu0 %3210
    %3216 = vrot.lane.b32.xlu0 %v3192, 96
    %v3217 = vpop.permute.xlu0 %3216
    %3218 = vrot.lane.b32.xlu0 %v3195, 96
    %v3219 = vpop.permute.xlu0 %3218
    %v3222 = vsel %vm548, %v2850, %v3201
    %v3223 = vsel %vm548, %v2853, %v3203
    %v3224 = vsel %vm1024, %v3222, %v3209
    %v3225 = vsel %vm1024, %v3223, %v3211
    %v3226 = vsel %vm1027, %v3224, %v3217
    %v3227 = vsel %vm1027, %v3225, %v3219
    %v3229 = vsel %vm548, %v2745, 0
    %v3232 = vsel %vm548, %v2747, 0
    %3234 = vmatprep.subr.bf16.mxu0 0
    %3235 = vmatpush1.bf16.xpose.msra.mxu0 %v3232
    %3236 = vmatprep.subr.bf16.mxu0 0
    %3237 = vmatpush1.bf16.xpose.msra.mxu0 0
    %3238 = vmatprep.subr.bf16.mxu0 0
    %3239 = vmatpush1.bf16.xpose.msra.mxu0 0
    %3240 = vmatprep.subr.bf16.mxu0 0
    %3241 = vmatpush1.bf16.xpose.msra.mxu0 0
    %3242 = vmatprep.subr.bf16.mxu0 0
    %3243 = vmatpush1.bf16.xpose.msra.mxu0 0
    %3244 = vmatprep.subr.bf16.mxu0 0
    %3245 = vmatpush1.bf16.xpose.msra.mxu0 0
    %3246 = vmatprep.subr.bf16.mxu0 0
    %3247 = vmatpush1.bf16.xpose.msra.mxu0 0
    %3248 = vmatprep.subr.bf16.mxu0 0
    %3249 = vmatpush1.bf16.xpose.msra.mxu0 0
    %3250 = vmatprep.subr.bf16.mxu0 0
    %3251 = vmatpush1.bf16.xpose.msra.mxu0 0
    %3252 = vmatprep.subr.bf16.mxu0 0
    %3253 = vmatpush1.bf16.xpose.msra.mxu0 0
    %3254 = vmatprep.subr.bf16.mxu0 0
    %3255 = vmatpush1.bf16.xpose.msra.mxu0 0
    %3256 = vmatprep.subr.bf16.mxu0 0
    %3257 = vmatpush1.bf16.xpose.msra.mxu0 0
    %3258 = vmatprep.subr.bf16.mxu0 0
    %3259 = vmatpush1.bf16.xpose.msra.mxu0 0
    %3260 = vmatprep.subr.bf16.mxu0 0
    %3261 = vmatpush1.bf16.xpose.msra.mxu0 0
    %3262 = vmatprep.subr.bf16.mxu0 0
    %3263 = vmatpush1.bf16.xpose.msra.mxu0 0
    %3264 = vmatprep.subr.bf16.mxu0 0
    %3265 = vmatpush1.bf16.xpose.msra.mxu0 0
    %3266 = vmatprep.mubr.bf16.mxu0 0
    %3267 = vmatmul.mubr.bf16.gmra.mrb[0].mxu0 %v3229
    %v3268 = vpop.f32.mrb[0].mxu0
    %v3269 = vadd.f32 %v209, %v3268
    %v3270 = vpop.f32.mrb[0].mxu0
    %v3271 = vpop.f32.mrb[0].mxu0
    %v3272 = vadd.f32 %v210, %v3271
    %v3273 = vpop.f32.mrb[0].mxu0
    %3274 = vdwg.mxu0
    %v3275 = vmul.f32 %v3269, 1.442695
    %v3276 = vpow.pop %v3275
    %v3277 = vmul.f32 %v3272, 1.442695
    %v3278 = vpow.pop %v3277
    %v3279 = vsel %vm600, %v3276, 0.0
    %3280 = vadd.xlane.f32.xlu0 %v3279
    %v3281 = vpop.xlane.xlu0 %3280
    %v3282 = vsel %vm600, %v3278, 0.0
    %3283 = vadd.xlane.f32.xlu0 %v3282
    %v3284 = vpop.xlane.xlu0 %3283
    %v3285 = vrcp.pop %v3281
    %v3286 = vrcp.pop %v3284
    %v3287 = vmul.f32 %v3276, %v3285
    %v3288 = vmul.f32 %v3278, %v3286
    %v3289 = vpack.c.bf16 %v3288, %v3287
    %v3291 = vsel %vm600, %v3289, 0
    %3293 = vmatprep.subr.bf16.mxu0 0
    %3294 = vmatpush1.bf16.msra.mxu0 %v2749
    %3295 = vmatprep.subr.bf16.mxu0 0
    %3296 = vmatpush1.bf16.msra.mxu0 0
    %3297 = vmatprep.subr.bf16.mxu0 0
    %3298 = vmatpush1.bf16.msra.mxu0 0
    %3299 = vmatprep.subr.bf16.mxu0 0
    %3300 = vmatpush1.bf16.msra.mxu0 0
    %3301 = vmatprep.subr.bf16.mxu0 0
    %3302 = vmatpush1.bf16.msra.mxu0 0
    %3303 = vmatprep.subr.bf16.mxu0 0
    %3304 = vmatpush1.bf16.msra.mxu0 0
    %3305 = vmatprep.subr.bf16.mxu0 0
    %3306 = vmatpush1.bf16.msra.mxu0 0
    %3307 = vmatprep.subr.bf16.mxu0 0
    %3308 = vmatpush1.bf16.msra.mxu0 0
    %3309 = vmatprep.subr.bf16.mxu0 0
    %3310 = vmatpush1.bf16.msra.mxu0 0
    %3311 = vmatprep.subr.bf16.mxu0 0
    %3312 = vmatpush1.bf16.msra.mxu0 0
    %3313 = vmatprep.subr.bf16.mxu0 0
    %3314 = vmatpush1.bf16.msra.mxu0 0
    %3315 = vmatprep.subr.bf16.mxu0 0
    %3316 = vmatpush1.bf16.msra.mxu0 0
    %3317 = vmatprep.subr.bf16.mxu0 0
    %3318 = vmatpush1.bf16.msra.mxu0 0
    %3319 = vmatprep.subr.bf16.mxu0 0
    %3320 = vmatpush1.bf16.msra.mxu0 0
    %3321 = vmatprep.subr.bf16.mxu0 0
    %3322 = vmatpush1.bf16.msra.mxu0 0
    %3323 = vmatprep.subr.bf16.mxu0 0
    %3324 = vmatpush1.bf16.msra.mxu0 0
    %3325 = vmatprep.mubr.bf16.mxu0 0
    %3326 = vmatmul.mubr.bf16.gmra.mrb[0].mxu0 %v3291
    %v3327 = vpop.f32.mrb[0].mxu0
    %v3328 = vadd.f32 0.0, %v3327
    %v3329 = vpop.f32.mrb[0].mxu0
    %v3330 = vpop.f32.mrb[0].mxu0
    %v3331 = vadd.f32 0.0, %v3330
    %v3332 = vpop.f32.mrb[0].mxu0
    %3333 = vdwg.mxu0
    %3335 = vrot.lane.b32.xlu0 %v2745, 96
    %v3336 = vpop.permute.xlu0 %3335
    %3338 = vrot.lane.b32.xlu0 %v2747, 96
    %v3339 = vpop.permute.xlu0 %3338
    %v3341 = vsel %vm548, %v3336, 0
    %v3344 = vsel %vm548, %v3339, 0
    %3346 = vmatprep.subr.bf16.mxu0 0
    %3347 = vmatpush1.bf16.xpose.msra.mxu0 %v3344
    %3348 = vmatprep.subr.bf16.mxu0 0
    %3349 = vmatpush1.bf16.xpose.msra.mxu0 0
    %3350 = vmatprep.subr.bf16.mxu0 0
    %3351 = vmatpush1.bf16.xpose.msra.mxu0 0
    %3352 = vmatprep.subr.bf16.mxu0 0
    %3353 = vmatpush1.bf16.xpose.msra.mxu0 0
    %3354 = vmatprep.subr.bf16.mxu0 0
    %3355 = vmatpush1.bf16.xpose.msra.mxu0 0
    %3356 = vmatprep.subr.bf16.mxu0 0
    %3357 = vmatpush1.bf16.xpose.msra.mxu0 0
    %3358 = vmatprep.subr.bf16.mxu0 0
    %3359 = vmatpush1.bf16.xpose.msra.mxu0 0
    %3360 = vmatprep.subr.bf16.mxu0 0
    %3361 = vmatpush1.bf16.xpose.msra.mxu0 0
    %3362 = vmatprep.subr.bf16.mxu0 0
    %3363 = vmatpush1.bf16.xpose.msra.mxu0 0
    %3364 = vmatprep.subr.bf16.mxu0 0
    %3365 = vmatpush1.bf16.xpose.msra.mxu0 0
    %3366 = vmatprep.subr.bf16.mxu0 0
    %3367 = vmatpush1.bf16.xpose.msra.mxu0 0
    %3368 = vmatprep.subr.bf16.mxu0 0
    %3369 = vmatpush1.bf16.xpose.msra.mxu0 0
    %3370 = vmatprep.subr.bf16.mxu0 0
    %3371 = vmatpush1.bf16.xpose.msra.mxu0 0
    %3372 = vmatprep.subr.bf16.mxu0 0
    %3373 = vmatpush1.bf16.xpose.msra.mxu0 0
    %3374 = vmatprep.subr.bf16.mxu0 0
    %3375 = vmatpush1.bf16.xpose.msra.mxu0 0
    %3376 = vmatprep.subr.bf16.mxu0 0
    %3377 = vmatpush1.bf16.xpose.msra.mxu0 0
    %3378 = vmatprep.mubr.bf16.mxu0 0
    %3379 = vmatmul.mubr.bf16.gmra.mrb[0].mxu0 %v3341
    %v3380 = vpop.f32.mrb[0].mxu0
    %v3381 = vadd.f32 %v209, %v3380
    %v3382 = vpop.f32.mrb[0].mxu0
    %v3383 = vpop.f32.mrb[0].mxu0
    %v3384 = vadd.f32 %v210, %v3383
    %v3385 = vpop.f32.mrb[0].mxu0
    %3386 = vdwg.mxu0
    %v3387 = vmul.f32 %v3381, 1.442695
    %v3388 = vpow.pop %v3387
    %v3389 = vmul.f32 %v3384, 1.442695
    %v3390 = vpow.pop %v3389
    %v3391 = vsel %vm600, %v3388, 0.0
    %3392 = vadd.xlane.f32.xlu0 %v3391
    %v3393 = vpop.xlane.xlu0 %3392
    %v3394 = vsel %vm600, %v3390, 0.0
    %3395 = vadd.xlane.f32.xlu0 %v3394
    %v3396 = vpop.xlane.xlu0 %3395
    %v3397 = vrcp.pop %v3393
    %v3398 = vrcp.pop %v3396
    %v3399 = vmul.f32 %v3388, %v3397
    %v3400 = vmul.f32 %v3390, %v3398
    %v3401 = vpack.c.bf16 %v3400, %v3399
    %3403 = vrot.lane.b32.xlu0 %v2749, 96
    %v3404 = vpop.permute.xlu0 %3403
    %v3407 = vsel %vm600, %v3401, 0
    %3409 = vmatprep.subr.bf16.mxu0 0
    %3410 = vmatpush1.bf16.msra.mxu0 %v3404
    %3411 = vmatprep.subr.bf16.mxu0 0
    %3412 = vmatpush1.bf16.msra.mxu0 0
    %3413 = vmatprep.subr.bf16.mxu0 0
    %3414 = vmatpush1.bf16.msra.mxu0 0
    %3415 = vmatprep.subr.bf16.mxu0 0
    %3416 = vmatpush1.bf16.msra.mxu0 0
    %3417 = vmatprep.subr.bf16.mxu0 0
    %3418 = vmatpush1.bf16.msra.mxu0 0
    %3419 = vmatprep.subr.bf16.mxu0 0
    %3420 = vmatpush1.bf16.msra.mxu0 0
    %3421 = vmatprep.subr.bf16.mxu0 0
    %3422 = vmatpush1.bf16.msra.mxu0 0
    %3423 = vmatprep.subr.bf16.mxu0 0
    %3424 = vmatpush1.bf16.msra.mxu0 0
    %3425 = vmatprep.subr.bf16.mxu0 0
    %3426 = vmatpush1.bf16.msra.mxu0 0
    %3427 = vmatprep.subr.bf16.mxu0 0
    %3428 = vmatpush1.bf16.msra.mxu0 0
    %3429 = vmatprep.subr.bf16.mxu0 0
    %3430 = vmatpush1.bf16.msra.mxu0 0
    %3431 = vmatprep.subr.bf16.mxu0 0
    %3432 = vmatpush1.bf16.msra.mxu0 0
    %3433 = vmatprep.subr.bf16.mxu0 0
    %3434 = vmatpush1.bf16.msra.mxu0 0
    %3435 = vmatprep.subr.bf16.mxu0 0
    %3436 = vmatpush1.bf16.msra.mxu0 0
    %3437 = vmatprep.subr.bf16.mxu0 0
    %3438 = vmatpush1.bf16.msra.mxu0 0
    %3439 = vmatprep.subr.bf16.mxu0 0
    %3440 = vmatpush1.bf16.msra.mxu0 0
    %3441 = vmatprep.mubr.bf16.mxu0 0
    %3442 = vmatmul.mubr.bf16.gmra.mrb[0].mxu0 %v3407
    %v3443 = vpop.f32.mrb[0].mxu0
    %v3444 = vadd.f32 0.0, %v3443
    %v3445 = vpop.f32.mrb[0].mxu0
    %v3446 = vpop.f32.mrb[0].mxu0
    %v3447 = vadd.f32 0.0, %v3446
    %v3448 = vpop.f32.mrb[0].mxu0
    %3449 = vdwg.mxu0
    %3450 = vrot.lane.b32.xlu0 %v2745, 64
    %v3451 = vpop.permute.xlu0 %3450
    %3452 = vrot.lane.b32.xlu0 %v2747, 64
    %v3453 = vpop.permute.xlu0 %3452
    %v3455 = vsel %vm548, %v3451, 0
    %v3458 = vsel %vm548, %v3453, 0
    %3460 = vmatprep.subr.bf16.mxu0 0
    %3461 = vmatpush1.bf16.xpose.msra.mxu0 %v3458
    %3462 = vmatprep.subr.bf16.mxu0 0
    %3463 = vmatpush1.bf16.xpose.msra.mxu0 0
    %3464 = vmatprep.subr.bf16.mxu0 0
    %3465 = vmatpush1.bf16.xpose.msra.mxu0 0
    %3466 = vmatprep.subr.bf16.mxu0 0
    %3467 = vmatpush1.bf16.xpose.msra.mxu0 0
    %3468 = vmatprep.subr.bf16.mxu0 0
    %3469 = vmatpush1.bf16.xpose.msra.mxu0 0
    %3470 = vmatprep.subr.bf16.mxu0 0
    %3471 = vmatpush1.bf16.xpose.msra.mxu0 0
    %3472 = vmatprep.subr.bf16.mxu0 0
    %3473 = vmatpush1.bf16.xpose.msra.mxu0 0
    %3474 = vmatprep.subr.bf16.mxu0 0
    %3475 = vmatpush1.bf16.xpose.msra.mxu0 0
    %3476 = vmatprep.subr.bf16.mxu0 0
    %3477 = vmatpush1.bf16.xpose.msra.mxu0 0
    %3478 = vmatprep.subr.bf16.mxu0 0
    %3479 = vmatpush1.bf16.xpose.msra.mxu0 0
    %3480 = vmatprep.subr.bf16.mxu0 0
    %3481 = vmatpush1.bf16.xpose.msra.mxu0 0
    %3482 = vmatprep.subr.bf16.mxu0 0
    %3483 = vmatpush1.bf16.xpose.msra.mxu0 0
    %3484 = vmatprep.subr.bf16.mxu0 0
    %3485 = vmatpush1.bf16.xpose.msra.mxu0 0
    %3486 = vmatprep.subr.bf16.mxu0 0
    %3487 = vmatpush1.bf16.xpose.msra.mxu0 0
    %3488 = vmatprep.subr.bf16.mxu0 0
    %3489 = vmatpush1.bf16.xpose.msra.mxu0 0
    %3490 = vmatprep.subr.bf16.mxu0 0
    %3491 = vmatpush1.bf16.xpose.msra.mxu0 0
    %3492 = vmatprep.mubr.bf16.mxu0 0
    %3493 = vmatmul.mubr.bf16.gmra.mrb[0].mxu0 %v3455
    %v3494 = vpop.f32.mrb[0].mxu0
    %v3495 = vadd.f32 %v209, %v3494
    %v3496 = vpop.f32.mrb[0].mxu0
    %v3497 = vpop.f32.mrb[0].mxu0
    %v3498 = vadd.f32 %v210, %v3497
    %v3499 = vpop.f32.mrb[0].mxu0
    %3500 = vdwg.mxu0
    %v3501 = vmul.f32 %v3495, 1.442695
    %v3502 = vpow.pop %v3501
    %v3503 = vmul.f32 %v3498, 1.442695
    %v3504 = vpow.pop %v3503
    %v3505 = vsel %vm600, %v3502, 0.0
    %3506 = vadd.xlane.f32.xlu0 %v3505
    %v3507 = vpop.xlane.xlu0 %3506
    %v3508 = vsel %vm600, %v3504, 0.0
    %3509 = vadd.xlane.f32.xlu0 %v3508
    %v3510 = vpop.xlane.xlu0 %3509
    %v3511 = vrcp.pop %v3507
    %v3512 = vrcp.pop %v3510
    %v3513 = vmul.f32 %v3502, %v3511
    %v3514 = vmul.f32 %v3504, %v3512
    %v3515 = vpack.c.bf16 %v3514, %v3513
    %3516 = vrot.lane.b32.xlu0 %v2749, 64
    %v3517 = vpop.permute.xlu0 %3516
    %v3520 = vsel %vm600, %v3515, 0
    %3522 = vmatprep.subr.bf16.mxu0 0
    %3523 = vmatpush1.bf16.msra.mxu0 %v3517
    %3524 = vmatprep.subr.bf16.mxu0 0
    %3525 = vmatpush1.bf16.msra.mxu0 0
    %3526 = vmatprep.subr.bf16.mxu0 0
    %3527 = vmatpush1.bf16.msra.mxu0 0
    %3528 = vmatprep.subr.bf16.mxu0 0
    %3529 = vmatpush1.bf16.msra.mxu0 0
    %3530 = vmatprep.subr.bf16.mxu0 0
    %3531 = vmatpush1.bf16.msra.mxu0 0
    %3532 = vmatprep.subr.bf16.mxu0 0
    %3533 = vmatpush1.bf16.msra.mxu0 0
    %3534 = vmatprep.subr.bf16.mxu0 0
    %3535 = vmatpush1.bf16.msra.mxu0 0
    %3536 = vmatprep.subr.bf16.mxu0 0
    %3537 = vmatpush1.bf16.msra.mxu0 0
    %3538 = vmatprep.subr.bf16.mxu0 0
    %3539 = vmatpush1.bf16.msra.mxu0 0
    %3540 = vmatprep.subr.bf16.mxu0 0
    %3541 = vmatpush1.bf16.msra.mxu0 0
    %3542 = vmatprep.subr.bf16.mxu0 0
    %3543 = vmatpush1.bf16.msra.mxu0 0
    %3544 = vmatprep.subr.bf16.mxu0 0
    %3545 = vmatpush1.bf16.msra.mxu0 0
    %3546 = vmatprep.subr.bf16.mxu0 0
    %3547 = vmatpush1.bf16.msra.mxu0 0
    %3548 = vmatprep.subr.bf16.mxu0 0
    %3549 = vmatpush1.bf16.msra.mxu0 0
    %3550 = vmatprep.subr.bf16.mxu0 0
    %3551 = vmatpush1.bf16.msra.mxu0 0
    %3552 = vmatprep.subr.bf16.mxu0 0
    %3553 = vmatpush1.bf16.msra.mxu0 0
    %3554 = vmatprep.mubr.bf16.mxu0 0
    %3555 = vmatmul.mubr.bf16.gmra.mrb[0].mxu0 %v3520
    %v3556 = vpop.f32.mrb[0].mxu0
    %v3557 = vadd.f32 0.0, %v3556
    %v3558 = vpop.f32.mrb[0].mxu0
    %v3559 = vpop.f32.mrb[0].mxu0
    %v3560 = vadd.f32 0.0, %v3559
    %v3561 = vpop.f32.mrb[0].mxu0
    %3562 = vdwg.mxu0
    %3563 = vrot.lane.b32.xlu0 %v2745, 32
    %v3564 = vpop.permute.xlu0 %3563
    %3565 = vrot.lane.b32.xlu0 %v2747, 32
    %v3566 = vpop.permute.xlu0 %3565
    %v3568 = vsel %vm548, %v3564, 0
    %v3571 = vsel %vm548, %v3566, 0
    %3573 = vmatprep.subr.bf16.mxu0 0
    %3574 = vmatpush1.bf16.xpose.msra.mxu0 %v3571
    %3575 = vmatprep.subr.bf16.mxu0 0
    %3576 = vmatpush1.bf16.xpose.msra.mxu0 0
    %3577 = vmatprep.subr.bf16.mxu0 0
    %3578 = vmatpush1.bf16.xpose.msra.mxu0 0
    %3579 = vmatprep.subr.bf16.mxu0 0
    %3580 = vmatpush1.bf16.xpose.msra.mxu0 0
    %3581 = vmatprep.subr.bf16.mxu0 0
    %3582 = vmatpush1.bf16.xpose.msra.mxu0 0
    %3583 = vmatprep.subr.bf16.mxu0 0
    %3584 = vmatpush1.bf16.xpose.msra.mxu0 0
    %3585 = vmatprep.subr.bf16.mxu0 0
    %3586 = vmatpush1.bf16.xpose.msra.mxu0 0
    %3587 = vmatprep.subr.bf16.mxu0 0
    %3588 = vmatpush1.bf16.xpose.msra.mxu0 0
    %3589 = vmatprep.subr.bf16.mxu0 0
    %3590 = vmatpush1.bf16.xpose.msra.mxu0 0
    %3591 = vmatprep.subr.bf16.mxu0 0
    %3592 = vmatpush1.bf16.xpose.msra.mxu0 0
    %3593 = vmatprep.subr.bf16.mxu0 0
    %3594 = vmatpush1.bf16.xpose.msra.mxu0 0
    %3595 = vmatprep.subr.bf16.mxu0 0
    %3596 = vmatpush1.bf16.xpose.msra.mxu0 0
    %3597 = vmatprep.subr.bf16.mxu0 0
    %3598 = vmatpush1.bf16.xpose.msra.mxu0 0
    %3599 = vmatprep.subr.bf16.mxu0 0
    %3600 = vmatpush1.bf16.xpose.msra.mxu0 0
    %3601 = vmatprep.subr.bf16.mxu0 0
    %3602 = vmatpush1.bf16.xpose.msra.mxu0 0
    %3603 = vmatprep.subr.bf16.mxu0 0
    %3604 = vmatpush1.bf16.xpose.msra.mxu0 0
    %3605 = vmatprep.mubr.bf16.mxu0 0
    %3606 = vmatmul.mubr.bf16.gmra.mrb[0].mxu0 %v3568
    %v3607 = vpop.f32.mrb[0].mxu0
    %v3608 = vadd.f32 %v209, %v3607
    %v3609 = vpop.f32.mrb[0].mxu0
    %v3610 = vpop.f32.mrb[0].mxu0
    %v3611 = vadd.f32 %v210, %v3610
    %v3612 = vpop.f32.mrb[0].mxu0
    %3613 = vdwg.mxu0
    %v3614 = vmul.f32 %v3608, 1.442695
    %v3615 = vpow.pop %v3614
    %v3616 = vmul.f32 %v3611, 1.442695
    %v3617 = vpow.pop %v3616
    %v3618 = vsel %vm600, %v3615, 0.0
    %3619 = vadd.xlane.f32.xlu0 %v3618
    %v3620 = vpop.xlane.xlu0 %3619
    %v3621 = vsel %vm600, %v3617, 0.0
    %3622 = vadd.xlane.f32.xlu0 %v3621
    %v3623 = vpop.xlane.xlu0 %3622
    %v3624 = vrcp.pop %v3620
    %v3625 = vrcp.pop %v3623
    %v3626 = vmul.f32 %v3615, %v3624
    %v3627 = vmul.f32 %v3617, %v3625
    %v3628 = vpack.c.bf16 %v3627, %v3626
    %3629 = vrot.lane.b32.xlu0 %v2749, 32
    %v3630 = vpop.permute.xlu0 %3629
    %v3633 = vsel %vm600, %v3628, 0
    %3635 = vmatprep.subr.bf16.mxu0 0
    %3636 = vmatpush1.bf16.msra.mxu0 %v3630
    %3637 = vmatprep.subr.bf16.mxu0 0
    %3638 = vmatpush1.bf16.msra.mxu0 0
    %3639 = vmatprep.subr.bf16.mxu0 0
    %3640 = vmatpush1.bf16.msra.mxu0 0
    %3641 = vmatprep.subr.bf16.mxu0 0
    %3642 = vmatpush1.bf16.msra.mxu0 0
    %3643 = vmatprep.subr.bf16.mxu0 0
    %3644 = vmatpush1.bf16.msra.mxu0 0
    %3645 = vmatprep.subr.bf16.mxu0 0
    %3646 = vmatpush1.bf16.msra.mxu0 0
    %3647 = vmatprep.subr.bf16.mxu0 0
    %3648 = vmatpush1.bf16.msra.mxu0 0
    %3649 = vmatprep.subr.bf16.mxu0 0
    %3650 = vmatpush1.bf16.msra.mxu0 0
    %3651 = vmatprep.subr.bf16.mxu0 0
    %3652 = vmatpush1.bf16.msra.mxu0 0
    %3653 = vmatprep.subr.bf16.mxu0 0
    %3654 = vmatpush1.bf16.msra.mxu0 0
    %3655 = vmatprep.subr.bf16.mxu0 0
    %3656 = vmatpush1.bf16.msra.mxu0 0
    %3657 = vmatprep.subr.bf16.mxu0 0
    %3658 = vmatpush1.bf16.msra.mxu0 0
    %3659 = vmatprep.subr.bf16.mxu0 0
    %3660 = vmatpush1.bf16.msra.mxu0 0
    %3661 = vmatprep.subr.bf16.mxu0 0
    %3662 = vmatpush1.bf16.msra.mxu0 0
    %3663 = vmatprep.subr.bf16.mxu0 0
    %3664 = vmatpush1.bf16.msra.mxu0 0
    %3665 = vmatprep.subr.bf16.mxu0 0
    %3666 = vmatpush1.bf16.msra.mxu0 0
    %3667 = vmatprep.mubr.bf16.mxu0 0
    %3668 = vmatmul.mubr.bf16.gmra.mrb[0].mxu0 %v3633
    %v3669 = vpop.f32.mrb[0].mxu0
    %v3670 = vadd.f32 0.0, %v3669
    %v3671 = vpop.f32.mrb[0].mxu0
    %v3672 = vpop.f32.mrb[0].mxu0
    %v3673 = vadd.f32 0.0, %v3672
    %v3674 = vpop.f32.mrb[0].mxu0
    %3675 = vdwg.mxu0
    %3678 = vrot.lane.b32.xlu0 %v3444, 32
    %v3679 = vpop.permute.xlu0 %3678
    %3680 = vrot.lane.b32.xlu0 %v3447, 32
    %v3681 = vpop.permute.xlu0 %3680
    %3686 = vrot.lane.b32.xlu0 %v3557, 64
    %v3687 = vpop.permute.xlu0 %3686
    %3688 = vrot.lane.b32.xlu0 %v3560, 64
    %v3689 = vpop.permute.xlu0 %3688
    %3694 = vrot.lane.b32.xlu0 %v3670, 96
    %v3695 = vpop.permute.xlu0 %3694
    %3696 = vrot.lane.b32.xlu0 %v3673, 96
    %v3697 = vpop.permute.xlu0 %3696
    %v3700 = vsel %vm548, %v3328, %v3679
    %v3701 = vsel %vm548, %v3331, %v3681
    %v3702 = vsel %vm1024, %v3700, %v3687
    %v3703 = vsel %vm1024, %v3701, %v3689
    %v3704 = vsel %vm1027, %v3702, %v3695
    %v3705 = vsel %vm1027, %v3703, %v3697
    %v3706 = vpack.c.bf16 %v3227, %v3226
    %v3707 = vpack.c.bf16 %v3705, %v3704
    %s3708 = scalar_lea.vmem [#allocation5], 64
    %v3709 = vld [vmem:[%s3708] sm:$0xf]
    %v3710 = vld [vmem:[%s3708 + $0x4] sm:$0xf]
    %v3711 = vld [vmem:[%s3708 + $0x8] sm:$0xf]
    %v3712 = vld [vmem:[%s3708 + $0xc] sm:$0xf]
    %v3713 = vld [vmem:[%s3708 + $0x10] sm:$0xf]
    %v3714 = vld [vmem:[%s3708 + $0x14] sm:$0xf]
    %v3715 = vld [vmem:[%s3708 + $0x18] sm:$0xf]
    %v3716 = vld [vmem:[%s3708 + $0x1c] sm:$0xf]
    %v3717 = vld [vmem:[%s3708 + $0x20] sm:$0xf]
    %v3718 = vld [vmem:[%s3708 + $0x24] sm:$0xf]
    %v3719 = vld [vmem:[%s3708 + $0x28] sm:$0xf]
    %v3720 = vld [vmem:[%s3708 + $0x2c] sm:$0xf]
    %v3721 = vld [vmem:[%s3708 + $0x30] sm:$0xf]
    %v3722 = vld [vmem:[%s3708 + $0x34] sm:$0xf]
    %v3723 = vld [vmem:[%s3708 + $0x38] sm:$0xf]
    %v3724 = vld [vmem:[%s3708 + $0x3c] sm:$0xf]
    %s3725 = scalar_lea.vmem [#allocation7], 1
    %v3726 = vld [vmem:[%s3725] sm:$0x1]
    %v3728 = vlaneseq
    %v3729 = vshrl.u32 %v3728, 7
    %v3730 = vsub.s32 0, %v3729
    %v3731 = vrot.slane %v3726, %v3730
    %v3749 = vunpack.c.l.b16 %v3709
    %v3750 = vunpack.c.l.b16 %v3710
    %v3751 = vunpack.c.l.b16 %v3711
    %v3752 = vunpack.c.l.b16 %v3712
    %v3753 = vunpack.c.l.b16 %v3713
    %v3754 = vunpack.c.l.b16 %v3714
    %v3755 = vunpack.c.l.b16 %v3715
    %v3756 = vunpack.c.l.b16 %v3716
    %v3757 = vunpack.c.l.b16 %v3717
    %v3758 = vunpack.c.l.b16 %v3718
    %v3759 = vunpack.c.l.b16 %v3719
    %v3760 = vunpack.c.l.b16 %v3720
    %v3761 = vunpack.c.l.b16 %v3721
    %v3762 = vunpack.c.l.b16 %v3722
    %v3763 = vunpack.c.l.b16 %v3723
    %v3764 = vunpack.c.l.b16 %v3724
    %v3765 = vpack.c.b16 %v3750, %v3749
    %v3766 = vpack.c.b16 %v3752, %v3751
    %v3767 = vpack.c.b16 %v3754, %v3753
    %v3768 = vpack.c.b16 %v3756, %v3755
    %v3769 = vpack.c.b16 %v3758, %v3757
    %v3770 = vpack.c.b16 %v3760, %v3759
    %v3771 = vpack.c.b16 %v3762, %v3761
    %v3772 = vpack.c.b16 %v3764, %v3763
    %3781 = vmatprep.subr.bf16.mxu0 0
    %3782 = vmatpush1.bf16.msra.mxu0 %v3765
    %3783 = vmatprep.subr.bf16.mxu0 0
    %3784 = vmatpush1.bf16.msra.mxu0 %v3766
    %3785 = vmatprep.subr.bf16.mxu0 0
    %3786 = vmatpush1.bf16.msra.mxu0 %v3767
    %3787 = vmatprep.subr.bf16.mxu0 0
    %3788 = vmatpush1.bf16.msra.mxu0 %v3768
    %3789 = vmatprep.subr.bf16.mxu0 0
    %3790 = vmatpush1.bf16.msra.mxu0 %v3769
    %3791 = vmatprep.subr.bf16.mxu0 0
    %3792 = vmatpush1.bf16.msra.mxu0 %v3770
    %3793 = vmatprep.subr.bf16.mxu0 0
    %3794 = vmatpush1.bf16.msra.mxu0 %v3771
    %3795 = vmatprep.subr.bf16.mxu0 0
    %3796 = vmatpush1.bf16.msra.mxu0 %v3772
    %3797 = vmatprep.subr.bf16.mxu0 0
    %3798 = vmatpush1.bf16.msra.mxu0 0
    %3799 = vmatprep.subr.bf16.mxu0 0
    %3800 = vmatpush1.bf16.msra.mxu0 0
    %3801 = vmatprep.subr.bf16.mxu0 0
    %3802 = vmatpush1.bf16.msra.mxu0 0
    %3803 = vmatprep.subr.bf16.mxu0 0
    %3804 = vmatpush1.bf16.msra.mxu0 0
    %3805 = vmatprep.subr.bf16.mxu0 0
    %3806 = vmatpush1.bf16.msra.mxu0 0
    %3807 = vmatprep.subr.bf16.mxu0 0
    %3808 = vmatpush1.bf16.msra.mxu0 0
    %3809 = vmatprep.subr.bf16.mxu0 0
    %3810 = vmatpush1.bf16.msra.mxu0 0
    %3811 = vmatprep.subr.bf16.mxu0 0
    %3812 = vmatpush1.bf16.msra.mxu0 0
    %3813 = vmatprep.mubr.bf16.mxu0 0
    %3814 = vmatmul.mubr.bf16.gmra.mrb[0].mxu0 %v3706
    %v3815 = vpop.f32.mrb[0].mxu0
    %v3816 = vadd.f32 %v3731, %v3815
    %v3817 = vpop.f32.mrb[0].mxu0
    %v3818 = vpop.f32.mrb[0].mxu0
    %v3819 = vadd.f32 %v3731, %v3818
    %v3820 = vpop.f32.mrb[0].mxu0
    %3821 = vmatprep.mubr.bf16.mxu0 0
    %3822 = vmatmul.mubr.bf16.gmra.mrb[0].mxu0 %v3707
    %v3823 = vpop.f32.mrb[0].mxu0
    %v3824 = vadd.f32 %v3731, %v3823
    %v3825 = vpop.f32.mrb[0].mxu0
    %v3826 = vpop.f32.mrb[0].mxu0
    %v3827 = vadd.f32 %v3731, %v3826
    %v3828 = vpop.f32.mrb[0].mxu0
    %3829 = vdwg.mxu0
    %v3830 = vadd.f32 %v2407, %v3816
    %v3831 = vadd.f32 %v2408, %v3819
    %v3832 = vadd.f32 %v2409, %v3824
    %v3833 = vadd.f32 %v2410, %v3827
    %s3834 = scalar_lea.vmem [#allocation8], 1
    %v3835 = vld [vmem:[%s3834] sm:$0x1]
    %s3836 = scalar_lea.vmem [#allocation10], 1
    %v3837 = vld [vmem:[%s3836] sm:$0x1]
    %3838 = vadd.xlane.f32.xlu0 %v3830
    %v3839 = vpop.xlane.xlu0 %3838
    %3840 = vadd.xlane.f32.xlu0 %v3831
    %v3841 = vpop.xlane.xlu0 %3840
    %3842 = vadd.xlane.f32.xlu0 %v3832
    %v3843 = vpop.xlane.xlu0 %3842
    %3844 = vadd.xlane.f32.xlu0 %v3833
    %v3845 = vpop.xlane.xlu0 %3844
    %v3846 = vmul.f32 %v3839, %v221
    %v3847 = vmul.f32 %v3841, %v221
    %v3848 = vmul.f32 %v3843, %v221
    %v3849 = vmul.f32 %v3845, %v221
    %v3850 = vsub.f32 %v3830, %v3846
    %v3851 = vsub.f32 %v3831, %v3847
    %v3852 = vsub.f32 %v3832, %v3848
    %v3853 = vsub.f32 %v3833, %v3849
    %v3854 = vmul.f32 %v3850, %v3850
    %v3855 = vmul.f32 %v3851, %v3851
    %v3856 = vmul.f32 %v3852, %v3852
    %v3857 = vmul.f32 %v3853, %v3853
    %3858 = vadd.xlane.f32.xlu0 %v3854
    %v3859 = vpop.xlane.xlu0 %3858
    %3860 = vadd.xlane.f32.xlu0 %v3855
    %v3861 = vpop.xlane.xlu0 %3860
    %3862 = vadd.xlane.f32.xlu0 %v3856
    %v3863 = vpop.xlane.xlu0 %3862
    %3864 = vadd.xlane.f32.xlu0 %v3857
    %v3865 = vpop.xlane.xlu0 %3864
    %v3866 = vmul.f32 %v3859, %v221
    %v3867 = vmul.f32 %v3861, %v221
    %v3868 = vmul.f32 %v3863, %v221
    %v3869 = vmul.f32 %v3865, %v221
    %v3870 = vadd.f32 %v3866, 1e-05
    %v3871 = vadd.f32 %v3867, 1e-05
    %v3872 = vadd.f32 %v3868, 1e-05
    %v3873 = vadd.f32 %v3869, 1e-05
    %v3874 = vrsqrt.pop %v3870
    %v3875 = vrsqrt.pop %v3871
    %v3876 = vrsqrt.pop %v3872
    %v3877 = vrsqrt.pop %v3873
    %v3878 = vmul.f32 %v3850, %v3874
    %v3879 = vmul.f32 %v3851, %v3875
    %v3880 = vmul.f32 %v3852, %v3876
    %v3881 = vmul.f32 %v3853, %v3877
    %v3883 = vlaneseq
    %v3884 = vshrl.u32 %v3883, 7
    %v3885 = vsub.s32 0, %v3884
    %v3886 = vrot.slane %v3835, %v3885
    %v3888 = vmul.f32 %v3878, %v3886
    %v3889 = vmul.f32 %v3879, %v3886
    %v3890 = vmul.f32 %v3880, %v3886
    %v3891 = vmul.f32 %v3881, %v3886
    %v3893 = vlaneseq
    %v3894 = vshrl.u32 %v3893, 7
    %v3895 = vsub.s32 0, %v3894
    %v3896 = vrot.slane %v3837, %v3895
    %v3898 = vadd.f32 %v3888, %v3896
    %v3899 = vadd.f32 %v3889, %v3896
    %v3900 = vadd.f32 %v3890, %v3896
    %v3901 = vadd.f32 %v3891, %v3896
    %v3902 = vpack.c.bf16 %v3899, %v3898
    %v3903 = vpack.c.bf16 %v3901, %v3900
    %s3904 = scalar_lea.vmem [#allocation11], 256
    %v3905 = vld [vmem:[%s3904] sm:$0xff]
    %v3906 = vld [vmem:[%s3904 + $0x8] sm:$0xff]
    %v3907 = vld [vmem:[%s3904 + $0x10] sm:$0xff]
    %v3908 = vld [vmem:[%s3904 + $0x18] sm:$0xff]
    %v3909 = vld [vmem:[%s3904 + $0x20] sm:$0xff]
    %v3910 = vld [vmem:[%s3904 + $0x28] sm:$0xff]
    %v3911 = vld [vmem:[%s3904 + $0x30] sm:$0xff]
    %v3912 = vld [vmem:[%s3904 + $0x38] sm:$0xff]
    %v3913 = vld [vmem:[%s3904 + $0x40] sm:$0xff]
    %v3914 = vld [vmem:[%s3904 + $0x48] sm:$0xff]
    %v3915 = vld [vmem:[%s3904 + $0x50] sm:$0xff]
    %v3916 = vld [vmem:[%s3904 + $0x58] sm:$0xff]
    %v3917 = vld [vmem:[%s3904 + $0x60] sm:$0xff]
    %v3918 = vld [vmem:[%s3904 + $0x68] sm:$0xff]
    %v3919 = vld [vmem:[%s3904 + $0x70] sm:$0xff]
    %v3920 = vld [vmem:[%s3904 + $0x78] sm:$0xff]
    %v3921 = vld [vmem:[%s3904 + $0x80] sm:$0xff]
    %v3922 = vld [vmem:[%s3904 + $0x88] sm:$0xff]
    %v3923 = vld [vmem:[%s3904 + $0x90] sm:$0xff]
    %v3924 = vld [vmem:[%s3904 + $0x98] sm:$0xff]
    %v3925 = vld [vmem:[%s3904 + $0xa0] sm:$0xff]
    %v3926 = vld [vmem:[%s3904 + $0xa8] sm:$0xff]
    %v3927 = vld [vmem:[%s3904 + $0xb0] sm:$0xff]
    %v3928 = vld [vmem:[%s3904 + $0xb8] sm:$0xff]
    %v3929 = vld [vmem:[%s3904 + $0xc0] sm:$0xff]
    %v3930 = vld [vmem:[%s3904 + $0xc8] sm:$0xff]
    %v3931 = vld [vmem:[%s3904 + $0xd0] sm:$0xff]
    %v3932 = vld [vmem:[%s3904 + $0xd8] sm:$0xff]
    %v3933 = vld [vmem:[%s3904 + $0xe0] sm:$0xff]
    %v3934 = vld [vmem:[%s3904 + $0xe8] sm:$0xff]
    %v3935 = vld [vmem:[%s3904 + $0xf0] sm:$0xff]
    %v3936 = vld [vmem:[%s3904 + $0xf8] sm:$0xff]
    %s3937 = scalar_lea.vmem %s9, 4
    %v3938 = vld [vmem:[%s3937] sm:$0xf]
    %v3940 = vlaneseq
    %v3941 = vshrl.u32 %v3940, 7
    %v3942 = vsub.s32 0, %v3941
    %v3943 = vrot.slane %v3938, %v3942
    %v3944 = vlaneseq
    %v3945 = vshrl.u32 %v3944, 7
    %v3946 = vsub.s32 1, %v3945
    %v3947 = vrot.slane %v3938, %v3946
    %v3948 = vlaneseq
    %v3949 = vshrl.u32 %v3948, 7
    %v3950 = vsub.s32 2, %v3949
    %v3951 = vrot.slane %v3938, %v3950
    %v3952 = vlaneseq
    %v3953 = vshrl.u32 %v3952, 7
    %v3954 = vsub.s32 3, %v3953
    %v3955 = vrot.slane %v3938, %v3954
    %v3992 = vunpack.c.l.b16 %v3905
    %v3993 = vunpack.c.h.b16 %v3905
    %v3994 = vunpack.c.l.b16 %v3906
    %v3995 = vunpack.c.h.b16 %v3906
    %v3996 = vunpack.c.l.b16 %v3907
    %v3997 = vunpack.c.h.b16 %v3907
    %v3998 = vunpack.c.l.b16 %v3908
    %v3999 = vunpack.c.h.b16 %v3908
    %v4000 = vunpack.c.l.b16 %v3909
    %v4001 = vunpack.c.h.b16 %v3909
    %v4002 = vunpack.c.l.b16 %v3910
    %v4003 = vunpack.c.h.b16 %v3910
    %v4004 = vunpack.c.l.b16 %v3911
    %v4005 = vunpack.c.h.b16 %v3911
    %v4006 = vunpack.c.l.b16 %v3912
    %v4007 = vunpack.c.h.b16 %v3912
    %v4008 = vunpack.c.l.b16 %v3913
    %v4009 = vunpack.c.h.b16 %v3913
    %v4010 = vunpack.c.l.b16 %v3914
    %v4011 = vunpack.c.h.b16 %v3914
    %v4012 = vunpack.c.l.b16 %v3915
    %v4013 = vunpack.c.h.b16 %v3915
    %v4014 = vunpack.c.l.b16 %v3916
    %v4015 = vunpack.c.h.b16 %v3916
    %v4016 = vunpack.c.l.b16 %v3917
    %v4017 = vunpack.c.h.b16 %v3917
    %v4018 = vunpack.c.l.b16 %v3918
    %v4019 = vunpack.c.h.b16 %v3918
    %v4020 = vunpack.c.l.b16 %v3919
    %v4021 = vunpack.c.h.b16 %v3919
    %v4022 = vunpack.c.l.b16 %v3920
    %v4023 = vunpack.c.h.b16 %v3920
    %v4024 = vunpack.c.l.b16 %v3921
    %v4025 = vunpack.c.h.b16 %v3921
    %v4026 = vunpack.c.l.b16 %v3922
    %v4027 = vunpack.c.h.b16 %v3922
    %v4028 = vunpack.c.l.b16 %v3923
    %v4029 = vunpack.c.h.b16 %v3923
    %v4030 = vunpack.c.l.b16 %v3924
    %v4031 = vunpack.c.h.b16 %v3924
    %v4032 = vunpack.c.l.b16 %v3925
    %v4033 = vunpack.c.h.b16 %v3925
    %v4034 = vunpack.c.l.b16 %v3926
    %v4035 = vunpack.c.h.b16 %v3926
    %v4036 = vunpack.c.l.b16 %v3927
    %v4037 = vunpack.c.h.b16 %v3927
    %v4038 = vunpack.c.l.b16 %v3928
    %v4039 = vunpack.c.h.b16 %v3928
    %v4040 = vunpack.c.l.b16 %v3929
    %v4041 = vunpack.c.h.b16 %v3929
    %v4042 = vunpack.c.l.b16 %v3930
    %v4043 = vunpack.c.h.b16 %v3930
    %v4044 = vunpack.c.l.b16 %v3931
    %v4045 = vunpack.c.h.b16 %v3931
    %v4046 = vunpack.c.l.b16 %v3932
    %v4047 = vunpack.c.h.b16 %v3932
    %v4048 = vunpack.c.l.b16 %v3933
    %v4049 = vunpack.c.h.b16 %v3933
    %v4050 = vunpack.c.l.b16 %v3934
    %v4051 = vunpack.c.h.b16 %v3934
    %v4052 = vunpack.c.l.b16 %v3935
    %v4053 = vunpack.c.h.b16 %v3935
    %v4054 = vunpack.c.l.b16 %v3936
    %v4055 = vunpack.c.h.b16 %v3936
    %v4056 = vpack.c.b16 %v3996, %v3992
    %v4057 = vpack.c.b16 %v3997, %v3993
    %v4058 = vpack.c.b16 %v3998, %v3994
    %v4059 = vpack.c.b16 %v3999, %v3995
    %v4060 = vpack.c.b16 %v4004, %v4000
    %v4061 = vpack.c.b16 %v4005, %v4001
    %v4062 = vpack.c.b16 %v4006, %v4002
    %v4063 = vpack.c.b16 %v4007, %v4003
    %v4064 = vpack.c.b16 %v4012, %v4008
    %v4065 = vpack.c.b16 %v4013, %v4009
    %v4066 = vpack.c.b16 %v4014, %v4010
    %v4067 = vpack.c.b16 %v4015, %v4011
    %v4068 = vpack.c.b16 %v4020, %v4016
    %v4069 = vpack.c.b16 %v4021, %v4017
    %v4070 = vpack.c.b16 %v4022, %v4018
    %v4071 = vpack.c.b16 %v4023, %v4019
    %v4072 = vpack.c.b16 %v4028, %v4024
    %v4073 = vpack.c.b16 %v4029, %v4025
    %v4074 = vpack.c.b16 %v4030, %v4026
    %v4075 = vpack.c.b16 %v4031, %v4027
    %v4076 = vpack.c.b16 %v4036, %v4032
    %v4077 = vpack.c.b16 %v4037, %v4033
    %v4078 = vpack.c.b16 %v4038, %v4034
    %v4079 = vpack.c.b16 %v4039, %v4035
    %v4080 = vpack.c.b16 %v4044, %v4040
    %v4081 = vpack.c.b16 %v4045, %v4041
    %v4082 = vpack.c.b16 %v4046, %v4042
    %v4083 = vpack.c.b16 %v4047, %v4043
    %v4084 = vpack.c.b16 %v4052, %v4048
    %v4085 = vpack.c.b16 %v4053, %v4049
    %v4086 = vpack.c.b16 %v4054, %v4050
    %v4087 = vpack.c.b16 %v4055, %v4051
    %4120 = vmatprep.subr.bf16.mxu0 %v4057
    %4121 = vmatpush1.bf16.msra.mxu0 %v4056
    %4122 = vmatprep.subr.bf16.mxu0 %v4061
    %4123 = vmatpush1.bf16.msra.mxu0 %v4060
    %4124 = vmatprep.subr.bf16.mxu0 %v4065
    %4125 = vmatpush1.bf16.msra.mxu0 %v4064
    %4126 = vmatprep.subr.bf16.mxu0 %v4069
    %4127 = vmatpush1.bf16.msra.mxu0 %v4068
    %4128 = vmatprep.subr.bf16.mxu0 %v4073
    %4129 = vmatpush1.bf16.msra.mxu0 %v4072
    %4130 = vmatprep.subr.bf16.mxu0 %v4077
    %4131 = vmatpush1.bf16.msra.mxu0 %v4076
    %4132 = vmatprep.subr.bf16.mxu0 %v4081
    %4133 = vmatpush1.bf16.msra.mxu0 %v4080
    %4134 = vmatprep.subr.bf16.mxu0 %v4085
    %4135 = vmatpush1.bf16.msra.mxu0 %v4084
    %4136 = vmatprep.subr.bf16.mxu0 0
    %4137 = vmatpush1.bf16.msra.mxu0 0
    %4138 = vmatprep.subr.bf16.mxu0 0
    %4139 = vmatpush1.bf16.msra.mxu0 0
    %4140 = vmatprep.subr.bf16.mxu0 0
    %4141 = vmatpush1.bf16.msra.mxu0 0
    %4142 = vmatprep.subr.bf16.mxu0 0
    %4143 = vmatpush1.bf16.msra.mxu0 0
    %4144 = vmatprep.subr.bf16.mxu0 0
    %4145 = vmatpush1.bf16.msra.mxu0 0
    %4146 = vmatprep.subr.bf16.mxu0 0
    %4147 = vmatpush1.bf16.msra.mxu0 0
    %4148 = vmatprep.subr.bf16.mxu0 0
    %4149 = vmatpush1.bf16.msra.mxu0 0
    %4150 = vmatprep.subr.bf16.mxu0 0
    %4151 = vmatpush1.bf16.msra.mxu0 0
    %4152 = vmatprep.mubr.bf16.mxu0 0
    %4153 = vmatmul.mubr.bf16.gmra.mrb[0].mxu0 %v3902
    %v4154 = vpop.f32.mrb[0].mxu0
    %v4155 = vadd.f32 %v3943, %v4154
    %v4156 = vpop.f32.mrb[0].mxu0
    %v4157 = vadd.f32 %v3947, %v4156
    %v4158 = vpop.f32.mrb[0].mxu0
    %v4159 = vadd.f32 %v3943, %v4158
    %v4160 = vpop.f32.mrb[0].mxu0
    %v4161 = vadd.f32 %v3947, %v4160
    %4162 = vmatprep.mubr.bf16.mxu0 0
    %4163 = vmatmul.mubr.bf16.gmra.mrb[0].mxu0 %v3903
    %v4164 = vpop.f32.mrb[0].mxu0
    %v4165 = vadd.f32 %v3943, %v4164
    %v4166 = vpop.f32.mrb[0].mxu0
    %v4167 = vadd.f32 %v3947, %v4166
    %v4168 = vpop.f32.mrb[0].mxu0
    %v4169 = vadd.f32 %v3943, %v4168
    %v4170 = vpop.f32.mrb[0].mxu0
    %v4171 = vadd.f32 %v3947, %v4170
    %4172 = vdwg.mxu0
    %4173 = vmatprep.subr.bf16.mxu0 %v4059
    %4174 = vmatpush1.bf16.msra.mxu0 %v4058
    %4175 = vmatprep.subr.bf16.mxu0 %v4063
    %4176 = vmatpush1.bf16.msra.mxu0 %v4062
    %4177 = vmatprep.subr.bf16.mxu0 %v4067
    %4178 = vmatpush1.bf16.msra.mxu0 %v4066
    %4179 = vmatprep.subr.bf16.mxu0 %v4071
    %4180 = vmatpush1.bf16.msra.mxu0 %v4070
    %4181 = vmatprep.subr.bf16.mxu0 %v4075
    %4182 = vmatpush1.bf16.msra.mxu0 %v4074
    %4183 = vmatprep.subr.bf16.mxu0 %v4079
    %4184 = vmatpush1.bf16.msra.mxu0 %v4078
    %4185 = vmatprep.subr.bf16.mxu0 %v4083
    %4186 = vmatpush1.bf16.msra.mxu0 %v4082
    %4187 = vmatprep.subr.bf16.mxu0 %v4087
    %4188 = vmatpush1.bf16.msra.mxu0 %v4086
    %4189 = vmatprep.subr.bf16.mxu0 0
    %4190 = vmatpush1.bf16.msra.mxu0 0
    %4191 = vmatprep.subr.bf16.mxu0 0
    %4192 = vmatpush1.bf16.msra.mxu0 0
    %4193 = vmatprep.subr.bf16.mxu0 0
    %4194 = vmatpush1.bf16.msra.mxu0 0
    %4195 = vmatprep.subr.bf16.mxu0 0
    %4196 = vmatpush1.bf16.msra.mxu0 0
    %4197 = vmatprep.subr.bf16.mxu0 0
    %4198 = vmatpush1.bf16.msra.mxu0 0
    %4199 = vmatprep.subr.bf16.mxu0 0
    %4200 = vmatpush1.bf16.msra.mxu0 0
    %4201 = vmatprep.subr.bf16.mxu0 0
    %4202 = vmatpush1.bf16.msra.mxu0 0
    %4203 = vmatprep.subr.bf16.mxu0 0
    %4204 = vmatpush1.bf16.msra.mxu0 0
    %4205 = vmatprep.mubr.bf16.mxu0 0
    %4206 = vmatmul.mubr.bf16.gmra.mrb[0].mxu0 %v3902
    %v4207 = vpop.f32.mrb[0].mxu0
    %v4208 = vadd.f32 %v3951, %v4207
    %v4209 = vpop.f32.mrb[0].mxu0
    %v4210 = vadd.f32 %v3955, %v4209
    %v4211 = vpop.f32.mrb[0].mxu0
    %v4212 = vadd.f32 %v3951, %v4211
    %v4213 = vpop.f32.mrb[0].mxu0
    %v4214 = vadd.f32 %v3955, %v4213
    %4215 = vmatprep.mubr.bf16.mxu0 0
    %4216 = vmatmul.mubr.bf16.gmra.mrb[0].mxu0 %v3903
    %v4217 = vpop.f32.mrb[0].mxu0
    %v4218 = vadd.f32 %v3951, %v4217
    %v4219 = vpop.f32.mrb[0].mxu0
    %v4220 = vadd.f32 %v3955, %v4219
    %v4221 = vpop.f32.mrb[0].mxu0
    %v4222 = vadd.f32 %v3951, %v4221
    %v4223 = vpop.f32.mrb[0].mxu0
    %v4224 = vadd.f32 %v3955, %v4223
    %4225 = vdwg.mxu0
    %v4226 = vmax.f32 %v4155, 0.0
    %v4227 = vmax.f32 %v4157, 0.0
    %v4228 = vmax.f32 %v4208, 0.0
    %v4229 = vmax.f32 %v4210, 0.0
    %v4230 = vmax.f32 %v4159, 0.0
    %v4231 = vmax.f32 %v4161, 0.0
    %v4232 = vmax.f32 %v4212, 0.0
    %v4233 = vmax.f32 %v4214, 0.0
    %v4234 = vmax.f32 %v4165, 0.0
    %v4235 = vmax.f32 %v4167, 0.0
    %v4236 = vmax.f32 %v4218, 0.0
    %v4237 = vmax.f32 %v4220, 0.0
    %v4238 = vmax.f32 %v4169, 0.0
    %v4239 = vmax.f32 %v4171, 0.0
    %v4240 = vmax.f32 %v4222, 0.0
    %v4241 = vmax.f32 %v4224, 0.0
    %v4242 = vpack.c.bf16 %v4230, %v4226
    %v4243 = vpack.c.bf16 %v4231, %v4227
    %v4244 = vpack.c.bf16 %v4232, %v4228
    %v4245 = vpack.c.bf16 %v4233, %v4229
    %v4246 = vpack.c.bf16 %v4238, %v4234
    %v4247 = vpack.c.bf16 %v4239, %v4235
    %v4248 = vpack.c.bf16 %v4240, %v4236
    %v4249 = vpack.c.bf16 %v4241, %v4237
    %s4250 = scalar_lea.vmem [#allocation13], 256
    %v4251 = vld [vmem:[%s4250] sm:$0xf]
    %v4252 = vld [vmem:[%s4250 + $0x4] sm:$0xf]
    %v4253 = vld [vmem:[%s4250 + $0x8] sm:$0xf]
    %v4254 = vld [vmem:[%s4250 + $0xc] sm:$0xf]
    %v4255 = vld [vmem:[%s4250 + $0x10] sm:$0xf]
    %v4256 = vld [vmem:[%s4250 + $0x14] sm:$0xf]
    %v4257 = vld [vmem:[%s4250 + $0x18] sm:$0xf]
    %v4258 = vld [vmem:[%s4250 + $0x1c] sm:$0xf]
    %v4259 = vld [vmem:[%s4250 + $0x20] sm:$0xf]
    %v4260 = vld [vmem:[%s4250 + $0x24] sm:$0xf]
    %v4261 = vld [vmem:[%s4250 + $0x28] sm:$0xf]
    %v4262 = vld [vmem:[%s4250 + $0x2c] sm:$0xf]
    %v4263 = vld [vmem:[%s4250 + $0x30] sm:$0xf]
    %v4264 = vld [vmem:[%s4250 + $0x34] sm:$0xf]
    %v4265 = vld [vmem:[%s4250 + $0x38] sm:$0xf]
    %v4266 = vld [vmem:[%s4250 + $0x3c] sm:$0xf]
    %v4267 = vld [vmem:[%s4250 + $0x40] sm:$0xf]
    %v4268 = vld [vmem:[%s4250 + $0x44] sm:$0xf]
    %v4269 = vld [vmem:[%s4250 + $0x48] sm:$0xf]
    %v4270 = vld [vmem:[%s4250 + $0x4c] sm:$0xf]
    %v4271 = vld [vmem:[%s4250 + $0x50] sm:$0xf]
    %v4272 = vld [vmem:[%s4250 + $0x54] sm:$0xf]
    %v4273 = vld [vmem:[%s4250 + $0x58] sm:$0xf]
    %v4274 = vld [vmem:[%s4250 + $0x5c] sm:$0xf]
    %v4275 = vld [vmem:[%s4250 + $0x60] sm:$0xf]
    %v4276 = vld [vmem:[%s4250 + $0x64] sm:$0xf]
    %v4277 = vld [vmem:[%s4250 + $0x68] sm:$0xf]
    %v4278 = vld [vmem:[%s4250 + $0x6c] sm:$0xf]
    %v4279 = vld [vmem:[%s4250 + $0x70] sm:$0xf]
    %v4280 = vld [vmem:[%s4250 + $0x74] sm:$0xf]
    %v4281 = vld [vmem:[%s4250 + $0x78] sm:$0xf]
    %v4282 = vld [vmem:[%s4250 + $0x7c] sm:$0xf]
    %v4283 = vld [vmem:[%s4250 + $0x80] sm:$0xf]
    %v4284 = vld [vmem:[%s4250 + $0x84] sm:$0xf]
    %v4285 = vld [vmem:[%s4250 + $0x88] sm:$0xf]
    %v4286 = vld [vmem:[%s4250 + $0x8c] sm:$0xf]
    %v4287 = vld [vmem:[%s4250 + $0x90] sm:$0xf]
    %v4288 = vld [vmem:[%s4250 + $0x94] sm:$0xf]
    %v4289 = vld [vmem:[%s4250 + $0x98] sm:$0xf]
    %v4290 = vld [vmem:[%s4250 + $0x9c] sm:$0xf]
    %v4291 = vld [vmem:[%s4250 + $0xa0] sm:$0xf]
    %v4292 = vld [vmem:[%s4250 + $0xa4] sm:$0xf]
    %v4293 = vld [vmem:[%s4250 + $0xa8] sm:$0xf]
    %v4294 = vld [vmem:[%s4250 + $0xac] sm:$0xf]
    %v4295 = vld [vmem:[%s4250 + $0xb0] sm:$0xf]
    %v4296 = vld [vmem:[%s4250 + $0xb4] sm:$0xf]
    %v4297 = vld [vmem:[%s4250 + $0xb8] sm:$0xf]
    %v4298 = vld [vmem:[%s4250 + $0xbc] sm:$0xf]
    %v4299 = vld [vmem:[%s4250 + $0xc0] sm:$0xf]
    %v4300 = vld [vmem:[%s4250 + $0xc4] sm:$0xf]
    %v4301 = vld [vmem:[%s4250 + $0xc8] sm:$0xf]
    %v4302 = vld [vmem:[%s4250 + $0xcc] sm:$0xf]
    %v4303 = vld [vmem:[%s4250 + $0xd0] sm:$0xf]
    %v4304 = vld [vmem:[%s4250 + $0xd4] sm:$0xf]
    %v4305 = vld [vmem:[%s4250 + $0xd8] sm:$0xf]
    %v4306 = vld [vmem:[%s4250 + $0xdc] sm:$0xf]
    %v4307 = vld [vmem:[%s4250 + $0xe0] sm:$0xf]
    %v4308 = vld [vmem:[%s4250 + $0xe4] sm:$0xf]
    %v4309 = vld [vmem:[%s4250 + $0xe8] sm:$0xf]
    %v4310 = vld [vmem:[%s4250 + $0xec] sm:$0xf]
    %v4311 = vld [vmem:[%s4250 + $0xf0] sm:$0xf]
    %v4312 = vld [vmem:[%s4250 + $0xf4] sm:$0xf]
    %v4313 = vld [vmem:[%s4250 + $0xf8] sm:$0xf]
    %v4314 = vld [vmem:[%s4250 + $0xfc] sm:$0xf]
    %s4315 = scalar_lea.vmem [#allocation14], 1
    %v4316 = vld [vmem:[%s4315] sm:$0x1]
    %v4318 = vlaneseq
    %v4319 = vshrl.u32 %v4318, 7
    %v4320 = vsub.s32 0, %v4319
    %v4321 = vrot.slane %v4316, %v4320
    %v4387 = vunpack.c.l.b16 %v4251
    %v4388 = vunpack.c.l.b16 %v4252
    %v4389 = vunpack.c.l.b16 %v4253
    %v4390 = vunpack.c.l.b16 %v4254
    %v4391 = vunpack.c.l.b16 %v4255
    %v4392 = vunpack.c.l.b16 %v4256
    %v4393 = vunpack.c.l.b16 %v4257
    %v4394 = vunpack.c.l.b16 %v4258
    %v4395 = vunpack.c.l.b16 %v4259
    %v4396 = vunpack.c.l.b16 %v4260
    %v4397 = vunpack.c.l.b16 %v4261
    %v4398 = vunpack.c.l.b16 %v4262
    %v4399 = vunpack.c.l.b16 %v4263
    %v4400 = vunpack.c.l.b16 %v4264
    %v4401 = vunpack.c.l.b16 %v4265
    %v4402 = vunpack.c.l.b16 %v4266
    %v4403 = vunpack.c.l.b16 %v4267
    %v4404 = vunpack.c.l.b16 %v4268
    %v4405 = vunpack.c.l.b16 %v4269
    %v4406 = vunpack.c.l.b16 %v4270
    %v4407 = vunpack.c.l.b16 %v4271
    %v4408 = vunpack.c.l.b16 %v4272
    %v4409 = vunpack.c.l.b16 %v4273
    %v4410 = vunpack.c.l.b16 %v4274
    %v4411 = vunpack.c.l.b16 %v4275
    %v4412 = vunpack.c.l.b16 %v4276
    %v4413 = vunpack.c.l.b16 %v4277
    %v4414 = vunpack.c.l.b16 %v4278
    %v4415 = vunpack.c.l.b16 %v4279
    %v4416 = vunpack.c.l.b16 %v4280
    %v4417 = vunpack.c.l.b16 %v4281
    %v4418 = vunpack.c.l.b16 %v4282
    %v4419 = vunpack.c.l.b16 %v4283
    %v4420 = vunpack.c.l.b16 %v4284
    %v4421 = vunpack.c.l.b16 %v4285
    %v4422 = vunpack.c.l.b16 %v4286
    %v4423 = vunpack.c.l.b16 %v4287
    %v4424 = vunpack.c.l.b16 %v4288
    %v4425 = vunpack.c.l.b16 %v4289
    %v4426 = vunpack.c.l.b16 %v4290
    %v4427 = vunpack.c.l.b16 %v4291
    %v4428 = vunpack.c.l.b16 %v4292
    %v4429 = vunpack.c.l.b16 %v4293
    %v4430 = vunpack.c.l.b16 %v4294
    %v4431 = vunpack.c.l.b16 %v4295
    %v4432 = vunpack.c.l.b16 %v4296
    %v4433 = vunpack.c.l.b16 %v4297
    %v4434 = vunpack.c.l.b16 %v4298
    %v4435 = vunpack.c.l.b16 %v4299
    %v4436 = vunpack.c.l.b16 %v4300
    %v4437 = vunpack.c.l.b16 %v4301
    %v4438 = vunpack.c.l.b16 %v4302
    %v4439 = vunpack.c.l.b16 %v4303
    %v4440 = vunpack.c.l.b16 %v4304
    %v4441 = vunpack.c.l.b16 %v4305
    %v4442 = vunpack.c.l.b16 %v4306
    %v4443 = vunpack.c.l.b16 %v4307
    %v4444 = vunpack.c.l.b16 %v4308
    %v4445 = vunpack.c.l.b16 %v4309
    %v4446 = vunpack.c.l.b16 %v4310
    %v4447 = vunpack.c.l.b16 %v4311
    %v4448 = vunpack.c.l.b16 %v4312
    %v4449 = vunpack.c.l.b16 %v4313
    %v4450 = vunpack.c.l.b16 %v4314
    %v4451 = vpack.c.b16 %v4388, %v4387
    %v4452 = vpack.c.b16 %v4390, %v4389
    %v4453 = vpack.c.b16 %v4392, %v4391
    %v4454 = vpack.c.b16 %v4394, %v4393
    %v4455 = vpack.c.b16 %v4396, %v4395
    %v4456 = vpack.c.b16 %v4398, %v4397
    %v4457 = vpack.c.b16 %v4400, %v4399
    %v4458 = vpack.c.b16 %v4402, %v4401
    %v4459 = vpack.c.b16 %v4404, %v4403
    %v4460 = vpack.c.b16 %v4406, %v4405
    %v4461 = vpack.c.b16 %v4408, %v4407
    %v4462 = vpack.c.b16 %v4410, %v4409
    %v4463 = vpack.c.b16 %v4412, %v4411
    %v4464 = vpack.c.b16 %v4414, %v4413
    %v4465 = vpack.c.b16 %v4416, %v4415
    %v4466 = vpack.c.b16 %v4418, %v4417
    %v4467 = vpack.c.b16 %v4420, %v4419
    %v4468 = vpack.c.b16 %v4422, %v4421
    %v4469 = vpack.c.b16 %v4424, %v4423
    %v4470 = vpack.c.b16 %v4426, %v4425
    %v4471 = vpack.c.b16 %v4428, %v4427
    %v4472 = vpack.c.b16 %v4430, %v4429
    %v4473 = vpack.c.b16 %v4432, %v4431
    %v4474 = vpack.c.b16 %v4434, %v4433
    %v4475 = vpack.c.b16 %v4436, %v4435
    %v4476 = vpack.c.b16 %v4438, %v4437
    %v4477 = vpack.c.b16 %v4440, %v4439
    %v4478 = vpack.c.b16 %v4442, %v4441
    %v4479 = vpack.c.b16 %v4444, %v4443
    %v4480 = vpack.c.b16 %v4446, %v4445
    %v4481 = vpack.c.b16 %v4448, %v4447
    %v4482 = vpack.c.b16 %v4450, %v4449
    %4515 = vmatprep.subr.bf16.mxu0 0
    %4516 = vmatpush1.bf16.msra.mxu0 %v4451
    %4517 = vmatprep.subr.bf16.mxu0 0
    %4518 = vmatpush1.bf16.msra.mxu0 %v4452
    %4519 = vmatprep.subr.bf16.mxu0 0
    %4520 = vmatpush1.bf16.msra.mxu0 %v4453
    %4521 = vmatprep.subr.bf16.mxu0 0
    %4522 = vmatpush1.bf16.msra.mxu0 %v4454
    %4523 = vmatprep.subr.bf16.mxu0 0
    %4524 = vmatpush1.bf16.msra.mxu0 %v4455
    %4525 = vmatprep.subr.bf16.mxu0 0
    %4526 = vmatpush1.bf16.msra.mxu0 %v4456
    %4527 = vmatprep.subr.bf16.mxu0 0
    %4528 = vmatpush1.bf16.msra.mxu0 %v4457
    %4529 = vmatprep.subr.bf16.mxu0 0
    %4530 = vmatpush1.bf16.msra.mxu0 %v4458
    %4531 = vmatprep.subr.bf16.mxu0 0
    %4532 = vmatpush1.bf16.msra.mxu0 %v4459
    %4533 = vmatprep.subr.bf16.mxu0 0
    %4534 = vmatpush1.bf16.msra.mxu0 %v4460
    %4535 = vmatprep.subr.bf16.mxu0 0
    %4536 = vmatpush1.bf16.msra.mxu0 %v4461
    %4537 = vmatprep.subr.bf16.mxu0 0
    %4538 = vmatpush1.bf16.msra.mxu0 %v4462
    %4539 = vmatprep.subr.bf16.mxu0 0
    %4540 = vmatpush1.bf16.msra.mxu0 %v4463
    %4541 = vmatprep.subr.bf16.mxu0 0
    %4542 = vmatpush1.bf16.msra.mxu0 %v4464
    %4543 = vmatprep.subr.bf16.mxu0 0
    %4544 = vmatpush1.bf16.msra.mxu0 %v4465
    %4545 = vmatprep.subr.bf16.mxu0 0
    %4546 = vmatpush1.bf16.msra.mxu0 %v4466
    %4547 = vmatprep.mubr.bf16.mxu0 %v4243
    %4548 = vmatmul.mubr.bf16.gmra.mrb[0].mxu0 %v4242
    %v4549 = vpop.f32.mrb[0].mxu0
    %v4550 = vadd.f32 %v4321, %v4549
    %v4551 = vpop.f32.mrb[0].mxu0
    %v4552 = vpop.f32.mrb[0].mxu0
    %v4553 = vadd.f32 %v4321, %v4552
    %v4554 = vpop.f32.mrb[0].mxu0
    %4555 = vmatprep.mubr.bf16.mxu0 %v4247
    %4556 = vmatmul.mubr.bf16.gmra.mrb[0].mxu0 %v4246
    %v4557 = vpop.f32.mrb[0].mxu0
    %v4558 = vadd.f32 %v4321, %v4557
    %v4559 = vpop.f32.mrb[0].mxu0
    %v4560 = vpop.f32.mrb[0].mxu0
    %v4561 = vadd.f32 %v4321, %v4560
    %v4562 = vpop.f32.mrb[0].mxu0
    %4563 = vdwg.mxu0
    %4564 = vmatprep.subr.bf16.mxu0 0
    %4565 = vmatpush1.bf16.msra.mxu0 %v4467
    %4566 = vmatprep.subr.bf16.mxu0 0
    %4567 = vmatpush1.bf16.msra.mxu0 %v4468
    %4568 = vmatprep.subr.bf16.mxu0 0
    %4569 = vmatpush1.bf16.msra.mxu0 %v4469
    %4570 = vmatprep.subr.bf16.mxu0 0
    %4571 = vmatpush1.bf16.msra.mxu0 %v4470
    %4572 = vmatprep.subr.bf16.mxu0 0
    %4573 = vmatpush1.bf16.msra.mxu0 %v4471
    %4574 = vmatprep.subr.bf16.mxu0 0
    %4575 = vmatpush1.bf16.msra.mxu0 %v4472
    %4576 = vmatprep.subr.bf16.mxu0 0
    %4577 = vmatpush1.bf16.msra.mxu0 %v4473
    %4578 = vmatprep.subr.bf16.mxu0 0
    %4579 = vmatpush1.bf16.msra.mxu0 %v4474
    %4580 = vmatprep.subr.bf16.mxu0 0
    %4581 = vmatpush1.bf16.msra.mxu0 %v4475
    %4582 = vmatprep.subr.bf16.mxu0 0
    %4583 = vmatpush1.bf16.msra.mxu0 %v4476
    %4584 = vmatprep.subr.bf16.mxu0 0
    %4585 = vmatpush1.bf16.msra.mxu0 %v4477
    %4586 = vmatprep.subr.bf16.mxu0 0
    %4587 = vmatpush1.bf16.msra.mxu0 %v4478
    %4588 = vmatprep.subr.bf16.mxu0 0
    %4589 = vmatpush1.bf16.msra.mxu0 %v4479
    %4590 = vmatprep.subr.bf16.mxu0 0
    %4591 = vmatpush1.bf16.msra.mxu0 %v4480
    %4592 = vmatprep.subr.bf16.mxu0 0
    %4593 = vmatpush1.bf16.msra.mxu0 %v4481
    %4594 = vmatprep.subr.bf16.mxu0 0
    %4595 = vmatpush1.bf16.msra.mxu0 %v4482
    %4596 = vmatprep.mubr.bf16.mxu0 %v4245
    %4597 = vmatmul.mubr.bf16.gmra.mrb[0].mxu0 %v4244
    %v4598 = vpop.f32.mrb[0].mxu0
    %v4599 = vadd.f32 %v4550, %v4598
    %v4600 = vpop.f32.mrb[0].mxu0
    %v4601 = vpop.f32.mrb[0].mxu0
    %v4602 = vadd.f32 %v4553, %v4601
    %v4603 = vpop.f32.mrb[0].mxu0
    %4604 = vmatprep.mubr.bf16.mxu0 %v4249
    %4605 = vmatmul.mubr.bf16.gmra.mrb[0].mxu0 %v4248
    %v4606 = vpop.f32.mrb[0].mxu0
    %v4607 = vadd.f32 %v4558, %v4606
    %v4608 = vpop.f32.mrb[0].mxu0
    %v4609 = vpop.f32.mrb[0].mxu0
    %v4610 = vadd.f32 %v4561, %v4609
    %v4611 = vpop.f32.mrb[0].mxu0
    %4612 = vdwg.mxu0
    %v4613 = vadd.f32 %v3830, %v4599
    %v4614 = vadd.f32 %v3831, %v4602
    %v4615 = vadd.f32 %v3832, %v4607
    %v4616 = vadd.f32 %v3833, %v4610
    %v4617 = vld [vmem:[#allocation16] sm:$0x1]
    %v4618 = vld [vmem:[#allocation17] sm:$0x1]
    %4619 = vadd.xlane.f32.xlu0 %v4613
    %v4620 = vpop.xlane.xlu0 %4619
    %4621 = vadd.xlane.f32.xlu0 %v4614
    %v4622 = vpop.xlane.xlu0 %4621
    %4623 = vadd.xlane.f32.xlu0 %v4615
    %v4624 = vpop.xlane.xlu0 %4623
    %4625 = vadd.xlane.f32.xlu0 %v4616
    %v4626 = vpop.xlane.xlu0 %4625
    %v4627 = vmul.f32 %v4620, %v221
    %v4628 = vmul.f32 %v4622, %v221
    %v4629 = vmul.f32 %v4624, %v221
    %v4630 = vmul.f32 %v4626, %v221
    %v4631 = vsub.f32 %v4613, %v4627
    %v4632 = vsub.f32 %v4614, %v4628
    %v4633 = vsub.f32 %v4615, %v4629
    %v4634 = vsub.f32 %v4616, %v4630
    %v4635 = vmul.f32 %v4631, %v4631
    %v4636 = vmul.f32 %v4632, %v4632
    %v4637 = vmul.f32 %v4633, %v4633
    %v4638 = vmul.f32 %v4634, %v4634
    %4639 = vadd.xlane.f32.xlu0 %v4635
    %v4640 = vpop.xlane.xlu0 %4639
    %4641 = vadd.xlane.f32.xlu0 %v4636
    %v4642 = vpop.xlane.xlu0 %4641
    %4643 = vadd.xlane.f32.xlu0 %v4637
    %v4644 = vpop.xlane.xlu0 %4643
    %4645 = vadd.xlane.f32.xlu0 %v4638
    %v4646 = vpop.xlane.xlu0 %4645
    %v4647 = vmul.f32 %v4640, %v221
    %v4648 = vmul.f32 %v4642, %v221
    %v4649 = vmul.f32 %v4644, %v221
    %v4650 = vmul.f32 %v4646, %v221
    %v4651 = vadd.f32 %v4647, 1e-05
    %v4652 = vadd.f32 %v4648, 1e-05
    %v4653 = vadd.f32 %v4649, 1e-05
    %v4654 = vadd.f32 %v4650, 1e-05
    %v4655 = vrsqrt.pop %v4651
    %v4656 = vrsqrt.pop %v4652
    %v4657 = vrsqrt.pop %v4653
    %v4658 = vrsqrt.pop %v4654
    %v4659 = vmul.f32 %v4631, %v4655
    %v4660 = vmul.f32 %v4632, %v4656
    %v4661 = vmul.f32 %v4633, %v4657
    %v4662 = vmul.f32 %v4634, %v4658
    %v4664 = vlaneseq
    %v4665 = vshrl.u32 %v4664, 7
    %v4666 = vsub.s32 0, %v4665
    %v4667 = vrot.slane %v4617, %v4666
    %v4669 = vmul.f32 %v4659, %v4667
    %v4670 = vmul.f32 %v4660, %v4667
    %v4671 = vmul.f32 %v4661, %v4667
    %v4672 = vmul.f32 %v4662, %v4667
    %v4674 = vlaneseq
    %v4675 = vshrl.u32 %v4674, 7
    %v4676 = vsub.s32 0, %v4675
    %v4677 = vrot.slane %v4618, %v4676
    %v4679 = vadd.f32 %v4669, %v4677
    %v4680 = vadd.f32 %v4670, %v4677
    %v4681 = vadd.f32 %v4671, %v4677
    %v4682 = vadd.f32 %v4672, %v4677
    %v4683 = vpack.c.bf16 %v4680, %v4679
    %v4684 = vpack.c.bf16 %v4682, %v4681
    %v4685 = vld [vmem:[%s14] sm:$0xf]
    %v4686 = vld [vmem:[%s14 + $0x4] sm:$0xf]
    %v4687 = vld [vmem:[%s14 + $0x8] sm:$0xf]
    %v4688 = vld [vmem:[%s14 + $0xc] sm:$0xf]
    %v4689 = vld [vmem:[%s14 + $0x10] sm:$0xf]
    %v4690 = vld [vmem:[%s14 + $0x14] sm:$0xf]
    %v4691 = vld [vmem:[%s14 + $0x18] sm:$0xf]
    %v4692 = vld [vmem:[%s14 + $0x1c] sm:$0xf]
    %v4693 = vld [vmem:[%s14 + $0x20] sm:$0xf]
    %v4694 = vld [vmem:[%s14 + $0x24] sm:$0xf]
    %v4695 = vld [vmem:[%s14 + $0x28] sm:$0xf]
    %v4696 = vld [vmem:[%s14 + $0x2c] sm:$0xf]
    %v4697 = vld [vmem:[%s14 + $0x30] sm:$0xf]
    %v4698 = vld [vmem:[%s14 + $0x34] sm:$0xf]
    %v4699 = vld [vmem:[%s14 + $0x38] sm:$0xf]
    %v4700 = vld [vmem:[%s14 + $0x3c] sm:$0xf]
    %v4701 = vld [vmem:[#allocation19] sm:$0x1]
    %v4703 = vlaneseq
    %v4704 = vshrl.u32 %v4703, 7
    %v4705 = vsub.s32 0, %v4704
    %v4706 = vrot.slane %v4701, %v4705
    %v4724 = vunpack.c.l.b16 %v4685
    %v4725 = vunpack.c.l.b16 %v4686
    %v4726 = vunpack.c.l.b16 %v4687
    %v4727 = vunpack.c.l.b16 %v4688
    %v4728 = vunpack.c.l.b16 %v4689
    %v4729 = vunpack.c.l.b16 %v4690
    %v4730 = vunpack.c.l.b16 %v4691
    %v4731 = vunpack.c.l.b16 %v4692
    %v4732 = vunpack.c.l.b16 %v4693
    %v4733 = vunpack.c.l.b16 %v4694
    %v4734 = vunpack.c.l.b16 %v4695
    %v4735 = vunpack.c.l.b16 %v4696
    %v4736 = vunpack.c.l.b16 %v4697
    %v4737 = vunpack.c.l.b16 %v4698
    %v4738 = vunpack.c.l.b16 %v4699
    %v4739 = vunpack.c.l.b16 %v4700
    %v4740 = vpack.c.b16 %v4725, %v4724
    %v4741 = vpack.c.b16 %v4727, %v4726
    %v4742 = vpack.c.b16 %v4729, %v4728
    %v4743 = vpack.c.b16 %v4731, %v4730
    %v4744 = vpack.c.b16 %v4733, %v4732
    %v4745 = vpack.c.b16 %v4735, %v4734
    %v4746 = vpack.c.b16 %v4737, %v4736
    %v4747 = vpack.c.b16 %v4739, %v4738
    %4756 = vmatprep.subr.bf16.mxu0 0
    %4757 = vmatpush1.bf16.msra.mxu0 %v4740
    %4758 = vmatprep.subr.bf16.mxu0 0
    %4759 = vmatpush1.bf16.msra.mxu0 %v4741
    %4760 = vmatprep.subr.bf16.mxu0 0
    %4761 = vmatpush1.bf16.msra.mxu0 %v4742
    %4762 = vmatprep.subr.bf16.mxu0 0
    %4763 = vmatpush1.bf16.msra.mxu0 %v4743
    %4764 = vmatprep.subr.bf16.mxu0 0
    %4765 = vmatpush1.bf16.msra.mxu0 %v4744
    %4766 = vmatprep.subr.bf16.mxu0 0
    %4767 = vmatpush1.bf16.msra.mxu0 %v4745
    %4768 = vmatprep.subr.bf16.mxu0 0
    %4769 = vmatpush1.bf16.msra.mxu0 %v4746
    %4770 = vmatprep.subr.bf16.mxu0 0
    %4771 = vmatpush1.bf16.msra.mxu0 %v4747
    %4772 = vmatprep.subr.bf16.mxu0 0
    %4773 = vmatpush1.bf16.msra.mxu0 0
    %4774 = vmatprep.subr.bf16.mxu0 0
    %4775 = vmatpush1.bf16.msra.mxu0 0
    %4776 = vmatprep.subr.bf16.mxu0 0
    %4777 = vmatpush1.bf16.msra.mxu0 0
    %4778 = vmatprep.subr.bf16.mxu0 0
    %4779 = vmatpush1.bf16.msra.mxu0 0
    %4780 = vmatprep.subr.bf16.mxu0 0
    %4781 = vmatpush1.bf16.msra.mxu0 0
    %4782 = vmatprep.subr.bf16.mxu0 0
    %4783 = vmatpush1.bf16.msra.mxu0 0
    %4784 = vmatprep.subr.bf16.mxu0 0
    %4785 = vmatpush1.bf16.msra.mxu0 0
    %4786 = vmatprep.subr.bf16.mxu0 0
    %4787 = vmatpush1.bf16.msra.mxu0 0
    %4788 = vmatprep.mubr.bf16.mxu0 0
    %4789 = vmatmul.mubr.bf16.gmra.mrb[0].mxu0 %v4683
    %v4790 = vpop.f32.mrb[0].mxu0
    %v4791 = vadd.f32 %v4706, %v4790
    %v4792 = vpop.f32.mrb[0].mxu0
    %v4793 = vpop.f32.mrb[0].mxu0
    %v4794 = vadd.f32 %v4706, %v4793
    %v4795 = vpop.f32.mrb[0].mxu0
    %4796 = vmatprep.mubr.bf16.mxu0 0
    %4797 = vmatmul.mubr.bf16.gmra.mrb[0].mxu0 %v4684
    %v4798 = vpop.f32.mrb[0].mxu0
    %v4799 = vadd.f32 %v4706, %v4798
    %v4800 = vpop.f32.mrb[0].mxu0
    %v4801 = vpop.f32.mrb[0].mxu0
    %v4802 = vadd.f32 %v4706, %v4801
    %v4803 = vpop.f32.mrb[0].mxu0
    %4804 = vdwg.mxu0
    %4805 = vst [vmem:[#allocation20] sm:$0xff] %v4791
    %4806 = vst [vmem:[#allocation20 + $0x8] sm:$0xff] %v4794
    %4807 = vst [vmem:[#allocation20 + $0x10] sm:$0xff] %v4799
    %4808 = vst [vmem:[#allocation20 + $0x18] sm:$0xff] %v4802
    // Predicated region
    $region110: #{transformer_forward.1} parent=1 // pred_check
      _
    $region111: #{transformer_forward.1} parent=1 // pred_check_branch
      %4810 = sbr.rel (0) target = $region113
    $region112: #{transformer_forward.1} parent=1 // pred_region
      %s4812 = ssub.s32 512, 512
      %4813 = vsyncadd [#allocation4], %s4812
      %s4814 = sshll.u32 [#allocation20], 4
      %s4815 = int_to_ptr.vmem [resolvable:$true] %s4814
      %4820 = dma.vmem_to_hbm [thread:$0]  %s4815, 512, %s16, [#allocation4], 128, 128, 8
    $region113: #{transformer_forward.1} parent=1 // pred_fallthru
      _
    // Predicated region
    $region114: #{transformer_forward.1} parent=1 // pred_check
      _
    $region115: #{transformer_forward.1} parent=1 // pred_check_branch
      %4822 = sbr.rel (0) target = $region117
    $region116: #{transformer_forward.1} parent=1 // pred_region
      %4823 = dma.done [#allocation4], 512
    $region117: #{transformer_forward.1} parent=1 // pred_fallthru
      _
    %4824 = vsyncpa [#allocation3], 1
    %4825 = vsyncpa [#allocation6], 1
    %4826 = vsyncpa [#allocation9], 1
    %4827 = vsyncpa [#allocation12], 1
    %4828 = vsyncpa [#allocation15], 1
    %4829 = vsyncpa [#allocation18], 1
    %4830 = vsyncpa [#allocation4], 1

</llo_original>
